<compile_context>
chip_gen: v7x
topology: tpu7x:2x2x1
jax: 0.10.0
libtpu: 0.0.40
codegen_flags: <defaults>
</compile_context>

<pallas_src>
import functools

import jax
import jax.numpy as jnp
from jax.experimental import pallas as pl
from jax.experimental.pallas import tpu as pltpu


def _hash_bits(shape, seed_u32, layer_idx):
    """Counter-based uniform uint32 bits (splitmix32-style mixing), pure VPU ops."""
    rows = jax.lax.broadcasted_iota(jnp.uint32, shape, 0)
    cols = jax.lax.broadcasted_iota(jnp.uint32, shape, 1)
    x = rows * jnp.uint32(shape[1]) + cols
    x = x ^ (seed_u32 + jnp.uint32(layer_idx) * jnp.uint32(0x9E3779B9))
    x = (x ^ (x >> jnp.uint32(16))) * jnp.uint32(0x7FEB352D)
    x = (x ^ (x >> jnp.uint32(15))) * jnp.uint32(0x846CA68B)
    x = x ^ (x >> jnp.uint32(16))
    return x


def _dnn_kernel(seed_ref, x_ref, *refs, n_layers, dropout_rate, top_bn,
                eps=1e-5, neg_slope=0.01):
    """Whole-network fused kernel.

    refs = (w0, b0, g0, be0, w1, b1, g1, be1, ..., o_ref)
      w_i:  (D_in, D_out)  bf16   (pre-transposed)
      b_i, g_i, be_i: (1, D_out)  f32
    """
    o_ref = refs[-1]
    p_refs = refs[:-1]
    assert len(p_refs) == 4 * n_layers

    seed_u32 = seed_ref[0].astype(jnp.uint32)
    if dropout_rate > 0.0:
        thresh = jnp.uint32(min(int(round(dropout_rate * 4294967296.0)), 0xFFFFFFFF))
        scale = 1.0 / (1.0 - dropout_rate)

    h = x_ref[...].astype(jnp.float32)                      # (B, D_in) f32
    for i in range(n_layers):
        w_ref, b_ref, g_ref, be_ref = p_refs[4 * i: 4 * i + 4]
        is_last = (i == n_layers - 1)

        # Linear on the MXU: bf16 operands, f32 accumulate.
        y = jnp.dot(h.astype(w_ref.dtype), w_ref[...],
                    preferred_element_type=jnp.float32) + b_ref[...]

        # BatchNorm1d (training mode: biased batch statistics) — f32 VPU math.
        if (not is_last) or top_bn:
            mean = jnp.mean(y, axis=0, keepdims=True)
            var = jnp.mean((y - mean) ** 2, axis=0, keepdims=True)
            y = (y - mean) * jax.lax.rsqrt(var + eps)
            y = y * g_ref[...] + be_ref[...]

        if not is_last:
            # LeakyReLU
            y = jnp.where(y > 0, y, neg_slope * y)
            # Dropout: direct uint32 threshold compare (no float conversion).
            if dropout_rate > 0.0:
                bits = _hash_bits(y.shape, seed_u32, i)
                keep = bits >= thresh
                y = jnp.where(keep, y * scale, 0.0)

        h = y

    o_ref[...] = h.astype(o_ref.dtype)


def dnn_forward(x, params, *, dropout_rate=0.25, seed=0, top_bn=False):
    B = x.shape[0]
    n_layers = len(params)
    n_out = params[-1][0].shape[1]

    flat = []
    for (w, b, g, be) in params:
        flat.extend((w, b, g, be))

    kernel = functools.partial(
        _dnn_kernel,
        n_layers=n_layers,
        dropout_rate=float(dropout_rate),
        top_bn=bool(top_bn),
    )

    vmem = pl.BlockSpec(memory_space=pltpu.MemorySpace.VMEM)
    smem = pl.BlockSpec(memory_space=pltpu.MemorySpace.SMEM)
    seed_arr = jnp.asarray([seed], dtype=jnp.int32)

    return pl.pallas_call(
        kernel,
        out_shape=jax.ShapeDtypeStruct((B, n_out), jnp.float32),
        in_specs=[smem, vmem] + [vmem] * len(flat),
        out_specs=vmem,
    )(seed_arr, x, *flat)


def init_params(key, input_dim, n_outputs=10):
    dims = [input_dim, 512, 512, 256, 256, 128, 128, 64, 64, 32, n_outputs]
    params = []
    for i in range(10):
        d_in, d_out = dims[i], dims[i + 1]
        key, kw, kb = jax.random.split(key, 3)
        bound = 1.0 / (d_in ** 0.5)
        # torch nn.Linear default init, then stored pre-transposed (D_in, D_out)
        # and cast to bf16 (contraction-major MXU operand, half the weight DMA).
        w = jax.random.uniform(kw, (d_out, d_in), jnp.float32, -bound, bound)
        w_t = jnp.asarray(w.T, dtype=jnp.bfloat16)               # (d_in, d_out)
        b = jax.random.uniform(kb, (d_out,), jnp.float32, -bound, bound).reshape(1, -1)
        gamma = jnp.ones((1, d_out), jnp.float32)                # BatchNorm1d weight
        beta = jnp.zeros((1, d_out), jnp.float32)                # BatchNorm1d bias
        params.append((w_t, b, gamma, beta))
    return params


if __name__ == "__main__":
    key = jax.random.PRNGKey(0)
    k_in, k_par = jax.random.split(key)

    B, INPUT_DIM, N_OUT = 8, 32, 10
    x = jax.random.normal(k_in, (B, INPUT_DIM), dtype=jnp.float32)
    params = init_params(k_par, INPUT_DIM, N_OUT)

    logits = dnn_forward(x, params, dropout_rate=0.25, seed=1234, top_bn=False)
    logits = jax.block_until_ready(logits)

    assert logits.shape == (B, N_OUT), logits.shape
    assert bool(jnp.all(jnp.isfinite(logits)))
    print("KERNEL_OK")
</pallas_src>

<mosaic_0001>
module attributes {stable_mosaic.version = 11 : i64} {
  func.func @_dnn_kernel(%arg0: memref<1xi32, #tpu.memory_space<smem>>, %arg1: memref<8x32xf32, #tpu.memory_space<vmem>>, %arg2: memref<32x512xbf16, #tpu.memory_space<vmem>>, %arg3: memref<1x512xf32, #tpu.memory_space<vmem>>, %arg4: memref<1x512xf32, #tpu.memory_space<vmem>>, %arg5: memref<1x512xf32, #tpu.memory_space<vmem>>, %arg6: memref<512x512xbf16, #tpu.memory_space<vmem>>, %arg7: memref<1x512xf32, #tpu.memory_space<vmem>>, %arg8: memref<1x512xf32, #tpu.memory_space<vmem>>, %arg9: memref<1x512xf32, #tpu.memory_space<vmem>>, %arg10: memref<512x256xbf16, #tpu.memory_space<vmem>>, %arg11: memref<1x256xf32, #tpu.memory_space<vmem>>, %arg12: memref<1x256xf32, #tpu.memory_space<vmem>>, %arg13: memref<1x256xf32, #tpu.memory_space<vmem>>, %arg14: memref<256x256xbf16, #tpu.memory_space<vmem>>, %arg15: memref<1x256xf32, #tpu.memory_space<vmem>>, %arg16: memref<1x256xf32, #tpu.memory_space<vmem>>, %arg17: memref<1x256xf32, #tpu.memory_space<vmem>>, %arg18: memref<256x128xbf16, #tpu.memory_space<vmem>>, %arg19: memref<1x128xf32, #tpu.memory_space<vmem>>, %arg20: memref<1x128xf32, #tpu.memory_space<vmem>>, %arg21: memref<1x128xf32, #tpu.memory_space<vmem>>, %arg22: memref<128x128xbf16, #tpu.memory_space<vmem>>, %arg23: memref<1x128xf32, #tpu.memory_space<vmem>>, %arg24: memref<1x128xf32, #tpu.memory_space<vmem>>, %arg25: memref<1x128xf32, #tpu.memory_space<vmem>>, %arg26: memref<128x64xbf16, #tpu.memory_space<vmem>>, %arg27: memref<1x64xf32, #tpu.memory_space<vmem>>, %arg28: memref<1x64xf32, #tpu.memory_space<vmem>>, %arg29: memref<1x64xf32, #tpu.memory_space<vmem>>, %arg30: memref<64x64xbf16, #tpu.memory_space<vmem>>, %arg31: memref<1x64xf32, #tpu.memory_space<vmem>>, %arg32: memref<1x64xf32, #tpu.memory_space<vmem>>, %arg33: memref<1x64xf32, #tpu.memory_space<vmem>>, %arg34: memref<64x32xbf16, #tpu.memory_space<vmem>>, %arg35: memref<1x32xf32, #tpu.memory_space<vmem>>, %arg36: memref<1x32xf32, #tpu.memory_space<vmem>>, %arg37: memref<1x32xf32, #tpu.memory_space<vmem>>, %arg38: memref<32x10xbf16, #tpu.memory_space<vmem>>, %arg39: memref<1x10xf32, #tpu.memory_space<vmem>>, %arg40: memref<1x10xf32, #tpu.memory_space<vmem>>, %arg41: memref<1x10xf32, #tpu.memory_space<vmem>>, %arg42: memref<8x10xf32, #tpu.memory_space<vmem>>) attributes {dimension_semantics = [], scalar_prefetch = 0 : i64, scratch_operands = 0 : i64, tpu.core_type = #tpu.core_type<tc>} {
    %c0 = arith.constant 0 : index
    %0 = memref.load %arg0[%c0] : memref<1xi32, #tpu.memory_space<smem>>
    %c0_0 = arith.constant 0 : index
    %c0_1 = arith.constant 0 : index
    %1 = vector.load %arg1[%c0_0, %c0_1] : memref<8x32xf32, #tpu.memory_space<vmem>>, vector<8x32xf32>
    %2 = arith.truncf %1 : vector<8x32xf32> to vector<8x32xbf16>
    %c0_2 = arith.constant 0 : index
    %c0_3 = arith.constant 0 : index
    %3 = vector.load %arg2[%c0_2, %c0_3] : memref<32x512xbf16, #tpu.memory_space<vmem>>, vector<32x512xbf16>
    %cst = arith.constant dense<0.000000e+00> : vector<8x512xf32>
    %4 = tpu.matmul %2, %3, %cst {dimension_numbers = #tpu.dot_dimension_numbers<[1], [0], [0], [1], [0, 0, 1, 1], [], []>} : vector<8x32xbf16>, vector<32x512xbf16>, vector<8x512xf32> -> vector<8x512xf32>
    %c0_4 = arith.constant 0 : index
    %c0_5 = arith.constant 0 : index
    %5 = vector.load %arg3[%c0_4, %c0_5] : memref<1x512xf32, #tpu.memory_space<vmem>>, vector<1x512xf32>
    %6 = vector.broadcast %5 : vector<1x512xf32> to vector<8x512xf32>
    %7 = arith.addf %4, %6 : vector<8x512xf32>
    %cst_6 = arith.constant dense<0.000000e+00> : vector<512xf32>
    %8 = vector.multi_reduction <add>, %7, %cst_6 [0] : vector<8x512xf32> to vector<512xf32>
    %9 = vector.shape_cast %8 : vector<512xf32> to vector<1x512xf32>
    %cst_7 = arith.constant 8.000000e+00 : f32
    %10 = vector.broadcast %cst_7 : f32 to vector<1x512xf32>
    %11 = arith.divf %9, %10 : vector<1x512xf32>
    %12 = vector.broadcast %11 : vector<1x512xf32> to vector<8x512xf32>
    %13 = arith.subf %7, %12 : vector<8x512xf32>
    %14 = arith.mulf %13, %13 : vector<8x512xf32>
    %cst_8 = arith.constant dense<0.000000e+00> : vector<512xf32>
    %15 = vector.multi_reduction <add>, %14, %cst_8 [0] : vector<8x512xf32> to vector<512xf32>
    %16 = vector.shape_cast %15 : vector<512xf32> to vector<1x512xf32>
    %cst_9 = arith.constant 8.000000e+00 : f32
    %17 = vector.broadcast %cst_9 : f32 to vector<1x512xf32>
    %18 = arith.divf %16, %17 : vector<1x512xf32>
    %19 = vector.broadcast %11 : vector<1x512xf32> to vector<8x512xf32>
    %20 = arith.subf %7, %19 : vector<8x512xf32>
    %cst_10 = arith.constant 9.99999974E-6 : f32
    %21 = vector.broadcast %cst_10 : f32 to vector<1x512xf32>
    %22 = arith.addf %18, %21 : vector<1x512xf32>
    %23 = math.rsqrt %22 : vector<1x512xf32>
    %24 = vector.broadcast %23 : vector<1x512xf32> to vector<8x512xf32>
    %25 = arith.mulf %20, %24 : vector<8x512xf32>
    %c0_11 = arith.constant 0 : index
    %c0_12 = arith.constant 0 : index
    %26 = vector.load %arg4[%c0_11, %c0_12] : memref<1x512xf32, #tpu.memory_space<vmem>>, vector<1x512xf32>
    %27 = vector.broadcast %26 : vector<1x512xf32> to vector<8x512xf32>
    %28 = arith.mulf %25, %27 : vector<8x512xf32>
    %c0_13 = arith.constant 0 : index
    %c0_14 = arith.constant 0 : index
    %29 = vector.load %arg5[%c0_13, %c0_14] : memref<1x512xf32, #tpu.memory_space<vmem>>, vector<1x512xf32>
    %30 = vector.broadcast %29 : vector<1x512xf32> to vector<8x512xf32>
    %31 = arith.addf %28, %30 : vector<8x512xf32>
    %cst_15 = arith.constant 0.000000e+00 : f32
    %32 = vector.broadcast %cst_15 : f32 to vector<8x512xf32>
    %33 = arith.cmpf ogt, %31, %32 : vector<8x512xf32>
    %cst_16 = arith.constant 0.00999999977 : f32
    %34 = vector.broadcast %cst_16 : f32 to vector<8x512xf32>
    %35 = arith.mulf %34, %31 : vector<8x512xf32>
    %36 = arith.select %33, %31, %35 : vector<8x512xi1>, vector<8x512xf32>
    %37 = tpu.iota {dimensions = array<i32: 0>} : vector<8x512xi32>
    %38 = tpu.iota {dimensions = array<i32: 1>} : vector<8x512xi32>
    %c512_i32 = arith.constant 512 : i32
    %39 = vector.broadcast %c512_i32 : i32 to vector<8x512xi32>
    %40 = arith.muli %37, %39 : vector<8x512xi32>
    %41 = arith.addi %40, %38 : vector<8x512xi32>
    %c0_i32 = arith.constant 0 : i32
    %c-1640531527_i32 = arith.constant -1640531527 : i32
    %42 = arith.muli %c0_i32, %c-1640531527_i32 : i32
    %43 = arith.addi %0, %42 : i32
    %44 = vector.broadcast %43 : i32 to vector<8x512xi32>
    %45 = arith.xori %41, %44 : vector<8x512xi32>
    %c16_i32 = arith.constant 16 : i32
    %46 = vector.broadcast %c16_i32 : i32 to vector<8x512xi32>
    %47 = arith.shrui %45, %46 : vector<8x512xi32>
    %48 = arith.xori %45, %47 : vector<8x512xi32>
    %c2146121005_i32 = arith.constant 2146121005 : i32
    %49 = vector.broadcast %c2146121005_i32 : i32 to vector<8x512xi32>
    %50 = arith.muli %48, %49 : vector<8x512xi32>
    %c15_i32 = arith.constant 15 : i32
    %51 = vector.broadcast %c15_i32 : i32 to vector<8x512xi32>
    %52 = arith.shrui %50, %51 : vector<8x512xi32>
    %53 = arith.xori %50, %52 : vector<8x512xi32>
    %c-2073254261_i32 = arith.constant -2073254261 : i32
    %54 = vector.broadcast %c-2073254261_i32 : i32 to vector<8x512xi32>
    %55 = arith.muli %53, %54 : vector<8x512xi32>
    %c16_i32_17 = arith.constant 16 : i32
    %56 = vector.broadcast %c16_i32_17 : i32 to vector<8x512xi32>
    %57 = arith.shrui %55, %56 : vector<8x512xi32>
    %58 = arith.xori %55, %57 : vector<8x512xi32>
    %c1073741824_i32 = arith.constant 1073741824 : i32
    %59 = vector.broadcast %c1073741824_i32 : i32 to vector<8x512xi32>
    %60 = arith.cmpi uge, %58, %59 : vector<8x512xi32>
    %cst_18 = arith.constant 1.33333337 : f32
    %61 = vector.broadcast %cst_18 : f32 to vector<8x512xf32>
    %62 = arith.mulf %36, %61 : vector<8x512xf32>
    %cst_19 = arith.constant 0.000000e+00 : f32
    %63 = vector.broadcast %cst_19 : f32 to vector<8x512xf32>
    %64 = arith.select %60, %62, %63 : vector<8x512xi1>, vector<8x512xf32>
    %65 = arith.truncf %64 : vector<8x512xf32> to vector<8x512xbf16>
    %c0_20 = arith.constant 0 : index
    %c0_21 = arith.constant 0 : index
    %66 = vector.load %arg6[%c0_20, %c0_21] : memref<512x512xbf16, #tpu.memory_space<vmem>>, vector<512x512xbf16>
    %cst_22 = arith.constant dense<0.000000e+00> : vector<8x512xf32>
    %67 = tpu.matmul %65, %66, %cst_22 {dimension_numbers = #tpu.dot_dimension_numbers<[1], [0], [0], [1], [0, 0, 1, 1], [], []>} : vector<8x512xbf16>, vector<512x512xbf16>, vector<8x512xf32> -> vector<8x512xf32>
    %c0_23 = arith.constant 0 : index
    %c0_24 = arith.constant 0 : index
    %68 = vector.load %arg7[%c0_23, %c0_24] : memref<1x512xf32, #tpu.memory_space<vmem>>, vector<1x512xf32>
    %69 = vector.broadcast %68 : vector<1x512xf32> to vector<8x512xf32>
    %70 = arith.addf %67, %69 : vector<8x512xf32>
    %cst_25 = arith.constant dense<0.000000e+00> : vector<512xf32>
    %71 = vector.multi_reduction <add>, %70, %cst_25 [0] : vector<8x512xf32> to vector<512xf32>
    %72 = vector.shape_cast %71 : vector<512xf32> to vector<1x512xf32>
    %cst_26 = arith.constant 8.000000e+00 : f32
    %73 = vector.broadcast %cst_26 : f32 to vector<1x512xf32>
    %74 = arith.divf %72, %73 : vector<1x512xf32>
    %75 = vector.broadcast %74 : vector<1x512xf32> to vector<8x512xf32>
    %76 = arith.subf %70, %75 : vector<8x512xf32>
    %77 = arith.mulf %76, %76 : vector<8x512xf32>
    %cst_27 = arith.constant dense<0.000000e+00> : vector<512xf32>
    %78 = vector.multi_reduction <add>, %77, %cst_27 [0] : vector<8x512xf32> to vector<512xf32>
    %79 = vector.shape_cast %78 : vector<512xf32> to vector<1x512xf32>
    %cst_28 = arith.constant 8.000000e+00 : f32
    %80 = vector.broadcast %cst_28 : f32 to vector<1x512xf32>
    %81 = arith.divf %79, %80 : vector<1x512xf32>
    %82 = vector.broadcast %74 : vector<1x512xf32> to vector<8x512xf32>
    %83 = arith.subf %70, %82 : vector<8x512xf32>
    %cst_29 = arith.constant 9.99999974E-6 : f32
    %84 = vector.broadcast %cst_29 : f32 to vector<1x512xf32>
    %85 = arith.addf %81, %84 : vector<1x512xf32>
    %86 = math.rsqrt %85 : vector<1x512xf32>
    %87 = vector.broadcast %86 : vector<1x512xf32> to vector<8x512xf32>
    %88 = arith.mulf %83, %87 : vector<8x512xf32>
    %c0_30 = arith.constant 0 : index
    %c0_31 = arith.constant 0 : index
    %89 = vector.load %arg8[%c0_30, %c0_31] : memref<1x512xf32, #tpu.memory_space<vmem>>, vector<1x512xf32>
    %90 = vector.broadcast %89 : vector<1x512xf32> to vector<8x512xf32>
    %91 = arith.mulf %88, %90 : vector<8x512xf32>
    %c0_32 = arith.constant 0 : index
    %c0_33 = arith.constant 0 : index
    %92 = vector.load %arg9[%c0_32, %c0_33] : memref<1x512xf32, #tpu.memory_space<vmem>>, vector<1x512xf32>
    %93 = vector.broadcast %92 : vector<1x512xf32> to vector<8x512xf32>
    %94 = arith.addf %91, %93 : vector<8x512xf32>
    %cst_34 = arith.constant 0.000000e+00 : f32
    %95 = vector.broadcast %cst_34 : f32 to vector<8x512xf32>
    %96 = arith.cmpf ogt, %94, %95 : vector<8x512xf32>
    %cst_35 = arith.constant 0.00999999977 : f32
    %97 = vector.broadcast %cst_35 : f32 to vector<8x512xf32>
    %98 = arith.mulf %97, %94 : vector<8x512xf32>
    %99 = arith.select %96, %94, %98 : vector<8x512xi1>, vector<8x512xf32>
    %100 = tpu.iota {dimensions = array<i32: 0>} : vector<8x512xi32>
    %101 = tpu.iota {dimensions = array<i32: 1>} : vector<8x512xi32>
    %c512_i32_36 = arith.constant 512 : i32
    %102 = vector.broadcast %c512_i32_36 : i32 to vector<8x512xi32>
    %103 = arith.muli %100, %102 : vector<8x512xi32>
    %104 = arith.addi %103, %101 : vector<8x512xi32>
    %c1_i32 = arith.constant 1 : i32
    %c-1640531527_i32_37 = arith.constant -1640531527 : i32
    %105 = arith.muli %c1_i32, %c-1640531527_i32_37 : i32
    %106 = arith.addi %0, %105 : i32
    %107 = vector.broadcast %106 : i32 to vector<8x512xi32>
    %108 = arith.xori %104, %107 : vector<8x512xi32>
    %c16_i32_38 = arith.constant 16 : i32
    %109 = vector.broadcast %c16_i32_38 : i32 to vector<8x512xi32>
    %110 = arith.shrui %108, %109 : vector<8x512xi32>
    %111 = arith.xori %108, %110 : vector<8x512xi32>
    %c2146121005_i32_39 = arith.constant 2146121005 : i32
    %112 = vector.broadcast %c2146121005_i32_39 : i32 to vector<8x512xi32>
    %113 = arith.muli %111, %112 : vector<8x512xi32>
    %c15_i32_40 = arith.constant 15 : i32
    %114 = vector.broadcast %c15_i32_40 : i32 to vector<8x512xi32>
    %115 = arith.shrui %113, %114 : vector<8x512xi32>
    %116 = arith.xori %113, %115 : vector<8x512xi32>
    %c-2073254261_i32_41 = arith.constant -2073254261 : i32
    %117 = vector.broadcast %c-2073254261_i32_41 : i32 to vector<8x512xi32>
    %118 = arith.muli %116, %117 : vector<8x512xi32>
    %c16_i32_42 = arith.constant 16 : i32
    %119 = vector.broadcast %c16_i32_42 : i32 to vector<8x512xi32>
    %120 = arith.shrui %118, %119 : vector<8x512xi32>
    %121 = arith.xori %118, %120 : vector<8x512xi32>
    %c1073741824_i32_43 = arith.constant 1073741824 : i32
    %122 = vector.broadcast %c1073741824_i32_43 : i32 to vector<8x512xi32>
    %123 = arith.cmpi uge, %121, %122 : vector<8x512xi32>
    %cst_44 = arith.constant 1.33333337 : f32
    %124 = vector.broadcast %cst_44 : f32 to vector<8x512xf32>
    %125 = arith.mulf %99, %124 : vector<8x512xf32>
    %cst_45 = arith.constant 0.000000e+00 : f32
    %126 = vector.broadcast %cst_45 : f32 to vector<8x512xf32>
    %127 = arith.select %123, %125, %126 : vector<8x512xi1>, vector<8x512xf32>
    %128 = arith.truncf %127 : vector<8x512xf32> to vector<8x512xbf16>
    %c0_46 = arith.constant 0 : index
    %c0_47 = arith.constant 0 : index
    %129 = vector.load %arg10[%c0_46, %c0_47] : memref<512x256xbf16, #tpu.memory_space<vmem>>, vector<512x256xbf16>
    %cst_48 = arith.constant dense<0.000000e+00> : vector<8x256xf32>
    %130 = tpu.matmul %128, %129, %cst_48 {dimension_numbers = #tpu.dot_dimension_numbers<[1], [0], [0], [1], [0, 0, 1, 1], [], []>} : vector<8x512xbf16>, vector<512x256xbf16>, vector<8x256xf32> -> vector<8x256xf32>
    %c0_49 = arith.constant 0 : index
    %c0_50 = arith.constant 0 : index
    %131 = vector.load %arg11[%c0_49, %c0_50] : memref<1x256xf32, #tpu.memory_space<vmem>>, vector<1x256xf32>
    %132 = vector.broadcast %131 : vector<1x256xf32> to vector<8x256xf32>
    %133 = arith.addf %130, %132 : vector<8x256xf32>
    %cst_51 = arith.constant dense<0.000000e+00> : vector<256xf32>
    %134 = vector.multi_reduction <add>, %133, %cst_51 [0] : vector<8x256xf32> to vector<256xf32>
    %135 = vector.shape_cast %134 : vector<256xf32> to vector<1x256xf32>
    %cst_52 = arith.constant 8.000000e+00 : f32
    %136 = vector.broadcast %cst_52 : f32 to vector<1x256xf32>
    %137 = arith.divf %135, %136 : vector<1x256xf32>
    %138 = vector.broadcast %137 : vector<1x256xf32> to vector<8x256xf32>
    %139 = arith.subf %133, %138 : vector<8x256xf32>
    %140 = arith.mulf %139, %139 : vector<8x256xf32>
    %cst_53 = arith.constant dense<0.000000e+00> : vector<256xf32>
    %141 = vector.multi_reduction <add>, %140, %cst_53 [0] : vector<8x256xf32> to vector<256xf32>
    %142 = vector.shape_cast %141 : vector<256xf32> to vector<1x256xf32>
    %cst_54 = arith.constant 8.000000e+00 : f32
    %143 = vector.broadcast %cst_54 : f32 to vector<1x256xf32>
    %144 = arith.divf %142, %143 : vector<1x256xf32>
    %145 = vector.broadcast %137 : vector<1x256xf32> to vector<8x256xf32>
    %146 = arith.subf %133, %145 : vector<8x256xf32>
    %cst_55 = arith.constant 9.99999974E-6 : f32
    %147 = vector.broadcast %cst_55 : f32 to vector<1x256xf32>
    %148 = arith.addf %144, %147 : vector<1x256xf32>
    %149 = math.rsqrt %148 : vector<1x256xf32>
    %150 = vector.broadcast %149 : vector<1x256xf32> to vector<8x256xf32>
    %151 = arith.mulf %146, %150 : vector<8x256xf32>
    %c0_56 = arith.constant 0 : index
    %c0_57 = arith.constant 0 : index
    %152 = vector.load %arg12[%c0_56, %c0_57] : memref<1x256xf32, #tpu.memory_space<vmem>>, vector<1x256xf32>
    %153 = vector.broadcast %152 : vector<1x256xf32> to vector<8x256xf32>
    %154 = arith.mulf %151, %153 : vector<8x256xf32>
    %c0_58 = arith.constant 0 : index
    %c0_59 = arith.constant 0 : index
    %155 = vector.load %arg13[%c0_58, %c0_59] : memref<1x256xf32, #tpu.memory_space<vmem>>, vector<1x256xf32>
    %156 = vector.broadcast %155 : vector<1x256xf32> to vector<8x256xf32>
    %157 = arith.addf %154, %156 : vector<8x256xf32>
    %cst_60 = arith.constant 0.000000e+00 : f32
    %158 = vector.broadcast %cst_60 : f32 to vector<8x256xf32>
    %159 = arith.cmpf ogt, %157, %158 : vector<8x256xf32>
    %cst_61 = arith.constant 0.00999999977 : f32
    %160 = vector.broadcast %cst_61 : f32 to vector<8x256xf32>
    %161 = arith.mulf %160, %157 : vector<8x256xf32>
    %162 = arith.select %159, %157, %161 : vector<8x256xi1>, vector<8x256xf32>
    %163 = tpu.iota {dimensions = array<i32: 0>} : vector<8x256xi32>
    %164 = tpu.iota {dimensions = array<i32: 1>} : vector<8x256xi32>
    %c256_i32 = arith.constant 256 : i32
    %165 = vector.broadcast %c256_i32 : i32 to vector<8x256xi32>
    %166 = arith.muli %163, %165 : vector<8x256xi32>
    %167 = arith.addi %166, %164 : vector<8x256xi32>
    %c2_i32 = arith.constant 2 : i32
    %c-1640531527_i32_62 = arith.constant -1640531527 : i32
    %168 = arith.muli %c2_i32, %c-1640531527_i32_62 : i32
    %169 = arith.addi %0, %168 : i32
    %170 = vector.broadcast %169 : i32 to vector<8x256xi32>
    %171 = arith.xori %167, %170 : vector<8x256xi32>
    %c16_i32_63 = arith.constant 16 : i32
    %172 = vector.broadcast %c16_i32_63 : i32 to vector<8x256xi32>
    %173 = arith.shrui %171, %172 : vector<8x256xi32>
    %174 = arith.xori %171, %173 : vector<8x256xi32>
    %c2146121005_i32_64 = arith.constant 2146121005 : i32
    %175 = vector.broadcast %c2146121005_i32_64 : i32 to vector<8x256xi32>
    %176 = arith.muli %174, %175 : vector<8x256xi32>
    %c15_i32_65 = arith.constant 15 : i32
    %177 = vector.broadcast %c15_i32_65 : i32 to vector<8x256xi32>
    %178 = arith.shrui %176, %177 : vector<8x256xi32>
    %179 = arith.xori %176, %178 : vector<8x256xi32>
    %c-2073254261_i32_66 = arith.constant -2073254261 : i32
    %180 = vector.broadcast %c-2073254261_i32_66 : i32 to vector<8x256xi32>
    %181 = arith.muli %179, %180 : vector<8x256xi32>
    %c16_i32_67 = arith.constant 16 : i32
    %182 = vector.broadcast %c16_i32_67 : i32 to vector<8x256xi32>
    %183 = arith.shrui %181, %182 : vector<8x256xi32>
    %184 = arith.xori %181, %183 : vector<8x256xi32>
    %c1073741824_i32_68 = arith.constant 1073741824 : i32
    %185 = vector.broadcast %c1073741824_i32_68 : i32 to vector<8x256xi32>
    %186 = arith.cmpi uge, %184, %185 : vector<8x256xi32>
    %cst_69 = arith.constant 1.33333337 : f32
    %187 = vector.broadcast %cst_69 : f32 to vector<8x256xf32>
    %188 = arith.mulf %162, %187 : vector<8x256xf32>
    %cst_70 = arith.constant 0.000000e+00 : f32
    %189 = vector.broadcast %cst_70 : f32 to vector<8x256xf32>
    %190 = arith.select %186, %188, %189 : vector<8x256xi1>, vector<8x256xf32>
    %191 = arith.truncf %190 : vector<8x256xf32> to vector<8x256xbf16>
    %c0_71 = arith.constant 0 : index
    %c0_72 = arith.constant 0 : index
    %192 = vector.load %arg14[%c0_71, %c0_72] : memref<256x256xbf16, #tpu.memory_space<vmem>>, vector<256x256xbf16>
    %cst_73 = arith.constant dense<0.000000e+00> : vector<8x256xf32>
    %193 = tpu.matmul %191, %192, %cst_73 {dimension_numbers = #tpu.dot_dimension_numbers<[1], [0], [0], [1], [0, 0, 1, 1], [], []>} : vector<8x256xbf16>, vector<256x256xbf16>, vector<8x256xf32> -> vector<8x256xf32>
    %c0_74 = arith.constant 0 : index
    %c0_75 = arith.constant 0 : index
    %194 = vector.load %arg15[%c0_74, %c0_75] : memref<1x256xf32, #tpu.memory_space<vmem>>, vector<1x256xf32>
    %195 = vector.broadcast %194 : vector<1x256xf32> to vector<8x256xf32>
    %196 = arith.addf %193, %195 : vector<8x256xf32>
    %cst_76 = arith.constant dense<0.000000e+00> : vector<256xf32>
    %197 = vector.multi_reduction <add>, %196, %cst_76 [0] : vector<8x256xf32> to vector<256xf32>
    %198 = vector.shape_cast %197 : vector<256xf32> to vector<1x256xf32>
    %cst_77 = arith.constant 8.000000e+00 : f32
    %199 = vector.broadcast %cst_77 : f32 to vector<1x256xf32>
    %200 = arith.divf %198, %199 : vector<1x256xf32>
    %201 = vector.broadcast %200 : vector<1x256xf32> to vector<8x256xf32>
    %202 = arith.subf %196, %201 : vector<8x256xf32>
    %203 = arith.mulf %202, %202 : vector<8x256xf32>
    %cst_78 = arith.constant dense<0.000000e+00> : vector<256xf32>
    %204 = vector.multi_reduction <add>, %203, %cst_78 [0] : vector<8x256xf32> to vector<256xf32>
    %205 = vector.shape_cast %204 : vector<256xf32> to vector<1x256xf32>
    %cst_79 = arith.constant 8.000000e+00 : f32
    %206 = vector.broadcast %cst_79 : f32 to vector<1x256xf32>
    %207 = arith.divf %205, %206 : vector<1x256xf32>
    %208 = vector.broadcast %200 : vector<1x256xf32> to vector<8x256xf32>
    %209 = arith.subf %196, %208 : vector<8x256xf32>
    %cst_80 = arith.constant 9.99999974E-6 : f32
    %210 = vector.broadcast %cst_80 : f32 to vector<1x256xf32>
    %211 = arith.addf %207, %210 : vector<1x256xf32>
    %212 = math.rsqrt %211 : vector<1x256xf32>
    %213 = vector.broadcast %212 : vector<1x256xf32> to vector<8x256xf32>
    %214 = arith.mulf %209, %213 : vector<8x256xf32>
    %c0_81 = arith.constant 0 : index
    %c0_82 = arith.constant 0 : index
    %215 = vector.load %arg16[%c0_81, %c0_82] : memref<1x256xf32, #tpu.memory_space<vmem>>, vector<1x256xf32>
    %216 = vector.broadcast %215 : vector<1x256xf32> to vector<8x256xf32>
    %217 = arith.mulf %214, %216 : vector<8x256xf32>
    %c0_83 = arith.constant 0 : index
    %c0_84 = arith.constant 0 : index
    %218 = vector.load %arg17[%c0_83, %c0_84] : memref<1x256xf32, #tpu.memory_space<vmem>>, vector<1x256xf32>
    %219 = vector.broadcast %218 : vector<1x256xf32> to vector<8x256xf32>
    %220 = arith.addf %217, %219 : vector<8x256xf32>
    %cst_85 = arith.constant 0.000000e+00 : f32
    %221 = vector.broadcast %cst_85 : f32 to vector<8x256xf32>
    %222 = arith.cmpf ogt, %220, %221 : vector<8x256xf32>
    %cst_86 = arith.constant 0.00999999977 : f32
    %223 = vector.broadcast %cst_86 : f32 to vector<8x256xf32>
    %224 = arith.mulf %223, %220 : vector<8x256xf32>
    %225 = arith.select %222, %220, %224 : vector<8x256xi1>, vector<8x256xf32>
    %226 = tpu.iota {dimensions = array<i32: 0>} : vector<8x256xi32>
    %227 = tpu.iota {dimensions = array<i32: 1>} : vector<8x256xi32>
    %c256_i32_87 = arith.constant 256 : i32
    %228 = vector.broadcast %c256_i32_87 : i32 to vector<8x256xi32>
    %229 = arith.muli %226, %228 : vector<8x256xi32>
    %230 = arith.addi %229, %227 : vector<8x256xi32>
    %c3_i32 = arith.constant 3 : i32
    %c-1640531527_i32_88 = arith.constant -1640531527 : i32
    %231 = arith.muli %c3_i32, %c-1640531527_i32_88 : i32
    %232 = arith.addi %0, %231 : i32
    %233 = vector.broadcast %232 : i32 to vector<8x256xi32>
    %234 = arith.xori %230, %233 : vector<8x256xi32>
    %c16_i32_89 = arith.constant 16 : i32
    %235 = vector.broadcast %c16_i32_89 : i32 to vector<8x256xi32>
    %236 = arith.shrui %234, %235 : vector<8x256xi32>
    %237 = arith.xori %234, %236 : vector<8x256xi32>
    %c2146121005_i32_90 = arith.constant 2146121005 : i32
    %238 = vector.broadcast %c2146121005_i32_90 : i32 to vector<8x256xi32>
    %239 = arith.muli %237, %238 : vector<8x256xi32>
    %c15_i32_91 = arith.constant 15 : i32
    %240 = vector.broadcast %c15_i32_91 : i32 to vector<8x256xi32>
    %241 = arith.shrui %239, %240 : vector<8x256xi32>
    %242 = arith.xori %239, %241 : vector<8x256xi32>
    %c-2073254261_i32_92 = arith.constant -2073254261 : i32
    %243 = vector.broadcast %c-2073254261_i32_92 : i32 to vector<8x256xi32>
    %244 = arith.muli %242, %243 : vector<8x256xi32>
    %c16_i32_93 = arith.constant 16 : i32
    %245 = vector.broadcast %c16_i32_93 : i32 to vector<8x256xi32>
    %246 = arith.shrui %244, %245 : vector<8x256xi32>
    %247 = arith.xori %244, %246 : vector<8x256xi32>
    %c1073741824_i32_94 = arith.constant 1073741824 : i32
    %248 = vector.broadcast %c1073741824_i32_94 : i32 to vector<8x256xi32>
    %249 = arith.cmpi uge, %247, %248 : vector<8x256xi32>
    %cst_95 = arith.constant 1.33333337 : f32
    %250 = vector.broadcast %cst_95 : f32 to vector<8x256xf32>
    %251 = arith.mulf %225, %250 : vector<8x256xf32>
    %cst_96 = arith.constant 0.000000e+00 : f32
    %252 = vector.broadcast %cst_96 : f32 to vector<8x256xf32>
    %253 = arith.select %249, %251, %252 : vector<8x256xi1>, vector<8x256xf32>
    %254 = arith.truncf %253 : vector<8x256xf32> to vector<8x256xbf16>
    %c0_97 = arith.constant 0 : index
    %c0_98 = arith.constant 0 : index
    %255 = vector.load %arg18[%c0_97, %c0_98] : memref<256x128xbf16, #tpu.memory_space<vmem>>, vector<256x128xbf16>
    %cst_99 = arith.constant dense<0.000000e+00> : vector<8x128xf32>
    %256 = tpu.matmul %254, %255, %cst_99 {dimension_numbers = #tpu.dot_dimension_numbers<[1], [0], [0], [1], [0, 0, 1, 1], [], []>} : vector<8x256xbf16>, vector<256x128xbf16>, vector<8x128xf32> -> vector<8x128xf32>
    %c0_100 = arith.constant 0 : index
    %c0_101 = arith.constant 0 : index
    %257 = vector.load %arg19[%c0_100, %c0_101] : memref<1x128xf32, #tpu.memory_space<vmem>>, vector<1x128xf32>
    %258 = vector.broadcast %257 : vector<1x128xf32> to vector<8x128xf32>
    %259 = arith.addf %256, %258 : vector<8x128xf32>
    %cst_102 = arith.constant dense<0.000000e+00> : vector<128xf32>
    %260 = vector.multi_reduction <add>, %259, %cst_102 [0] : vector<8x128xf32> to vector<128xf32>
    %261 = vector.shape_cast %260 : vector<128xf32> to vector<1x128xf32>
    %cst_103 = arith.constant 8.000000e+00 : f32
    %262 = vector.broadcast %cst_103 : f32 to vector<1x128xf32>
    %263 = arith.divf %261, %262 : vector<1x128xf32>
    %264 = vector.broadcast %263 : vector<1x128xf32> to vector<8x128xf32>
    %265 = arith.subf %259, %264 : vector<8x128xf32>
    %266 = arith.mulf %265, %265 : vector<8x128xf32>
    %cst_104 = arith.constant dense<0.000000e+00> : vector<128xf32>
    %267 = vector.multi_reduction <add>, %266, %cst_104 [0] : vector<8x128xf32> to vector<128xf32>
    %268 = vector.shape_cast %267 : vector<128xf32> to vector<1x128xf32>
    %cst_105 = arith.constant 8.000000e+00 : f32
    %269 = vector.broadcast %cst_105 : f32 to vector<1x128xf32>
    %270 = arith.divf %268, %269 : vector<1x128xf32>
    %271 = vector.broadcast %263 : vector<1x128xf32> to vector<8x128xf32>
    %272 = arith.subf %259, %271 : vector<8x128xf32>
    %cst_106 = arith.constant 9.99999974E-6 : f32
    %273 = vector.broadcast %cst_106 : f32 to vector<1x128xf32>
    %274 = arith.addf %270, %273 : vector<1x128xf32>
    %275 = math.rsqrt %274 : vector<1x128xf32>
    %276 = vector.broadcast %275 : vector<1x128xf32> to vector<8x128xf32>
    %277 = arith.mulf %272, %276 : vector<8x128xf32>
    %c0_107 = arith.constant 0 : index
    %c0_108 = arith.constant 0 : index
    %278 = vector.load %arg20[%c0_107, %c0_108] : memref<1x128xf32, #tpu.memory_space<vmem>>, vector<1x128xf32>
    %279 = vector.broadcast %278 : vector<1x128xf32> to vector<8x128xf32>
    %280 = arith.mulf %277, %279 : vector<8x128xf32>
    %c0_109 = arith.constant 0 : index
    %c0_110 = arith.constant 0 : index
    %281 = vector.load %arg21[%c0_109, %c0_110] : memref<1x128xf32, #tpu.memory_space<vmem>>, vector<1x128xf32>
    %282 = vector.broadcast %281 : vector<1x128xf32> to vector<8x128xf32>
    %283 = arith.addf %280, %282 : vector<8x128xf32>
    %cst_111 = arith.constant 0.000000e+00 : f32
    %284 = vector.broadcast %cst_111 : f32 to vector<8x128xf32>
    %285 = arith.cmpf ogt, %283, %284 : vector<8x128xf32>
    %cst_112 = arith.constant 0.00999999977 : f32
    %286 = vector.broadcast %cst_112 : f32 to vector<8x128xf32>
    %287 = arith.mulf %286, %283 : vector<8x128xf32>
    %288 = arith.select %285, %283, %287 : vector<8x128xi1>, vector<8x128xf32>
    %289 = tpu.iota {dimensions = array<i32: 0>} : vector<8x128xi32>
    %290 = tpu.iota {dimensions = array<i32: 1>} : vector<8x128xi32>
    %c128_i32 = arith.constant 128 : i32
    %291 = vector.broadcast %c128_i32 : i32 to vector<8x128xi32>
    %292 = arith.muli %289, %291 : vector<8x128xi32>
    %293 = arith.addi %292, %290 : vector<8x128xi32>
    %c4_i32 = arith.constant 4 : i32
    %c-1640531527_i32_113 = arith.constant -1640531527 : i32
    %294 = arith.muli %c4_i32, %c-1640531527_i32_113 : i32
    %295 = arith.addi %0, %294 : i32
    %296 = vector.broadcast %295 : i32 to vector<8x128xi32>
    %297 = arith.xori %293, %296 : vector<8x128xi32>
    %c16_i32_114 = arith.constant 16 : i32
    %298 = vector.broadcast %c16_i32_114 : i32 to vector<8x128xi32>
    %299 = arith.shrui %297, %298 : vector<8x128xi32>
    %300 = arith.xori %297, %299 : vector<8x128xi32>
    %c2146121005_i32_115 = arith.constant 2146121005 : i32
    %301 = vector.broadcast %c2146121005_i32_115 : i32 to vector<8x128xi32>
    %302 = arith.muli %300, %301 : vector<8x128xi32>
    %c15_i32_116 = arith.constant 15 : i32
    %303 = vector.broadcast %c15_i32_116 : i32 to vector<8x128xi32>
    %304 = arith.shrui %302, %303 : vector<8x128xi32>
    %305 = arith.xori %302, %304 : vector<8x128xi32>
    %c-2073254261_i32_117 = arith.constant -2073254261 : i32
    %306 = vector.broadcast %c-2073254261_i32_117 : i32 to vector<8x128xi32>
    %307 = arith.muli %305, %306 : vector<8x128xi32>
    %c16_i32_118 = arith.constant 16 : i32
    %308 = vector.broadcast %c16_i32_118 : i32 to vector<8x128xi32>
    %309 = arith.shrui %307, %308 : vector<8x128xi32>
    %310 = arith.xori %307, %309 : vector<8x128xi32>
    %c1073741824_i32_119 = arith.constant 1073741824 : i32
    %311 = vector.broadcast %c1073741824_i32_119 : i32 to vector<8x128xi32>
    %312 = arith.cmpi uge, %310, %311 : vector<8x128xi32>
    %cst_120 = arith.constant 1.33333337 : f32
    %313 = vector.broadcast %cst_120 : f32 to vector<8x128xf32>
    %314 = arith.mulf %288, %313 : vector<8x128xf32>
    %cst_121 = arith.constant 0.000000e+00 : f32
    %315 = vector.broadcast %cst_121 : f32 to vector<8x128xf32>
    %316 = arith.select %312, %314, %315 : vector<8x128xi1>, vector<8x128xf32>
    %317 = arith.truncf %316 : vector<8x128xf32> to vector<8x128xbf16>
    %c0_122 = arith.constant 0 : index
    %c0_123 = arith.constant 0 : index
    %318 = vector.load %arg22[%c0_122, %c0_123] : memref<128x128xbf16, #tpu.memory_space<vmem>>, vector<128x128xbf16>
    %cst_124 = arith.constant dense<0.000000e+00> : vector<8x128xf32>
    %319 = tpu.matmul %317, %318, %cst_124 {dimension_numbers = #tpu.dot_dimension_numbers<[1], [0], [0], [1], [0, 0, 1, 1], [], []>} : vector<8x128xbf16>, vector<128x128xbf16>, vector<8x128xf32> -> vector<8x128xf32>
    %c0_125 = arith.constant 0 : index
    %c0_126 = arith.constant 0 : index
    %320 = vector.load %arg23[%c0_125, %c0_126] : memref<1x128xf32, #tpu.memory_space<vmem>>, vector<1x128xf32>
    %321 = vector.broadcast %320 : vector<1x128xf32> to vector<8x128xf32>
    %322 = arith.addf %319, %321 : vector<8x128xf32>
    %cst_127 = arith.constant dense<0.000000e+00> : vector<128xf32>
    %323 = vector.multi_reduction <add>, %322, %cst_127 [0] : vector<8x128xf32> to vector<128xf32>
    %324 = vector.shape_cast %323 : vector<128xf32> to vector<1x128xf32>
    %cst_128 = arith.constant 8.000000e+00 : f32
    %325 = vector.broadcast %cst_128 : f32 to vector<1x128xf32>
    %326 = arith.divf %324, %325 : vector<1x128xf32>
    %327 = vector.broadcast %326 : vector<1x128xf32> to vector<8x128xf32>
    %328 = arith.subf %322, %327 : vector<8x128xf32>
    %329 = arith.mulf %328, %328 : vector<8x128xf32>
    %cst_129 = arith.constant dense<0.000000e+00> : vector<128xf32>
    %330 = vector.multi_reduction <add>, %329, %cst_129 [0] : vector<8x128xf32> to vector<128xf32>
    %331 = vector.shape_cast %330 : vector<128xf32> to vector<1x128xf32>
    %cst_130 = arith.constant 8.000000e+00 : f32
    %332 = vector.broadcast %cst_130 : f32 to vector<1x128xf32>
    %333 = arith.divf %331, %332 : vector<1x128xf32>
    %334 = vector.broadcast %326 : vector<1x128xf32> to vector<8x128xf32>
    %335 = arith.subf %322, %334 : vector<8x128xf32>
    %cst_131 = arith.constant 9.99999974E-6 : f32
    %336 = vector.broadcast %cst_131 : f32 to vector<1x128xf32>
    %337 = arith.addf %333, %336 : vector<1x128xf32>
    %338 = math.rsqrt %337 : vector<1x128xf32>
    %339 = vector.broadcast %338 : vector<1x128xf32> to vector<8x128xf32>
    %340 = arith.mulf %335, %339 : vector<8x128xf32>
    %c0_132 = arith.constant 0 : index
    %c0_133 = arith.constant 0 : index
    %341 = vector.load %arg24[%c0_132, %c0_133] : memref<1x128xf32, #tpu.memory_space<vmem>>, vector<1x128xf32>
    %342 = vector.broadcast %341 : vector<1x128xf32> to vector<8x128xf32>
    %343 = arith.mulf %340, %342 : vector<8x128xf32>
    %c0_134 = arith.constant 0 : index
    %c0_135 = arith.constant 0 : index
    %344 = vector.load %arg25[%c0_134, %c0_135] : memref<1x128xf32, #tpu.memory_space<vmem>>, vector<1x128xf32>
    %345 = vector.broadcast %344 : vector<1x128xf32> to vector<8x128xf32>
    %346 = arith.addf %343, %345 : vector<8x128xf32>
    %cst_136 = arith.constant 0.000000e+00 : f32
    %347 = vector.broadcast %cst_136 : f32 to vector<8x128xf32>
    %348 = arith.cmpf ogt, %346, %347 : vector<8x128xf32>
    %cst_137 = arith.constant 0.00999999977 : f32
    %349 = vector.broadcast %cst_137 : f32 to vector<8x128xf32>
    %350 = arith.mulf %349, %346 : vector<8x128xf32>
    %351 = arith.select %348, %346, %350 : vector<8x128xi1>, vector<8x128xf32>
    %352 = tpu.iota {dimensions = array<i32: 0>} : vector<8x128xi32>
    %353 = tpu.iota {dimensions = array<i32: 1>} : vector<8x128xi32>
    %c128_i32_138 = arith.constant 128 : i32
    %354 = vector.broadcast %c128_i32_138 : i32 to vector<8x128xi32>
    %355 = arith.muli %352, %354 : vector<8x128xi32>
    %356 = arith.addi %355, %353 : vector<8x128xi32>
    %c5_i32 = arith.constant 5 : i32
    %c-1640531527_i32_139 = arith.constant -1640531527 : i32
    %357 = arith.muli %c5_i32, %c-1640531527_i32_139 : i32
    %358 = arith.addi %0, %357 : i32
    %359 = vector.broadcast %358 : i32 to vector<8x128xi32>
    %360 = arith.xori %356, %359 : vector<8x128xi32>
    %c16_i32_140 = arith.constant 16 : i32
    %361 = vector.broadcast %c16_i32_140 : i32 to vector<8x128xi32>
    %362 = arith.shrui %360, %361 : vector<8x128xi32>
    %363 = arith.xori %360, %362 : vector<8x128xi32>
    %c2146121005_i32_141 = arith.constant 2146121005 : i32
    %364 = vector.broadcast %c2146121005_i32_141 : i32 to vector<8x128xi32>
    %365 = arith.muli %363, %364 : vector<8x128xi32>
    %c15_i32_142 = arith.constant 15 : i32
    %366 = vector.broadcast %c15_i32_142 : i32 to vector<8x128xi32>
    %367 = arith.shrui %365, %366 : vector<8x128xi32>
    %368 = arith.xori %365, %367 : vector<8x128xi32>
    %c-2073254261_i32_143 = arith.constant -2073254261 : i32
    %369 = vector.broadcast %c-2073254261_i32_143 : i32 to vector<8x128xi32>
    %370 = arith.muli %368, %369 : vector<8x128xi32>
    %c16_i32_144 = arith.constant 16 : i32
    %371 = vector.broadcast %c16_i32_144 : i32 to vector<8x128xi32>
    %372 = arith.shrui %370, %371 : vector<8x128xi32>
    %373 = arith.xori %370, %372 : vector<8x128xi32>
    %c1073741824_i32_145 = arith.constant 1073741824 : i32
    %374 = vector.broadcast %c1073741824_i32_145 : i32 to vector<8x128xi32>
    %375 = arith.cmpi uge, %373, %374 : vector<8x128xi32>
    %cst_146 = arith.constant 1.33333337 : f32
    %376 = vector.broadcast %cst_146 : f32 to vector<8x128xf32>
    %377 = arith.mulf %351, %376 : vector<8x128xf32>
    %cst_147 = arith.constant 0.000000e+00 : f32
    %378 = vector.broadcast %cst_147 : f32 to vector<8x128xf32>
    %379 = arith.select %375, %377, %378 : vector<8x128xi1>, vector<8x128xf32>
    %380 = arith.truncf %379 : vector<8x128xf32> to vector<8x128xbf16>
    %c0_148 = arith.constant 0 : index
    %c0_149 = arith.constant 0 : index
    %381 = vector.load %arg26[%c0_148, %c0_149] : memref<128x64xbf16, #tpu.memory_space<vmem>>, vector<128x64xbf16>
    %cst_150 = arith.constant dense<0.000000e+00> : vector<8x64xf32>
    %382 = tpu.matmul %380, %381, %cst_150 {dimension_numbers = #tpu.dot_dimension_numbers<[1], [0], [0], [1], [0, 0, 1, 1], [], []>} : vector<8x128xbf16>, vector<128x64xbf16>, vector<8x64xf32> -> vector<8x64xf32>
    %c0_151 = arith.constant 0 : index
    %c0_152 = arith.constant 0 : index
    %383 = vector.load %arg27[%c0_151, %c0_152] : memref<1x64xf32, #tpu.memory_space<vmem>>, vector<1x64xf32>
    %384 = vector.broadcast %383 : vector<1x64xf32> to vector<8x64xf32>
    %385 = arith.addf %382, %384 : vector<8x64xf32>
    %cst_153 = arith.constant dense<0.000000e+00> : vector<64xf32>
    %386 = vector.multi_reduction <add>, %385, %cst_153 [0] : vector<8x64xf32> to vector<64xf32>
    %387 = vector.shape_cast %386 : vector<64xf32> to vector<1x64xf32>
    %cst_154 = arith.constant 8.000000e+00 : f32
    %388 = vector.broadcast %cst_154 : f32 to vector<1x64xf32>
    %389 = arith.divf %387, %388 : vector<1x64xf32>
    %390 = vector.broadcast %389 : vector<1x64xf32> to vector<8x64xf32>
    %391 = arith.subf %385, %390 : vector<8x64xf32>
    %392 = arith.mulf %391, %391 : vector<8x64xf32>
    %cst_155 = arith.constant dense<0.000000e+00> : vector<64xf32>
    %393 = vector.multi_reduction <add>, %392, %cst_155 [0] : vector<8x64xf32> to vector<64xf32>
    %394 = vector.shape_cast %393 : vector<64xf32> to vector<1x64xf32>
    %cst_156 = arith.constant 8.000000e+00 : f32
    %395 = vector.broadcast %cst_156 : f32 to vector<1x64xf32>
    %396 = arith.divf %394, %395 : vector<1x64xf32>
    %397 = vector.broadcast %389 : vector<1x64xf32> to vector<8x64xf32>
    %398 = arith.subf %385, %397 : vector<8x64xf32>
    %cst_157 = arith.constant 9.99999974E-6 : f32
    %399 = vector.broadcast %cst_157 : f32 to vector<1x64xf32>
    %400 = arith.addf %396, %399 : vector<1x64xf32>
    %401 = math.rsqrt %400 : vector<1x64xf32>
    %402 = vector.broadcast %401 : vector<1x64xf32> to vector<8x64xf32>
    %403 = arith.mulf %398, %402 : vector<8x64xf32>
    %c0_158 = arith.constant 0 : index
    %c0_159 = arith.constant 0 : index
    %404 = vector.load %arg28[%c0_158, %c0_159] : memref<1x64xf32, #tpu.memory_space<vmem>>, vector<1x64xf32>
    %405 = vector.broadcast %404 : vector<1x64xf32> to vector<8x64xf32>
    %406 = arith.mulf %403, %405 : vector<8x64xf32>
    %c0_160 = arith.constant 0 : index
    %c0_161 = arith.constant 0 : index
    %407 = vector.load %arg29[%c0_160, %c0_161] : memref<1x64xf32, #tpu.memory_space<vmem>>, vector<1x64xf32>
    %408 = vector.broadcast %407 : vector<1x64xf32> to vector<8x64xf32>
    %409 = arith.addf %406, %408 : vector<8x64xf32>
    %cst_162 = arith.constant 0.000000e+00 : f32
    %410 = vector.broadcast %cst_162 : f32 to vector<8x64xf32>
    %411 = arith.cmpf ogt, %409, %410 : vector<8x64xf32>
    %cst_163 = arith.constant 0.00999999977 : f32
    %412 = vector.broadcast %cst_163 : f32 to vector<8x64xf32>
    %413 = arith.mulf %412, %409 : vector<8x64xf32>
    %414 = arith.select %411, %409, %413 : vector<8x64xi1>, vector<8x64xf32>
    %415 = tpu.iota {dimensions = array<i32: 0>} : vector<8x64xi32>
    %416 = tpu.iota {dimensions = array<i32: 1>} : vector<8x64xi32>
    %c64_i32 = arith.constant 64 : i32
    %417 = vector.broadcast %c64_i32 : i32 to vector<8x64xi32>
    %418 = arith.muli %415, %417 : vector<8x64xi32>
    %419 = arith.addi %418, %416 : vector<8x64xi32>
    %c6_i32 = arith.constant 6 : i32
    %c-1640531527_i32_164 = arith.constant -1640531527 : i32
    %420 = arith.muli %c6_i32, %c-1640531527_i32_164 : i32
    %421 = arith.addi %0, %420 : i32
    %422 = vector.broadcast %421 : i32 to vector<8x64xi32>
    %423 = arith.xori %419, %422 : vector<8x64xi32>
    %c16_i32_165 = arith.constant 16 : i32
    %424 = vector.broadcast %c16_i32_165 : i32 to vector<8x64xi32>
    %425 = arith.shrui %423, %424 : vector<8x64xi32>
    %426 = arith.xori %423, %425 : vector<8x64xi32>
    %c2146121005_i32_166 = arith.constant 2146121005 : i32
    %427 = vector.broadcast %c2146121005_i32_166 : i32 to vector<8x64xi32>
    %428 = arith.muli %426, %427 : vector<8x64xi32>
    %c15_i32_167 = arith.constant 15 : i32
    %429 = vector.broadcast %c15_i32_167 : i32 to vector<8x64xi32>
    %430 = arith.shrui %428, %429 : vector<8x64xi32>
    %431 = arith.xori %428, %430 : vector<8x64xi32>
    %c-2073254261_i32_168 = arith.constant -2073254261 : i32
    %432 = vector.broadcast %c-2073254261_i32_168 : i32 to vector<8x64xi32>
    %433 = arith.muli %431, %432 : vector<8x64xi32>
    %c16_i32_169 = arith.constant 16 : i32
    %434 = vector.broadcast %c16_i32_169 : i32 to vector<8x64xi32>
    %435 = arith.shrui %433, %434 : vector<8x64xi32>
    %436 = arith.xori %433, %435 : vector<8x64xi32>
    %c1073741824_i32_170 = arith.constant 1073741824 : i32
    %437 = vector.broadcast %c1073741824_i32_170 : i32 to vector<8x64xi32>
    %438 = arith.cmpi uge, %436, %437 : vector<8x64xi32>
    %cst_171 = arith.constant 1.33333337 : f32
    %439 = vector.broadcast %cst_171 : f32 to vector<8x64xf32>
    %440 = arith.mulf %414, %439 : vector<8x64xf32>
    %cst_172 = arith.constant 0.000000e+00 : f32
    %441 = vector.broadcast %cst_172 : f32 to vector<8x64xf32>
    %442 = arith.select %438, %440, %441 : vector<8x64xi1>, vector<8x64xf32>
    %443 = arith.truncf %442 : vector<8x64xf32> to vector<8x64xbf16>
    %c0_173 = arith.constant 0 : index
    %c0_174 = arith.constant 0 : index
    %444 = vector.load %arg30[%c0_173, %c0_174] : memref<64x64xbf16, #tpu.memory_space<vmem>>, vector<64x64xbf16>
    %cst_175 = arith.constant dense<0.000000e+00> : vector<8x64xf32>
    %445 = tpu.matmul %443, %444, %cst_175 {dimension_numbers = #tpu.dot_dimension_numbers<[1], [0], [0], [1], [0, 0, 1, 1], [], []>} : vector<8x64xbf16>, vector<64x64xbf16>, vector<8x64xf32> -> vector<8x64xf32>
    %c0_176 = arith.constant 0 : index
    %c0_177 = arith.constant 0 : index
    %446 = vector.load %arg31[%c0_176, %c0_177] : memref<1x64xf32, #tpu.memory_space<vmem>>, vector<1x64xf32>
    %447 = vector.broadcast %446 : vector<1x64xf32> to vector<8x64xf32>
    %448 = arith.addf %445, %447 : vector<8x64xf32>
    %cst_178 = arith.constant dense<0.000000e+00> : vector<64xf32>
    %449 = vector.multi_reduction <add>, %448, %cst_178 [0] : vector<8x64xf32> to vector<64xf32>
    %450 = vector.shape_cast %449 : vector<64xf32> to vector<1x64xf32>
    %cst_179 = arith.constant 8.000000e+00 : f32
    %451 = vector.broadcast %cst_179 : f32 to vector<1x64xf32>
    %452 = arith.divf %450, %451 : vector<1x64xf32>
    %453 = vector.broadcast %452 : vector<1x64xf32> to vector<8x64xf32>
    %454 = arith.subf %448, %453 : vector<8x64xf32>
    %455 = arith.mulf %454, %454 : vector<8x64xf32>
    %cst_180 = arith.constant dense<0.000000e+00> : vector<64xf32>
    %456 = vector.multi_reduction <add>, %455, %cst_180 [0] : vector<8x64xf32> to vector<64xf32>
    %457 = vector.shape_cast %456 : vector<64xf32> to vector<1x64xf32>
    %cst_181 = arith.constant 8.000000e+00 : f32
    %458 = vector.broadcast %cst_181 : f32 to vector<1x64xf32>
    %459 = arith.divf %457, %458 : vector<1x64xf32>
    %460 = vector.broadcast %452 : vector<1x64xf32> to vector<8x64xf32>
    %461 = arith.subf %448, %460 : vector<8x64xf32>
    %cst_182 = arith.constant 9.99999974E-6 : f32
    %462 = vector.broadcast %cst_182 : f32 to vector<1x64xf32>
    %463 = arith.addf %459, %462 : vector<1x64xf32>
    %464 = math.rsqrt %463 : vector<1x64xf32>
    %465 = vector.broadcast %464 : vector<1x64xf32> to vector<8x64xf32>
    %466 = arith.mulf %461, %465 : vector<8x64xf32>
    %c0_183 = arith.constant 0 : index
    %c0_184 = arith.constant 0 : index
    %467 = vector.load %arg32[%c0_183, %c0_184] : memref<1x64xf32, #tpu.memory_space<vmem>>, vector<1x64xf32>
    %468 = vector.broadcast %467 : vector<1x64xf32> to vector<8x64xf32>
    %469 = arith.mulf %466, %468 : vector<8x64xf32>
    %c0_185 = arith.constant 0 : index
    %c0_186 = arith.constant 0 : index
    %470 = vector.load %arg33[%c0_185, %c0_186] : memref<1x64xf32, #tpu.memory_space<vmem>>, vector<1x64xf32>
    %471 = vector.broadcast %470 : vector<1x64xf32> to vector<8x64xf32>
    %472 = arith.addf %469, %471 : vector<8x64xf32>
    %cst_187 = arith.constant 0.000000e+00 : f32
    %473 = vector.broadcast %cst_187 : f32 to vector<8x64xf32>
    %474 = arith.cmpf ogt, %472, %473 : vector<8x64xf32>
    %cst_188 = arith.constant 0.00999999977 : f32
    %475 = vector.broadcast %cst_188 : f32 to vector<8x64xf32>
    %476 = arith.mulf %475, %472 : vector<8x64xf32>
    %477 = arith.select %474, %472, %476 : vector<8x64xi1>, vector<8x64xf32>
    %478 = tpu.iota {dimensions = array<i32: 0>} : vector<8x64xi32>
    %479 = tpu.iota {dimensions = array<i32: 1>} : vector<8x64xi32>
    %c64_i32_189 = arith.constant 64 : i32
    %480 = vector.broadcast %c64_i32_189 : i32 to vector<8x64xi32>
    %481 = arith.muli %478, %480 : vector<8x64xi32>
    %482 = arith.addi %481, %479 : vector<8x64xi32>
    %c7_i32 = arith.constant 7 : i32
    %c-1640531527_i32_190 = arith.constant -1640531527 : i32
    %483 = arith.muli %c7_i32, %c-1640531527_i32_190 : i32
    %484 = arith.addi %0, %483 : i32
    %485 = vector.broadcast %484 : i32 to vector<8x64xi32>
    %486 = arith.xori %482, %485 : vector<8x64xi32>
    %c16_i32_191 = arith.constant 16 : i32
    %487 = vector.broadcast %c16_i32_191 : i32 to vector<8x64xi32>
    %488 = arith.shrui %486, %487 : vector<8x64xi32>
    %489 = arith.xori %486, %488 : vector<8x64xi32>
    %c2146121005_i32_192 = arith.constant 2146121005 : i32
    %490 = vector.broadcast %c2146121005_i32_192 : i32 to vector<8x64xi32>
    %491 = arith.muli %489, %490 : vector<8x64xi32>
    %c15_i32_193 = arith.constant 15 : i32
    %492 = vector.broadcast %c15_i32_193 : i32 to vector<8x64xi32>
    %493 = arith.shrui %491, %492 : vector<8x64xi32>
    %494 = arith.xori %491, %493 : vector<8x64xi32>
    %c-2073254261_i32_194 = arith.constant -2073254261 : i32
    %495 = vector.broadcast %c-2073254261_i32_194 : i32 to vector<8x64xi32>
    %496 = arith.muli %494, %495 : vector<8x64xi32>
    %c16_i32_195 = arith.constant 16 : i32
    %497 = vector.broadcast %c16_i32_195 : i32 to vector<8x64xi32>
    %498 = arith.shrui %496, %497 : vector<8x64xi32>
    %499 = arith.xori %496, %498 : vector<8x64xi32>
    %c1073741824_i32_196 = arith.constant 1073741824 : i32
    %500 = vector.broadcast %c1073741824_i32_196 : i32 to vector<8x64xi32>
    %501 = arith.cmpi uge, %499, %500 : vector<8x64xi32>
    %cst_197 = arith.constant 1.33333337 : f32
    %502 = vector.broadcast %cst_197 : f32 to vector<8x64xf32>
    %503 = arith.mulf %477, %502 : vector<8x64xf32>
    %cst_198 = arith.constant 0.000000e+00 : f32
    %504 = vector.broadcast %cst_198 : f32 to vector<8x64xf32>
    %505 = arith.select %501, %503, %504 : vector<8x64xi1>, vector<8x64xf32>
    %506 = arith.truncf %505 : vector<8x64xf32> to vector<8x64xbf16>
    %c0_199 = arith.constant 0 : index
    %c0_200 = arith.constant 0 : index
    %507 = vector.load %arg34[%c0_199, %c0_200] : memref<64x32xbf16, #tpu.memory_space<vmem>>, vector<64x32xbf16>
    %cst_201 = arith.constant dense<0.000000e+00> : vector<8x32xf32>
    %508 = tpu.matmul %506, %507, %cst_201 {dimension_numbers = #tpu.dot_dimension_numbers<[1], [0], [0], [1], [0, 0, 1, 1], [], []>} : vector<8x64xbf16>, vector<64x32xbf16>, vector<8x32xf32> -> vector<8x32xf32>
    %c0_202 = arith.constant 0 : index
    %c0_203 = arith.constant 0 : index
    %509 = vector.load %arg35[%c0_202, %c0_203] : memref<1x32xf32, #tpu.memory_space<vmem>>, vector<1x32xf32>
    %510 = vector.broadcast %509 : vector<1x32xf32> to vector<8x32xf32>
    %511 = arith.addf %508, %510 : vector<8x32xf32>
    %cst_204 = arith.constant dense<0.000000e+00> : vector<32xf32>
    %512 = vector.multi_reduction <add>, %511, %cst_204 [0] : vector<8x32xf32> to vector<32xf32>
    %513 = vector.shape_cast %512 : vector<32xf32> to vector<1x32xf32>
    %cst_205 = arith.constant 8.000000e+00 : f32
    %514 = vector.broadcast %cst_205 : f32 to vector<1x32xf32>
    %515 = arith.divf %513, %514 : vector<1x32xf32>
    %516 = vector.broadcast %515 : vector<1x32xf32> to vector<8x32xf32>
    %517 = arith.subf %511, %516 : vector<8x32xf32>
    %518 = arith.mulf %517, %517 : vector<8x32xf32>
    %cst_206 = arith.constant dense<0.000000e+00> : vector<32xf32>
    %519 = vector.multi_reduction <add>, %518, %cst_206 [0] : vector<8x32xf32> to vector<32xf32>
    %520 = vector.shape_cast %519 : vector<32xf32> to vector<1x32xf32>
    %cst_207 = arith.constant 8.000000e+00 : f32
    %521 = vector.broadcast %cst_207 : f32 to vector<1x32xf32>
    %522 = arith.divf %520, %521 : vector<1x32xf32>
    %523 = vector.broadcast %515 : vector<1x32xf32> to vector<8x32xf32>
    %524 = arith.subf %511, %523 : vector<8x32xf32>
    %cst_208 = arith.constant 9.99999974E-6 : f32
    %525 = vector.broadcast %cst_208 : f32 to vector<1x32xf32>
    %526 = arith.addf %522, %525 : vector<1x32xf32>
    %527 = math.rsqrt %526 : vector<1x32xf32>
    %528 = vector.broadcast %527 : vector<1x32xf32> to vector<8x32xf32>
    %529 = arith.mulf %524, %528 : vector<8x32xf32>
    %c0_209 = arith.constant 0 : index
    %c0_210 = arith.constant 0 : index
    %530 = vector.load %arg36[%c0_209, %c0_210] : memref<1x32xf32, #tpu.memory_space<vmem>>, vector<1x32xf32>
    %531 = vector.broadcast %530 : vector<1x32xf32> to vector<8x32xf32>
    %532 = arith.mulf %529, %531 : vector<8x32xf32>
    %c0_211 = arith.constant 0 : index
    %c0_212 = arith.constant 0 : index
    %533 = vector.load %arg37[%c0_211, %c0_212] : memref<1x32xf32, #tpu.memory_space<vmem>>, vector<1x32xf32>
    %534 = vector.broadcast %533 : vector<1x32xf32> to vector<8x32xf32>
    %535 = arith.addf %532, %534 : vector<8x32xf32>
    %cst_213 = arith.constant 0.000000e+00 : f32
    %536 = vector.broadcast %cst_213 : f32 to vector<8x32xf32>
    %537 = arith.cmpf ogt, %535, %536 : vector<8x32xf32>
    %cst_214 = arith.constant 0.00999999977 : f32
    %538 = vector.broadcast %cst_214 : f32 to vector<8x32xf32>
    %539 = arith.mulf %538, %535 : vector<8x32xf32>
    %540 = arith.select %537, %535, %539 : vector<8x32xi1>, vector<8x32xf32>
    %541 = tpu.iota {dimensions = array<i32: 0>} : vector<8x32xi32>
    %542 = tpu.iota {dimensions = array<i32: 1>} : vector<8x32xi32>
    %c32_i32 = arith.constant 32 : i32
    %543 = vector.broadcast %c32_i32 : i32 to vector<8x32xi32>
    %544 = arith.muli %541, %543 : vector<8x32xi32>
    %545 = arith.addi %544, %542 : vector<8x32xi32>
    %c8_i32 = arith.constant 8 : i32
    %c-1640531527_i32_215 = arith.constant -1640531527 : i32
    %546 = arith.muli %c8_i32, %c-1640531527_i32_215 : i32
    %547 = arith.addi %0, %546 : i32
    %548 = vector.broadcast %547 : i32 to vector<8x32xi32>
    %549 = arith.xori %545, %548 : vector<8x32xi32>
    %c16_i32_216 = arith.constant 16 : i32
    %550 = vector.broadcast %c16_i32_216 : i32 to vector<8x32xi32>
    %551 = arith.shrui %549, %550 : vector<8x32xi32>
    %552 = arith.xori %549, %551 : vector<8x32xi32>
    %c2146121005_i32_217 = arith.constant 2146121005 : i32
    %553 = vector.broadcast %c2146121005_i32_217 : i32 to vector<8x32xi32>
    %554 = arith.muli %552, %553 : vector<8x32xi32>
    %c15_i32_218 = arith.constant 15 : i32
    %555 = vector.broadcast %c15_i32_218 : i32 to vector<8x32xi32>
    %556 = arith.shrui %554, %555 : vector<8x32xi32>
    %557 = arith.xori %554, %556 : vector<8x32xi32>
    %c-2073254261_i32_219 = arith.constant -2073254261 : i32
    %558 = vector.broadcast %c-2073254261_i32_219 : i32 to vector<8x32xi32>
    %559 = arith.muli %557, %558 : vector<8x32xi32>
    %c16_i32_220 = arith.constant 16 : i32
    %560 = vector.broadcast %c16_i32_220 : i32 to vector<8x32xi32>
    %561 = arith.shrui %559, %560 : vector<8x32xi32>
    %562 = arith.xori %559, %561 : vector<8x32xi32>
    %c1073741824_i32_221 = arith.constant 1073741824 : i32
    %563 = vector.broadcast %c1073741824_i32_221 : i32 to vector<8x32xi32>
    %564 = arith.cmpi uge, %562, %563 : vector<8x32xi32>
    %cst_222 = arith.constant 1.33333337 : f32
    %565 = vector.broadcast %cst_222 : f32 to vector<8x32xf32>
    %566 = arith.mulf %540, %565 : vector<8x32xf32>
    %cst_223 = arith.constant 0.000000e+00 : f32
    %567 = vector.broadcast %cst_223 : f32 to vector<8x32xf32>
    %568 = arith.select %564, %566, %567 : vector<8x32xi1>, vector<8x32xf32>
    %569 = arith.truncf %568 : vector<8x32xf32> to vector<8x32xbf16>
    %c0_224 = arith.constant 0 : index
    %c0_225 = arith.constant 0 : index
    %570 = vector.load %arg38[%c0_224, %c0_225] : memref<32x10xbf16, #tpu.memory_space<vmem>>, vector<32x10xbf16>
    %cst_226 = arith.constant dense<0.000000e+00> : vector<8x10xf32>
    %571 = tpu.matmul %569, %570, %cst_226 {dimension_numbers = #tpu.dot_dimension_numbers<[1], [0], [0], [1], [0, 0, 1, 1], [], []>} : vector<8x32xbf16>, vector<32x10xbf16>, vector<8x10xf32> -> vector<8x10xf32>
    %c0_227 = arith.constant 0 : index
    %c0_228 = arith.constant 0 : index
    %572 = vector.load %arg39[%c0_227, %c0_228] : memref<1x10xf32, #tpu.memory_space<vmem>>, vector<1x10xf32>
    %573 = vector.broadcast %572 : vector<1x10xf32> to vector<8x10xf32>
    %574 = arith.addf %571, %573 : vector<8x10xf32>
    %c0_229 = arith.constant 0 : index
    %c0_230 = arith.constant 0 : index
    %575 = vector.load %arg42[%c0_229, %c0_230] : memref<8x10xf32, #tpu.memory_space<vmem>>, vector<8x10xf32>
    tpu.vector_store %arg42[%c0_229, %c0_230], %574 {strides = array<i32>} : memref<8x10xf32, #tpu.memory_space<vmem>>, vector<8x10xf32>,
    return
  }
}

</mosaic_0001>

<llo_original>
// kernel: tpu_custom_call.1
$region0: #{tpu_custom_call.1}
  #allocation0 [shape = 'u32[]', space=smem, size = 0x4, offset = 0x4, fixed_abs, tag = 'smem constant byte address 0x4 - core index']
  #allocation1 [shape = 'u32[144,128]{1,0:T(1,128)}', space=vmem, size = 0x12000, scoped, tag = 'internal scratch']
  #allocation2 [shape = 's32[1]{0:T(128)S(6)}', space=smem, size = 0x200, scoped, tag = 'scoped memory for tpu_custom_call.1']
  %s0 = inlined_call_operand.smem [shape: u32[43], index: -1, kind: input, shape index: {}]
  %s1 = sld [smem:[%s0]]
  %s2 = scalar_lea.smem %s0, 1
  %s3 = sld [smem:[%s2]]
  %s4 = scalar_lea.smem %s0, 2
  %s5 = sld [smem:[%s4]]
  %s6 = scalar_lea.smem %s0, 3
  %s7 = sld [smem:[%s6]]
  %s8 = scalar_lea.smem %s0, 4
  %s9 = sld [smem:[%s8]]
  %s10 = scalar_lea.smem %s0, 5
  %s11 = sld [smem:[%s10]]
  %s12 = scalar_lea.smem %s0, 6
  %s13 = sld [smem:[%s12]]
  %s14 = scalar_lea.smem %s0, 7
  %s15 = sld [smem:[%s14]]
  %s16 = scalar_lea.smem %s0, 8
  %s17 = sld [smem:[%s16]]
  %s18 = scalar_lea.smem %s0, 9
  %s19 = sld [smem:[%s18]]
  %s20 = scalar_lea.smem %s0, 10
  %s21 = sld [smem:[%s20]]
  %s22 = scalar_lea.smem %s0, 11
  %s23 = sld [smem:[%s22]]
  %s24 = scalar_lea.smem %s0, 12
  %s25 = sld [smem:[%s24]]
  %s26 = scalar_lea.smem %s0, 13
  %s27 = sld [smem:[%s26]]
  %s28 = scalar_lea.smem %s0, 14
  %s29 = sld [smem:[%s28]]
  %s30 = scalar_lea.smem %s0, 15
  %s31 = sld [smem:[%s30]]
  %s32 = scalar_lea.smem %s0, 16
  %s33 = sld [smem:[%s32]]
  %s34 = scalar_lea.smem %s0, 17
  %s35 = sld [smem:[%s34]]
  %s36 = scalar_lea.smem %s0, 18
  %s37 = sld [smem:[%s36]]
  %s38 = scalar_lea.smem %s0, 19
  %s39 = sld [smem:[%s38]]
  %s40 = scalar_lea.smem %s0, 20
  %s41 = sld [smem:[%s40]]
  %s42 = scalar_lea.smem %s0, 21
  %s43 = sld [smem:[%s42]]
  %s44 = scalar_lea.smem %s0, 22
  %s45 = sld [smem:[%s44]]
  %s46 = scalar_lea.smem %s0, 23
  %s47 = sld [smem:[%s46]]
  %s48 = scalar_lea.smem %s0, 24
  %s49 = sld [smem:[%s48]]
  %s50 = scalar_lea.smem %s0, 25
  %s51 = sld [smem:[%s50]]
  %s52 = scalar_lea.smem %s0, 26
  %s53 = sld [smem:[%s52]]
  %s54 = scalar_lea.smem %s0, 27
  %s55 = sld [smem:[%s54]]
  %s56 = scalar_lea.smem %s0, 28
  %s57 = sld [smem:[%s56]]
  %s58 = scalar_lea.smem %s0, 29
  %s59 = sld [smem:[%s58]]
  %s60 = scalar_lea.smem %s0, 30
  %s61 = sld [smem:[%s60]]
  %s62 = scalar_lea.smem %s0, 31
  %s63 = sld [smem:[%s62]]
  %s64 = scalar_lea.smem %s0, 32
  %s65 = sld [smem:[%s64]]
  %s66 = scalar_lea.smem %s0, 33
  %s67 = sld [smem:[%s66]]
  %s68 = scalar_lea.smem %s0, 34
  %s69 = sld [smem:[%s68]]
  %s70 = scalar_lea.smem %s0, 35
  %s71 = sld [smem:[%s70]]
  %s72 = scalar_lea.smem %s0, 36
  %s73 = sld [smem:[%s72]]
  %s74 = scalar_lea.smem %s0, 37
  %s75 = sld [smem:[%s74]]
  %s76 = scalar_lea.smem %s0, 38
  %s77 = sld [smem:[%s76]]
  %s78 = scalar_lea.smem %s0, 39
  %s79 = sld [smem:[%s78]]
  %s80 = scalar_lea.smem %s0, 40
  %s81 = sld [smem:[%s80]]
  %s82 = scalar_lea.smem %s0, 41
  %s83 = sld [smem:[%s82]]
  %s84 = scalar_lea.smem %s0, 42
  %s85 = sld [smem:[%s84]]
  %s86 = sld [smem:[#allocation0]]
  $region278: #{tpu_custom_call.1} parent=0
    _
  %s88 = ssub.s32 1, %s86
  %s89 = scalar_select 0, %s88, %s86
  %90 = sst [smem:[#allocation2]] %s1
  $region1: #{tpu_custom_call.1} parent=0
    #allocation3 [shape = 'u8[4096]{0}', space=vmem, size = 0x1000, scoped, tag = 'input window, operand 1, single buffered']
    #allocation4 [shape = 's32[1]{0}', space=sflag, size = 0x4, scoped, tag = 'scoped memory for tpu_custom_call.1']
    #allocation5 [shape = 's32[1]{0}', space=sflag, size = 0x4, scoped, tag = 'scoped memory for tpu_custom_call.1']
    #allocation6 [shape = 'u8[2048]{0}', space=vmem, size = 0x800, scoped, tag = 'input window, operand 3, single buffered']
    #allocation7 [shape = 's32[1]{0}', space=sflag, size = 0x4, scoped, tag = 'scoped memory for tpu_custom_call.1']
    #allocation8 [shape = 'u8[2048]{0}', space=vmem, size = 0x800, scoped, tag = 'input window, operand 4, single buffered']
    #allocation9 [shape = 'u8[2048]{0}', space=vmem, size = 0x800, scoped, tag = 'input window, operand 5, single buffered']
    #allocation10 [shape = 's32[1]{0}', space=sflag, size = 0x4, scoped, tag = 'scoped memory for tpu_custom_call.1']
    #allocation11 [shape = 'u8[524288]{0}', space=vmem, size = 0x80000, scoped, tag = 'input window, operand 6, single buffered']
    #allocation12 [shape = 'u8[2048]{0}', space=vmem, size = 0x800, scoped, tag = 'input window, operand 7, single buffered']
    #allocation13 [shape = 's32[1]{0}', space=sflag, size = 0x4, scoped, tag = 'scoped memory for tpu_custom_call.1']
    #allocation14 [shape = 'u8[2048]{0}', space=vmem, size = 0x800, scoped, tag = 'input window, operand 8, single buffered']
    #allocation15 [shape = 'u8[2048]{0}', space=vmem, size = 0x800, scoped, tag = 'input window, operand 9, single buffered']
    #allocation16 [shape = 's32[1]{0}', space=sflag, size = 0x4, scoped, tag = 'scoped memory for tpu_custom_call.1']
    #allocation17 [shape = 'u8[262144]{0}', space=vmem, size = 0x40000, scoped, tag = 'input window, operand 10, single buffered']
    #allocation18 [shape = 'u8[1024]{0}', space=vmem, size = 0x400, scoped, tag = 'input window, operand 11, single buffered']
    #allocation19 [shape = 's32[1]{0}', space=sflag, size = 0x4, scoped, tag = 'scoped memory for tpu_custom_call.1']
    #allocation20 [shape = 'u8[1024]{0}', space=vmem, size = 0x400, scoped, tag = 'input window, operand 12, single buffered']
    #allocation21 [shape = 'u8[1024]{0}', space=vmem, size = 0x400, scoped, tag = 'input window, operand 13, single buffered']
    #allocation22 [shape = 's32[1]{0}', space=sflag, size = 0x4, scoped, tag = 'scoped memory for tpu_custom_call.1']
    #allocation23 [shape = 'u8[131072]{0}', space=vmem, size = 0x20000, scoped, tag = 'input window, operand 14, single buffered']
    #allocation24 [shape = 'u8[1024]{0}', space=vmem, size = 0x400, scoped, tag = 'input window, operand 15, single buffered']
    #allocation25 [shape = 's32[1]{0}', space=sflag, size = 0x4, scoped, tag = 'scoped memory for tpu_custom_call.1']
    #allocation26 [shape = 'u8[1024]{0}', space=vmem, size = 0x400, scoped, tag = 'input window, operand 16, single buffered']
    #allocation27 [shape = 'u8[1024]{0}', space=vmem, size = 0x400, scoped, tag = 'input window, operand 17, single buffered']
    #allocation28 [shape = 's32[1]{0}', space=sflag, size = 0x4, scoped, tag = 'scoped memory for tpu_custom_call.1']
    #allocation29 [shape = 'u8[512]{0}', space=vmem, size = 0x400, scoped, tag = 'input window, operand 20, single buffered']
    #allocation30 [shape = 'u8[512]{0}', space=vmem, size = 0x400, scoped, tag = 'input window, operand 21, single buffered']
    #allocation31 [shape = 's32[1]{0}', space=sflag, size = 0x4, scoped, tag = 'scoped memory for tpu_custom_call.1']
    #allocation32 [shape = 'u8[32768]{0}', space=vmem, size = 0x8000, scoped, tag = 'input window, operand 22, single buffered']
    #allocation33 [shape = 'u8[512]{0}', space=vmem, size = 0x400, scoped, tag = 'input window, operand 23, single buffered']
    #allocation34 [shape = 's32[1]{0}', space=sflag, size = 0x4, scoped, tag = 'scoped memory for tpu_custom_call.1']
    #allocation35 [shape = 'u8[512]{0}', space=vmem, size = 0x400, scoped, tag = 'input window, operand 24, single buffered']
    #allocation36 [shape = 'u8[512]{0}', space=vmem, size = 0x400, scoped, tag = 'input window, operand 25, single buffered']
    #allocation37 [shape = 's32[1]{0}', space=sflag, size = 0x4, scoped, tag = 'scoped memory for tpu_custom_call.1']
    #allocation38 [shape = 'u8[512]{0}', space=vmem, size = 0x400, scoped, tag = 'input window, operand 27, single buffered']
    #allocation39 [shape = 'u8[512]{0}', space=vmem, size = 0x400, scoped, tag = 'input window, operand 28, single buffered']
    #allocation40 [shape = 's32[1]{0}', space=sflag, size = 0x4, scoped, tag = 'scoped memory for tpu_custom_call.1']
    #allocation41 [shape = 'u8[512]{0}', space=vmem, size = 0x400, scoped, tag = 'input window, operand 29, single buffered']
    #allocation42 [shape = 'u8[4096]{0}', space=vmem, size = 0x1000, scoped, tag = 'output window, operand 0, single buffered']
    %91 = vsyncpa [#allocation4], 0
    %92 = vsyncpa [#allocation7], 0
    %93 = vsyncpa [#allocation10], 0
    %94 = vsyncpa [#allocation13], 0
    %95 = vsyncpa [#allocation16], 0
    %96 = vsyncpa [#allocation19], 0
    %97 = vsyncpa [#allocation22], 0
    %98 = vsyncpa [#allocation25], 0
    %99 = vsyncpa [#allocation28], 0
    %100 = vsyncpa [#allocation31], 0
    %101 = vsyncpa [#allocation34], 0
    %102 = vsyncpa [#allocation37], 0
    %103 = vsyncpa [#allocation40], 0
    %104 = vsyncpa [#allocation5], 0
    // Predicated region
    $region2: #{tpu_custom_call.1} parent=1 // pred_check
      _
    $region3: #{tpu_custom_call.1} parent=1 // pred_check_branch
      %106 = sbr.rel (0) target = $region5
    $region4: #{tpu_custom_call.1} parent=1 // pred_region
      _
    $region5: #{tpu_custom_call.1} parent=1 // pred_fallthru
      _
    // Predicated region
    $region6: #{tpu_custom_call.1} parent=1 // pred_check
      _
    $region7: #{tpu_custom_call.1} parent=1 // pred_check_branch
      %108 = sbr.rel (0) target = $region9
    $region8: #{tpu_custom_call.1} parent=1 // pred_region
      %s110 = ssub.s32 128, 128
      %111 = vsyncadd [#allocation4], %s110
      %s113 = sshll.u32 [#allocation3], 4
      %s114 = int_to_ptr.vmem [resolvable:$true] %s113
      %116 = dma.hbm_to_vmem [thread:$0]  %s3, 128, %s114, [#allocation4]
    $region9: #{tpu_custom_call.1} parent=1 // pred_fallthru
      _
    // Predicated region
    $region10: #{tpu_custom_call.1} parent=1 // pred_check
      _
    $region11: #{tpu_custom_call.1} parent=1 // pred_check_branch
      %118 = sbr.rel (0) target = $region13
    $region12: #{tpu_custom_call.1} parent=1 // pred_region
      _
    $region13: #{tpu_custom_call.1} parent=1 // pred_fallthru
      _
    // Predicated region
    $region14: #{tpu_custom_call.1} parent=1 // pred_check
      _
    $region15: #{tpu_custom_call.1} parent=1 // pred_check_branch
      %120 = sbr.rel (0) target = $region17
    $region16: #{tpu_custom_call.1} parent=1 // pred_region
      %s122 = ssub.s32 64, 64
      %123 = vsyncadd [#allocation7], %s122
      %s125 = sshll.u32 [#allocation6], 4
      %s126 = int_to_ptr.vmem [resolvable:$true] %s125
      %128 = dma.hbm_to_vmem [thread:$0]  %s7, 64, %s126, [#allocation7]
    $region17: #{tpu_custom_call.1} parent=1 // pred_fallthru
      _
    // Predicated region
    $region18: #{tpu_custom_call.1} parent=1 // pred_check
      _
    $region19: #{tpu_custom_call.1} parent=1 // pred_check_branch
      %130 = sbr.rel (0) target = $region21
    $region20: #{tpu_custom_call.1} parent=1 // pred_region
      %s132 = ssub.s32 64, 64
      %133 = vsyncadd [#allocation7], %s132
      %s135 = sshll.u32 [#allocation8], 4
      %s136 = int_to_ptr.vmem [resolvable:$true] %s135
      %138 = dma.hbm_to_vmem [thread:$0]  %s9, 64, %s136, [#allocation7]
    $region21: #{tpu_custom_call.1} parent=1 // pred_fallthru
      _
    // Predicated region
    $region22: #{tpu_custom_call.1} parent=1 // pred_check
      _
    $region23: #{tpu_custom_call.1} parent=1 // pred_check_branch
      %140 = sbr.rel (0) target = $region25
    $region24: #{tpu_custom_call.1} parent=1 // pred_region
      %s142 = ssub.s32 64, 64
      %143 = vsyncadd [#allocation10], %s142
      %s145 = sshll.u32 [#allocation9], 4
      %s146 = int_to_ptr.vmem [resolvable:$true] %s145
      %148 = dma.hbm_to_vmem [thread:$0]  %s11, 64, %s146, [#allocation10]
    $region25: #{tpu_custom_call.1} parent=1 // pred_fallthru
      _
    // Predicated region
    $region26: #{tpu_custom_call.1} parent=1 // pred_check
      _
    $region27: #{tpu_custom_call.1} parent=1 // pred_check_branch
      %150 = sbr.rel (0) target = $region29
    $region28: #{tpu_custom_call.1} parent=1 // pred_region
      %s152 = ssub.s32 16384, 16384
      %153 = vsyncadd [#allocation10], %s152
      %s154 = sshll.u32 [#allocation11], 4
      %s155 = int_to_ptr.vmem [resolvable:$true] %s154
      %160 = dma.hbm_to_vmem [thread:$0]  %s13, 16384, %s155, [#allocation10], 256, 256, 16
    $region29: #{tpu_custom_call.1} parent=1 // pred_fallthru
      _
    // Predicated region
    $region30: #{tpu_custom_call.1} parent=1 // pred_check
      _
    $region31: #{tpu_custom_call.1} parent=1 // pred_check_branch
      %162 = sbr.rel (0) target = $region33
    $region32: #{tpu_custom_call.1} parent=1 // pred_region
      %s164 = ssub.s32 64, 64
      %165 = vsyncadd [#allocation13], %s164
      %s167 = sshll.u32 [#allocation12], 4
      %s168 = int_to_ptr.vmem [resolvable:$true] %s167
      %170 = dma.hbm_to_vmem [thread:$0]  %s15, 64, %s168, [#allocation13]
    $region33: #{tpu_custom_call.1} parent=1 // pred_fallthru
      _
    // Predicated region
    $region34: #{tpu_custom_call.1} parent=1 // pred_check
      _
    $region35: #{tpu_custom_call.1} parent=1 // pred_check_branch
      %172 = sbr.rel (0) target = $region37
    $region36: #{tpu_custom_call.1} parent=1 // pred_region
      %s174 = ssub.s32 64, 64
      %175 = vsyncadd [#allocation13], %s174
      %s177 = sshll.u32 [#allocation14], 4
      %s178 = int_to_ptr.vmem [resolvable:$true] %s177
      %180 = dma.hbm_to_vmem [thread:$0]  %s17, 64, %s178, [#allocation13]
    $region37: #{tpu_custom_call.1} parent=1 // pred_fallthru
      _
    // Predicated region
    $region38: #{tpu_custom_call.1} parent=1 // pred_check
      _
    $region39: #{tpu_custom_call.1} parent=1 // pred_check_branch
      %182 = sbr.rel (0) target = $region41
    $region40: #{tpu_custom_call.1} parent=1 // pred_region
      %s184 = ssub.s32 64, 64
      %185 = vsyncadd [#allocation16], %s184
      %s187 = sshll.u32 [#allocation15], 4
      %s188 = int_to_ptr.vmem [resolvable:$true] %s187
      %190 = dma.hbm_to_vmem [thread:$0]  %s19, 64, %s188, [#allocation16]
    $region41: #{tpu_custom_call.1} parent=1 // pred_fallthru
      _
    // Predicated region
    $region42: #{tpu_custom_call.1} parent=1 // pred_check
      _
    $region43: #{tpu_custom_call.1} parent=1 // pred_check_branch
      %192 = sbr.rel (0) target = $region45
    $region44: #{tpu_custom_call.1} parent=1 // pred_region
      %s194 = ssub.s32 8192, 8192
      %195 = vsyncadd [#allocation16], %s194
      %s196 = sshll.u32 [#allocation17], 4
      %s197 = int_to_ptr.vmem [resolvable:$true] %s196
      %202 = dma.hbm_to_vmem [thread:$0]  %s21, 8192, %s197, [#allocation16], 128, 128, 8
    $region45: #{tpu_custom_call.1} parent=1 // pred_fallthru
      _
    // Predicated region
    $region46: #{tpu_custom_call.1} parent=1 // pred_check
      _
    $region47: #{tpu_custom_call.1} parent=1 // pred_check_branch
      %204 = sbr.rel (0) target = $region49
    $region48: #{tpu_custom_call.1} parent=1 // pred_region
      %s206 = ssub.s32 32, 32
      %207 = vsyncadd [#allocation19], %s206
      %s209 = sshll.u32 [#allocation18], 4
      %s210 = int_to_ptr.vmem [resolvable:$true] %s209
      %212 = dma.hbm_to_vmem [thread:$0]  %s23, 32, %s210, [#allocation19]
    $region49: #{tpu_custom_call.1} parent=1 // pred_fallthru
      _
    // Predicated region
    $region50: #{tpu_custom_call.1} parent=1 // pred_check
      _
    $region51: #{tpu_custom_call.1} parent=1 // pred_check_branch
      %214 = sbr.rel (0) target = $region53
    $region52: #{tpu_custom_call.1} parent=1 // pred_region
      %s216 = ssub.s32 32, 32
      %217 = vsyncadd [#allocation19], %s216
      %s219 = sshll.u32 [#allocation20], 4
      %s220 = int_to_ptr.vmem [resolvable:$true] %s219
      %222 = dma.hbm_to_vmem [thread:$0]  %s25, 32, %s220, [#allocation19]
    $region53: #{tpu_custom_call.1} parent=1 // pred_fallthru
      _
    // Predicated region
    $region54: #{tpu_custom_call.1} parent=1 // pred_check
      _
    $region55: #{tpu_custom_call.1} parent=1 // pred_check_branch
      %224 = sbr.rel (0) target = $region57
    $region56: #{tpu_custom_call.1} parent=1 // pred_region
      %s226 = ssub.s32 32, 32
      %227 = vsyncadd [#allocation22], %s226
      %s229 = sshll.u32 [#allocation21], 4
      %s230 = int_to_ptr.vmem [resolvable:$true] %s229
      %232 = dma.hbm_to_vmem [thread:$0]  %s27, 32, %s230, [#allocation22]
    $region57: #{tpu_custom_call.1} parent=1 // pred_fallthru
      _
    // Predicated region
    $region58: #{tpu_custom_call.1} parent=1 // pred_check
      _
    $region59: #{tpu_custom_call.1} parent=1 // pred_check_branch
      %234 = sbr.rel (0) target = $region61
    $region60: #{tpu_custom_call.1} parent=1 // pred_region
      %s236 = ssub.s32 4096, 4096
      %237 = vsyncadd [#allocation22], %s236
      %s238 = sshll.u32 [#allocation23], 4
      %s239 = int_to_ptr.vmem [resolvable:$true] %s238
      %244 = dma.hbm_to_vmem [thread:$0]  %s29, 4096, %s239, [#allocation22], 128, 128, 8
    $region61: #{tpu_custom_call.1} parent=1 // pred_fallthru
      _
    // Predicated region
    $region62: #{tpu_custom_call.1} parent=1 // pred_check
      _
    $region63: #{tpu_custom_call.1} parent=1 // pred_check_branch
      %246 = sbr.rel (0) target = $region65
    $region64: #{tpu_custom_call.1} parent=1 // pred_region
      %s248 = ssub.s32 32, 32
      %249 = vsyncadd [#allocation25], %s248
      %s251 = sshll.u32 [#allocation24], 4
      %s252 = int_to_ptr.vmem [resolvable:$true] %s251
      %254 = dma.hbm_to_vmem [thread:$0]  %s31, 32, %s252, [#allocation25]
    $region65: #{tpu_custom_call.1} parent=1 // pred_fallthru
      _
    // Predicated region
    $region66: #{tpu_custom_call.1} parent=1 // pred_check
      _
    $region67: #{tpu_custom_call.1} parent=1 // pred_check_branch
      %256 = sbr.rel (0) target = $region69
    $region68: #{tpu_custom_call.1} parent=1 // pred_region
      %s258 = ssub.s32 32, 32
      %259 = vsyncadd [#allocation25], %s258
      %s261 = sshll.u32 [#allocation26], 4
      %s262 = int_to_ptr.vmem [resolvable:$true] %s261
      %264 = dma.hbm_to_vmem [thread:$0]  %s33, 32, %s262, [#allocation25]
    $region69: #{tpu_custom_call.1} parent=1 // pred_fallthru
      _
    // Predicated region
    $region70: #{tpu_custom_call.1} parent=1 // pred_check
      _
    $region71: #{tpu_custom_call.1} parent=1 // pred_check_branch
      %266 = sbr.rel (0) target = $region73
    $region72: #{tpu_custom_call.1} parent=1 // pred_region
      %s268 = ssub.s32 32, 32
      %269 = vsyncadd [#allocation28], %s268
      %s271 = sshll.u32 [#allocation27], 4
      %s272 = int_to_ptr.vmem [resolvable:$true] %s271
      %274 = dma.hbm_to_vmem [thread:$0]  %s35, 32, %s272, [#allocation28]
    $region73: #{tpu_custom_call.1} parent=1 // pred_fallthru
      _
    // Predicated region
    $region74: #{tpu_custom_call.1} parent=1 // pred_check
      _
    $region75: #{tpu_custom_call.1} parent=1 // pred_check_branch
      %276 = sbr.rel (0) target = $region77
    $region76: #{tpu_custom_call.1} parent=1 // pred_region
      _
    $region77: #{tpu_custom_call.1} parent=1 // pred_fallthru
      _
    // Predicated region
    $region78: #{tpu_custom_call.1} parent=1 // pred_check
      _
    $region79: #{tpu_custom_call.1} parent=1 // pred_check_branch
      %278 = sbr.rel (0) target = $region81
    $region80: #{tpu_custom_call.1} parent=1 // pred_region
      _
    $region81: #{tpu_custom_call.1} parent=1 // pred_fallthru
      _
    // Predicated region
    $region82: #{tpu_custom_call.1} parent=1 // pred_check
      _
    $region83: #{tpu_custom_call.1} parent=1 // pred_check_branch
      %280 = sbr.rel (0) target = $region85
    $region84: #{tpu_custom_call.1} parent=1 // pred_region
      %s282 = ssub.s32 16, 16
      %283 = vsyncadd [#allocation28], %s282
      %s285 = sshll.u32 [#allocation29], 4
      %s286 = int_to_ptr.vmem [resolvable:$true] %s285
      %288 = dma.hbm_to_vmem [thread:$0]  %s41, 16, %s286, [#allocation28]
    $region85: #{tpu_custom_call.1} parent=1 // pred_fallthru
      _
    // Predicated region
    $region86: #{tpu_custom_call.1} parent=1 // pred_check
      _
    $region87: #{tpu_custom_call.1} parent=1 // pred_check_branch
      %290 = sbr.rel (0) target = $region89
    $region88: #{tpu_custom_call.1} parent=1 // pred_region
      %s292 = ssub.s32 16, 16
      %293 = vsyncadd [#allocation31], %s292
      %s295 = sshll.u32 [#allocation30], 4
      %s296 = int_to_ptr.vmem [resolvable:$true] %s295
      %298 = dma.hbm_to_vmem [thread:$0]  %s43, 16, %s296, [#allocation31]
    $region89: #{tpu_custom_call.1} parent=1 // pred_fallthru
      _
    // Predicated region
    $region90: #{tpu_custom_call.1} parent=1 // pred_check
      _
    $region91: #{tpu_custom_call.1} parent=1 // pred_check_branch
      %300 = sbr.rel (0) target = $region93
    $region92: #{tpu_custom_call.1} parent=1 // pred_region
      %s302 = ssub.s32 1024, 1024
      %303 = vsyncadd [#allocation31], %s302
      %s304 = sshll.u32 [#allocation32], 4
      %s305 = int_to_ptr.vmem [resolvable:$true] %s304
      %310 = dma.hbm_to_vmem [thread:$0]  %s45, 1024, %s305, [#allocation31], 64, 64, 4
    $region93: #{tpu_custom_call.1} parent=1 // pred_fallthru
      _
    // Predicated region
    $region94: #{tpu_custom_call.1} parent=1 // pred_check
      _
    $region95: #{tpu_custom_call.1} parent=1 // pred_check_branch
      %312 = sbr.rel (0) target = $region97
    $region96: #{tpu_custom_call.1} parent=1 // pred_region
      %s314 = ssub.s32 16, 16
      %315 = vsyncadd [#allocation34], %s314
      %s317 = sshll.u32 [#allocation33], 4
      %s318 = int_to_ptr.vmem [resolvable:$true] %s317
      %320 = dma.hbm_to_vmem [thread:$0]  %s47, 16, %s318, [#allocation34]
    $region97: #{tpu_custom_call.1} parent=1 // pred_fallthru
      _
    // Predicated region
    $region98: #{tpu_custom_call.1} parent=1 // pred_check
      _
    $region99: #{tpu_custom_call.1} parent=1 // pred_check_branch
      %322 = sbr.rel (0) target = $region101
    $region100: #{tpu_custom_call.1} parent=1 // pred_region
      %s324 = ssub.s32 16, 16
      %325 = vsyncadd [#allocation34], %s324
      %s327 = sshll.u32 [#allocation35], 4
      %s328 = int_to_ptr.vmem [resolvable:$true] %s327
      %330 = dma.hbm_to_vmem [thread:$0]  %s49, 16, %s328, [#allocation34]
    $region101: #{tpu_custom_call.1} parent=1 // pred_fallthru
      _
    // Predicated region
    $region102: #{tpu_custom_call.1} parent=1 // pred_check
      _
    $region103: #{tpu_custom_call.1} parent=1 // pred_check_branch
      %332 = sbr.rel (0) target = $region105
    $region104: #{tpu_custom_call.1} parent=1 // pred_region
      %s334 = ssub.s32 16, 16
      %335 = vsyncadd [#allocation37], %s334
      %s337 = sshll.u32 [#allocation36], 4
      %s338 = int_to_ptr.vmem [resolvable:$true] %s337
      %340 = dma.hbm_to_vmem [thread:$0]  %s51, 16, %s338, [#allocation37]
    $region105: #{tpu_custom_call.1} parent=1 // pred_fallthru
      _
    // Predicated region
    $region106: #{tpu_custom_call.1} parent=1 // pred_check
      _
    $region107: #{tpu_custom_call.1} parent=1 // pred_check_branch
      %342 = sbr.rel (0) target = $region109
    $region108: #{tpu_custom_call.1} parent=1 // pred_region
      _
    $region109: #{tpu_custom_call.1} parent=1 // pred_fallthru
      _
    // Predicated region
    $region110: #{tpu_custom_call.1} parent=1 // pred_check
      _
    $region111: #{tpu_custom_call.1} parent=1 // pred_check_branch
      %344 = sbr.rel (0) target = $region113
    $region112: #{tpu_custom_call.1} parent=1 // pred_region
      %s346 = ssub.s32 16, 16
      %347 = vsyncadd [#allocation37], %s346
      %s349 = sshll.u32 [#allocation38], 4
      %s350 = int_to_ptr.vmem [resolvable:$true] %s349
      %352 = dma.hbm_to_vmem [thread:$0]  %s55, 16, %s350, [#allocation37]
    $region113: #{tpu_custom_call.1} parent=1 // pred_fallthru
      _
    // Predicated region
    $region114: #{tpu_custom_call.1} parent=1 // pred_check
      _
    $region115: #{tpu_custom_call.1} parent=1 // pred_check_branch
      %354 = sbr.rel (0) target = $region117
    $region116: #{tpu_custom_call.1} parent=1 // pred_region
      %s356 = ssub.s32 16, 16
      %357 = vsyncadd [#allocation40], %s356
      %s359 = sshll.u32 [#allocation39], 4
      %s360 = int_to_ptr.vmem [resolvable:$true] %s359
      %362 = dma.hbm_to_vmem [thread:$0]  %s57, 16, %s360, [#allocation40]
    $region117: #{tpu_custom_call.1} parent=1 // pred_fallthru
      _
    // Predicated region
    $region118: #{tpu_custom_call.1} parent=1 // pred_check
      _
    $region119: #{tpu_custom_call.1} parent=1 // pred_check_branch
      %364 = sbr.rel (0) target = $region121
    $region120: #{tpu_custom_call.1} parent=1 // pred_region
      %s366 = ssub.s32 16, 16
      %367 = vsyncadd [#allocation40], %s366
      %s369 = sshll.u32 [#allocation41], 4
      %s370 = int_to_ptr.vmem [resolvable:$true] %s369
      %372 = dma.hbm_to_vmem [thread:$0]  %s59, 16, %s370, [#allocation40]
    $region121: #{tpu_custom_call.1} parent=1 // pred_fallthru
      _
    // Predicated region
    $region122: #{tpu_custom_call.1} parent=1 // pred_check
      _
    $region123: #{tpu_custom_call.1} parent=1 // pred_check_branch
      %374 = sbr.rel (0) target = $region125
    $region124: #{tpu_custom_call.1} parent=1 // pred_region
      _
    $region125: #{tpu_custom_call.1} parent=1 // pred_fallthru
      _
    // Predicated region
    $region126: #{tpu_custom_call.1} parent=1 // pred_check
      _
    $region127: #{tpu_custom_call.1} parent=1 // pred_check_branch
      %376 = sbr.rel (0) target = $region129
    $region128: #{tpu_custom_call.1} parent=1 // pred_region
      _
    $region129: #{tpu_custom_call.1} parent=1 // pred_fallthru
      _
    // Predicated region
    $region130: #{tpu_custom_call.1} parent=1 // pred_check
      _
    $region131: #{tpu_custom_call.1} parent=1 // pred_check_branch
      %378 = sbr.rel (0) target = $region133
    $region132: #{tpu_custom_call.1} parent=1 // pred_region
      _
    $region133: #{tpu_custom_call.1} parent=1 // pred_fallthru
      _
    // Predicated region
    $region134: #{tpu_custom_call.1} parent=1 // pred_check
      _
    $region135: #{tpu_custom_call.1} parent=1 // pred_check_branch
      %380 = sbr.rel (0) target = $region137
    $region136: #{tpu_custom_call.1} parent=1 // pred_region
      _
    $region137: #{tpu_custom_call.1} parent=1 // pred_fallthru
      _
    // Predicated region
    $region138: #{tpu_custom_call.1} parent=1 // pred_check
      _
    $region139: #{tpu_custom_call.1} parent=1 // pred_check_branch
      %382 = sbr.rel (0) target = $region141
    $region140: #{tpu_custom_call.1} parent=1 // pred_region
      _
    $region141: #{tpu_custom_call.1} parent=1 // pred_fallthru
      _
    // Predicated region
    $region142: #{tpu_custom_call.1} parent=1 // pred_check
      _
    $region143: #{tpu_custom_call.1} parent=1 // pred_check_branch
      %384 = sbr.rel (0) target = $region145
    $region144: #{tpu_custom_call.1} parent=1 // pred_region
      _
    $region145: #{tpu_custom_call.1} parent=1 // pred_fallthru
      _
    // Predicated region
    $region146: #{tpu_custom_call.1} parent=1 // pred_check
      _
    $region147: #{tpu_custom_call.1} parent=1 // pred_check_branch
      %386 = sbr.rel (0) target = $region149
    $region148: #{tpu_custom_call.1} parent=1 // pred_region
      _
    $region149: #{tpu_custom_call.1} parent=1 // pred_fallthru
      _
    // Predicated region
    $region150: #{tpu_custom_call.1} parent=1 // pred_check
      _
    $region151: #{tpu_custom_call.1} parent=1 // pred_check_branch
      %388 = sbr.rel (0) target = $region153
    $region152: #{tpu_custom_call.1} parent=1 // pred_region
      _
    $region153: #{tpu_custom_call.1} parent=1 // pred_fallthru
      _
    // Predicated region
    $region154: #{tpu_custom_call.1} parent=1 // pred_check
      _
    $region155: #{tpu_custom_call.1} parent=1 // pred_check_branch
      %390 = sbr.rel (0) target = $region157
    $region156: #{tpu_custom_call.1} parent=1 // pred_region
      _
    $region157: #{tpu_custom_call.1} parent=1 // pred_fallthru
      _
    // Predicated region
    $region158: #{tpu_custom_call.1} parent=1 // pred_check
      _
    $region159: #{tpu_custom_call.1} parent=1 // pred_check_branch
      %392 = sbr.rel (0) target = $region161
    $region160: #{tpu_custom_call.1} parent=1 // pred_region
      _
    $region161: #{tpu_custom_call.1} parent=1 // pred_fallthru
      _
    // Predicated region
    $region162: #{tpu_custom_call.1} parent=1 // pred_check
      _
    $region163: #{tpu_custom_call.1} parent=1 // pred_check_branch
      %394 = sbr.rel (0) target = $region165
    $region164: #{tpu_custom_call.1} parent=1 // pred_region
      _
    $region165: #{tpu_custom_call.1} parent=1 // pred_fallthru
      _
    // Predicated region
    $region166: #{tpu_custom_call.1} parent=1 // pred_check
      _
    $region167: #{tpu_custom_call.1} parent=1 // pred_check_branch
      %396 = sbr.rel (0) target = $region169
    $region168: #{tpu_custom_call.1} parent=1 // pred_region
      _
    $region169: #{tpu_custom_call.1} parent=1 // pred_fallthru
      _
    // Predicated region
    $region170: #{tpu_custom_call.1} parent=1 // pred_check
      _
    $region171: #{tpu_custom_call.1} parent=1 // pred_check_branch
      %398 = sbr.rel (0) target = $region173
    $region172: #{tpu_custom_call.1} parent=1 // pred_region
      %399 = dma.done [#allocation4], 128
    $region173: #{tpu_custom_call.1} parent=1 // pred_fallthru
      _
    // Predicated region
    $region174: #{tpu_custom_call.1} parent=1 // pred_check
      _
    $region175: #{tpu_custom_call.1} parent=1 // pred_check_branch
      %401 = sbr.rel (0) target = $region177
    $region176: #{tpu_custom_call.1} parent=1 // pred_region
      %402 = dma.done [#allocation7], 64
    $region177: #{tpu_custom_call.1} parent=1 // pred_fallthru
      _
    // Predicated region
    $region178: #{tpu_custom_call.1} parent=1 // pred_check
      _
    $region179: #{tpu_custom_call.1} parent=1 // pred_check_branch
      %404 = sbr.rel (0) target = $region181
    $region180: #{tpu_custom_call.1} parent=1 // pred_region
      %405 = dma.done [#allocation7], 64
    $region181: #{tpu_custom_call.1} parent=1 // pred_fallthru
      _
    // Predicated region
    $region182: #{tpu_custom_call.1} parent=1 // pred_check
      _
    $region183: #{tpu_custom_call.1} parent=1 // pred_check_branch
      %407 = sbr.rel (0) target = $region185
    $region184: #{tpu_custom_call.1} parent=1 // pred_region
      %408 = dma.done [#allocation10], 64
    $region185: #{tpu_custom_call.1} parent=1 // pred_fallthru
      _
    // Predicated region
    $region186: #{tpu_custom_call.1} parent=1 // pred_check
      _
    $region187: #{tpu_custom_call.1} parent=1 // pred_check_branch
      %410 = sbr.rel (0) target = $region189
    $region188: #{tpu_custom_call.1} parent=1 // pred_region
      %411 = dma.done [#allocation10], 16384
    $region189: #{tpu_custom_call.1} parent=1 // pred_fallthru
      _
    // Predicated region
    $region190: #{tpu_custom_call.1} parent=1 // pred_check
      _
    $region191: #{tpu_custom_call.1} parent=1 // pred_check_branch
      %413 = sbr.rel (0) target = $region193
    $region192: #{tpu_custom_call.1} parent=1 // pred_region
      %414 = dma.done [#allocation13], 64
    $region193: #{tpu_custom_call.1} parent=1 // pred_fallthru
      _
    // Predicated region
    $region194: #{tpu_custom_call.1} parent=1 // pred_check
      _
    $region195: #{tpu_custom_call.1} parent=1 // pred_check_branch
      %416 = sbr.rel (0) target = $region197
    $region196: #{tpu_custom_call.1} parent=1 // pred_region
      %417 = dma.done [#allocation13], 64
    $region197: #{tpu_custom_call.1} parent=1 // pred_fallthru
      _
    // Predicated region
    $region198: #{tpu_custom_call.1} parent=1 // pred_check
      _
    $region199: #{tpu_custom_call.1} parent=1 // pred_check_branch
      %419 = sbr.rel (0) target = $region201
    $region200: #{tpu_custom_call.1} parent=1 // pred_region
      %420 = dma.done [#allocation16], 64
    $region201: #{tpu_custom_call.1} parent=1 // pred_fallthru
      _
    // Predicated region
    $region202: #{tpu_custom_call.1} parent=1 // pred_check
      _
    $region203: #{tpu_custom_call.1} parent=1 // pred_check_branch
      %422 = sbr.rel (0) target = $region205
    $region204: #{tpu_custom_call.1} parent=1 // pred_region
      %423 = dma.done [#allocation16], 8192
    $region205: #{tpu_custom_call.1} parent=1 // pred_fallthru
      _
    // Predicated region
    $region206: #{tpu_custom_call.1} parent=1 // pred_check
      _
    $region207: #{tpu_custom_call.1} parent=1 // pred_check_branch
      %425 = sbr.rel (0) target = $region209
    $region208: #{tpu_custom_call.1} parent=1 // pred_region
      %426 = dma.done [#allocation19], 32
    $region209: #{tpu_custom_call.1} parent=1 // pred_fallthru
      _
    // Predicated region
    $region210: #{tpu_custom_call.1} parent=1 // pred_check
      _
    $region211: #{tpu_custom_call.1} parent=1 // pred_check_branch
      %428 = sbr.rel (0) target = $region213
    $region212: #{tpu_custom_call.1} parent=1 // pred_region
      %429 = dma.done [#allocation19], 32
    $region213: #{tpu_custom_call.1} parent=1 // pred_fallthru
      _
    // Predicated region
    $region214: #{tpu_custom_call.1} parent=1 // pred_check
      _
    $region215: #{tpu_custom_call.1} parent=1 // pred_check_branch
      %431 = sbr.rel (0) target = $region217
    $region216: #{tpu_custom_call.1} parent=1 // pred_region
      %432 = dma.done [#allocation22], 32
    $region217: #{tpu_custom_call.1} parent=1 // pred_fallthru
      _
    // Predicated region
    $region218: #{tpu_custom_call.1} parent=1 // pred_check
      _
    $region219: #{tpu_custom_call.1} parent=1 // pred_check_branch
      %434 = sbr.rel (0) target = $region221
    $region220: #{tpu_custom_call.1} parent=1 // pred_region
      %435 = dma.done [#allocation22], 4096
    $region221: #{tpu_custom_call.1} parent=1 // pred_fallthru
      _
    // Predicated region
    $region222: #{tpu_custom_call.1} parent=1 // pred_check
      _
    $region223: #{tpu_custom_call.1} parent=1 // pred_check_branch
      %437 = sbr.rel (0) target = $region225
    $region224: #{tpu_custom_call.1} parent=1 // pred_region
      %438 = dma.done [#allocation25], 32
    $region225: #{tpu_custom_call.1} parent=1 // pred_fallthru
      _
    // Predicated region
    $region226: #{tpu_custom_call.1} parent=1 // pred_check
      _
    $region227: #{tpu_custom_call.1} parent=1 // pred_check_branch
      %440 = sbr.rel (0) target = $region229
    $region228: #{tpu_custom_call.1} parent=1 // pred_region
      %441 = dma.done [#allocation25], 32
    $region229: #{tpu_custom_call.1} parent=1 // pred_fallthru
      _
    // Predicated region
    $region230: #{tpu_custom_call.1} parent=1 // pred_check
      _
    $region231: #{tpu_custom_call.1} parent=1 // pred_check_branch
      %443 = sbr.rel (0) target = $region233
    $region232: #{tpu_custom_call.1} parent=1 // pred_region
      %444 = dma.done [#allocation28], 32
    $region233: #{tpu_custom_call.1} parent=1 // pred_fallthru
      _
    // Predicated region
    $region234: #{tpu_custom_call.1} parent=1 // pred_check
      _
    $region235: #{tpu_custom_call.1} parent=1 // pred_check_branch
      %446 = sbr.rel (0) target = $region237
    $region236: #{tpu_custom_call.1} parent=1 // pred_region
      %447 = dma.done [#allocation28], 16
    $region237: #{tpu_custom_call.1} parent=1 // pred_fallthru
      _
    // Predicated region
    $region238: #{tpu_custom_call.1} parent=1 // pred_check
      _
    $region239: #{tpu_custom_call.1} parent=1 // pred_check_branch
      %449 = sbr.rel (0) target = $region241
    $region240: #{tpu_custom_call.1} parent=1 // pred_region
      %450 = dma.done [#allocation31], 16
    $region241: #{tpu_custom_call.1} parent=1 // pred_fallthru
      _
    // Predicated region
    $region242: #{tpu_custom_call.1} parent=1 // pred_check
      _
    $region243: #{tpu_custom_call.1} parent=1 // pred_check_branch
      %452 = sbr.rel (0) target = $region245
    $region244: #{tpu_custom_call.1} parent=1 // pred_region
      %453 = dma.done [#allocation31], 1024
    $region245: #{tpu_custom_call.1} parent=1 // pred_fallthru
      _
    // Predicated region
    $region246: #{tpu_custom_call.1} parent=1 // pred_check
      _
    $region247: #{tpu_custom_call.1} parent=1 // pred_check_branch
      %455 = sbr.rel (0) target = $region249
    $region248: #{tpu_custom_call.1} parent=1 // pred_region
      %456 = dma.done [#allocation34], 16
    $region249: #{tpu_custom_call.1} parent=1 // pred_fallthru
      _
    // Predicated region
    $region250: #{tpu_custom_call.1} parent=1 // pred_check
      _
    $region251: #{tpu_custom_call.1} parent=1 // pred_check_branch
      %458 = sbr.rel (0) target = $region253
    $region252: #{tpu_custom_call.1} parent=1 // pred_region
      %459 = dma.done [#allocation34], 16
    $region253: #{tpu_custom_call.1} parent=1 // pred_fallthru
      _
    // Predicated region
    $region254: #{tpu_custom_call.1} parent=1 // pred_check
      _
    $region255: #{tpu_custom_call.1} parent=1 // pred_check_branch
      %461 = sbr.rel (0) target = $region257
    $region256: #{tpu_custom_call.1} parent=1 // pred_region
      %462 = dma.done [#allocation37], 16
    $region257: #{tpu_custom_call.1} parent=1 // pred_fallthru
      _
    // Predicated region
    $region258: #{tpu_custom_call.1} parent=1 // pred_check
      _
    $region259: #{tpu_custom_call.1} parent=1 // pred_check_branch
      %464 = sbr.rel (0) target = $region261
    $region260: #{tpu_custom_call.1} parent=1 // pred_region
      %465 = dma.done [#allocation37], 16
    $region261: #{tpu_custom_call.1} parent=1 // pred_fallthru
      _
    // Predicated region
    $region262: #{tpu_custom_call.1} parent=1 // pred_check
      _
    $region263: #{tpu_custom_call.1} parent=1 // pred_check_branch
      %467 = sbr.rel (0) target = $region265
    $region264: #{tpu_custom_call.1} parent=1 // pred_region
      %468 = dma.done [#allocation40], 16
    $region265: #{tpu_custom_call.1} parent=1 // pred_fallthru
      _
    // Predicated region
    $region266: #{tpu_custom_call.1} parent=1 // pred_check
      _
    $region267: #{tpu_custom_call.1} parent=1 // pred_check_branch
      %470 = sbr.rel (0) target = $region269
    $region268: #{tpu_custom_call.1} parent=1 // pred_region
      %471 = dma.done [#allocation40], 16
    $region269: #{tpu_custom_call.1} parent=1 // pred_fallthru
      _
    %s473 = sld [smem:[#allocation2]]
    %v474 = vld [vmem:[#allocation3] sm:$0xff]
    %v475 = vpack.c.bf16 %v474, %v474
    %v476 = vld [vmem:[%s5] sm:$0xff]
    %v477 = vld [vmem:[%s5 + $0x8] sm:$0xff]
    %v478 = vld [vmem:[%s5 + $0x10] sm:$0xff]
    %v479 = vld [vmem:[%s5 + $0x18] sm:$0xff]
    %v480 = vld [vmem:[%s5 + $0x20] sm:$0xff]
    %v481 = vld [vmem:[%s5 + $0x28] sm:$0xff]
    %v482 = vld [vmem:[%s5 + $0x30] sm:$0xff]
    %v483 = vld [vmem:[%s5 + $0x38] sm:$0xff]
    %v484 = vld [vmem:[#allocation6] sm:$0xf]
    %v486 = vlaneseq
    %v487 = vshrl.u32 %v486, 7
    %v488 = vsub.s32 0, %v487
    %v489 = vrot.slane %v484, %v488
    %v490 = vlaneseq
    %v491 = vshrl.u32 %v490, 7
    %v492 = vsub.s32 1, %v491
    %v493 = vrot.slane %v484, %v492
    %v494 = vlaneseq
    %v495 = vshrl.u32 %v494, 7
    %v496 = vsub.s32 2, %v495
    %v497 = vrot.slane %v484, %v496
    %v498 = vlaneseq
    %v499 = vshrl.u32 %v498, 7
    %v500 = vsub.s32 3, %v499
    %v501 = vrot.slane %v484, %v500
    %v514 = vunpack.c.l.b16 %v476
    %v515 = vunpack.c.h.b16 %v476
    %v516 = vunpack.c.l.b16 %v477
    %v517 = vunpack.c.h.b16 %v477
    %v518 = vunpack.c.l.b16 %v478
    %v519 = vunpack.c.h.b16 %v478
    %v520 = vunpack.c.l.b16 %v479
    %v521 = vunpack.c.h.b16 %v479
    %v522 = vunpack.c.l.b16 %v480
    %v523 = vunpack.c.h.b16 %v480
    %v524 = vunpack.c.l.b16 %v481
    %v525 = vunpack.c.h.b16 %v481
    %v526 = vunpack.c.l.b16 %v482
    %v527 = vunpack.c.h.b16 %v482
    %v528 = vunpack.c.l.b16 %v483
    %v529 = vunpack.c.h.b16 %v483
    %v530 = vpack.c.b16 %v518, %v514
    %v531 = vpack.c.b16 %v519, %v515
    %v532 = vpack.c.b16 %v520, %v516
    %v533 = vpack.c.b16 %v521, %v517
    %v534 = vpack.c.b16 %v526, %v522
    %v535 = vpack.c.b16 %v527, %v523
    %v536 = vpack.c.b16 %v528, %v524
    %v537 = vpack.c.b16 %v529, %v525
    %vm546 = vcmask 261120
    %v548 = vsel %vm546, %v475, 0
    %550 = vmatprep.subr.bf16.mxu0 %v531
    %551 = vmatpush1.bf16.msra.mxu0 %v530
    %552 = vmatprep.subr.bf16.mxu0 %v535
    %553 = vmatpush1.bf16.msra.mxu0 %v534
    %554 = vmatprep.subr.bf16.mxu0 0
    %555 = vmatpush1.bf16.msra.mxu0 0
    %556 = vmatprep.subr.bf16.mxu0 0
    %557 = vmatpush1.bf16.msra.mxu0 0
    %558 = vmatprep.subr.bf16.mxu0 0
    %559 = vmatpush1.bf16.msra.mxu0 0
    %560 = vmatprep.subr.bf16.mxu0 0
    %561 = vmatpush1.bf16.msra.mxu0 0
    %562 = vmatprep.subr.bf16.mxu0 0
    %563 = vmatpush1.bf16.msra.mxu0 0
    %564 = vmatprep.subr.bf16.mxu0 0
    %565 = vmatpush1.bf16.msra.mxu0 0
    %566 = vmatprep.subr.bf16.mxu0 0
    %567 = vmatpush1.bf16.msra.mxu0 0
    %568 = vmatprep.subr.bf16.mxu0 0
    %569 = vmatpush1.bf16.msra.mxu0 0
    %570 = vmatprep.subr.bf16.mxu0 0
    %571 = vmatpush1.bf16.msra.mxu0 0
    %572 = vmatprep.subr.bf16.mxu0 0
    %573 = vmatpush1.bf16.msra.mxu0 0
    %574 = vmatprep.subr.bf16.mxu0 0
    %575 = vmatpush1.bf16.msra.mxu0 0
    %576 = vmatprep.subr.bf16.mxu0 0
    %577 = vmatpush1.bf16.msra.mxu0 0
    %578 = vmatprep.subr.bf16.mxu0 0
    %579 = vmatpush1.bf16.msra.mxu0 0
    %580 = vmatprep.subr.bf16.mxu0 0
    %581 = vmatpush1.bf16.msra.mxu0 0
    %582 = vmatprep.mubr.bf16.mxu0 0
    %583 = vmatmul.mubr.bf16.gmra.mrb[0].mxu0 %v548
    %v584 = vpop.f32.mrb[0].mxu0
    %v585 = vadd.f32 %v489, %v584
    %v586 = vpop.f32.mrb[0].mxu0
    %v587 = vadd.f32 %v493, %v586
    %v588 = vpop.f32.mrb[0].mxu0
    %v589 = vpop.f32.mrb[0].mxu0
    %590 = vdwg.mxu0
    %591 = vmatprep.subr.bf16.mxu0 %v533
    %592 = vmatpush1.bf16.msra.mxu0 %v532
    %593 = vmatprep.subr.bf16.mxu0 %v537
    %594 = vmatpush1.bf16.msra.mxu0 %v536
    %595 = vmatprep.subr.bf16.mxu0 0
    %596 = vmatpush1.bf16.msra.mxu0 0
    %597 = vmatprep.subr.bf16.mxu0 0
    %598 = vmatpush1.bf16.msra.mxu0 0
    %599 = vmatprep.subr.bf16.mxu0 0
    %600 = vmatpush1.bf16.msra.mxu0 0
    %601 = vmatprep.subr.bf16.mxu0 0
    %602 = vmatpush1.bf16.msra.mxu0 0
    %603 = vmatprep.subr.bf16.mxu0 0
    %604 = vmatpush1.bf16.msra.mxu0 0
    %605 = vmatprep.subr.bf16.mxu0 0
    %606 = vmatpush1.bf16.msra.mxu0 0
    %607 = vmatprep.subr.bf16.mxu0 0
    %608 = vmatpush1.bf16.msra.mxu0 0
    %609 = vmatprep.subr.bf16.mxu0 0
    %610 = vmatpush1.bf16.msra.mxu0 0
    %611 = vmatprep.subr.bf16.mxu0 0
    %612 = vmatpush1.bf16.msra.mxu0 0
    %613 = vmatprep.subr.bf16.mxu0 0
    %614 = vmatpush1.bf16.msra.mxu0 0
    %615 = vmatprep.subr.bf16.mxu0 0
    %616 = vmatpush1.bf16.msra.mxu0 0
    %617 = vmatprep.subr.bf16.mxu0 0
    %618 = vmatpush1.bf16.msra.mxu0 0
    %619 = vmatprep.subr.bf16.mxu0 0
    %620 = vmatpush1.bf16.msra.mxu0 0
    %621 = vmatprep.subr.bf16.mxu0 0
    %622 = vmatpush1.bf16.msra.mxu0 0
    %623 = vmatprep.mubr.bf16.mxu0 0
    %624 = vmatmul.mubr.bf16.gmra.mrb[0].mxu0 %v548
    %v625 = vpop.f32.mrb[0].mxu0
    %v626 = vadd.f32 %v497, %v625
    %v627 = vpop.f32.mrb[0].mxu0
    %v628 = vadd.f32 %v501, %v627
    %v629 = vpop.f32.mrb[0].mxu0
    %v630 = vpop.f32.mrb[0].mxu0
    %631 = vdwg.mxu0
    %v632 = vrot.slane %v585, 4
    %v633 = vadd.f32 %v585, %v632
    %v634 = vrot.slane %v633, 2
    %v635 = vadd.f32 %v633, %v634
    %v636 = vrot.slane %v635, 1
    %v637 = vadd.f32 %v635, %v636
    %v638 = vrot.slane %v587, 4
    %v639 = vadd.f32 %v587, %v638
    %v640 = vrot.slane %v639, 2
    %v641 = vadd.f32 %v639, %v640
    %v642 = vrot.slane %v641, 1
    %v643 = vadd.f32 %v641, %v642
    %v644 = vrot.slane %v626, 4
    %v645 = vadd.f32 %v626, %v644
    %v646 = vrot.slane %v645, 2
    %v647 = vadd.f32 %v645, %v646
    %v648 = vrot.slane %v647, 1
    %v649 = vadd.f32 %v647, %v648
    %v650 = vrot.slane %v628, 4
    %v651 = vadd.f32 %v628, %v650
    %v652 = vrot.slane %v651, 2
    %v653 = vadd.f32 %v651, %v652
    %v654 = vrot.slane %v653, 1
    %v655 = vadd.f32 %v653, %v654
    %v656 = vrcp.pop 8.0
    %v657 = vmul.f32 %v637, %v656
    %v658 = vmul.f32 %v643, %v656
    %v659 = vmul.f32 %v649, %v656
    %v660 = vmul.f32 %v655, %v656
    %v661 = vsub.f32 %v585, %v657
    %v662 = vsub.f32 %v587, %v658
    %v663 = vsub.f32 %v626, %v659
    %v664 = vsub.f32 %v628, %v660
    %v665 = vmul.f32 %v661, %v661
    %v666 = vmul.f32 %v662, %v662
    %v667 = vmul.f32 %v663, %v663
    %v668 = vmul.f32 %v664, %v664
    %v669 = vrot.slane %v665, 4
    %v670 = vadd.f32 %v665, %v669
    %v671 = vrot.slane %v670, 2
    %v672 = vadd.f32 %v670, %v671
    %v673 = vrot.slane %v672, 1
    %v674 = vadd.f32 %v672, %v673
    %v675 = vrot.slane %v666, 4
    %v676 = vadd.f32 %v666, %v675
    %v677 = vrot.slane %v676, 2
    %v678 = vadd.f32 %v676, %v677
    %v679 = vrot.slane %v678, 1
    %v680 = vadd.f32 %v678, %v679
    %v681 = vrot.slane %v667, 4
    %v682 = vadd.f32 %v667, %v681
    %v683 = vrot.slane %v682, 2
    %v684 = vadd.f32 %v682, %v683
    %v685 = vrot.slane %v684, 1
    %v686 = vadd.f32 %v684, %v685
    %v687 = vrot.slane %v668, 4
    %v688 = vadd.f32 %v668, %v687
    %v689 = vrot.slane %v688, 2
    %v690 = vadd.f32 %v688, %v689
    %v691 = vrot.slane %v690, 1
    %v692 = vadd.f32 %v690, %v691
    %v693 = vmul.f32 %v674, %v656
    %v694 = vmul.f32 %v680, %v656
    %v695 = vmul.f32 %v686, %v656
    %v696 = vmul.f32 %v692, %v656
    %v697 = vadd.f32 %v693, 1e-05
    %v698 = vadd.f32 %v694, 1e-05
    %v699 = vadd.f32 %v695, 1e-05
    %v700 = vadd.f32 %v696, 1e-05
    %v701 = vrsqrt.pop %v697
    %v702 = vrsqrt.pop %v698
    %v703 = vrsqrt.pop %v699
    %v704 = vrsqrt.pop %v700
    %v705 = vmul.f32 %v661, %v701
    %v706 = vmul.f32 %v662, %v702
    %v707 = vmul.f32 %v663, %v703
    %v708 = vmul.f32 %v664, %v704
    %v709 = vld [vmem:[#allocation8] sm:$0xf]
    %v711 = vlaneseq
    %v712 = vshrl.u32 %v711, 7
    %v713 = vsub.s32 0, %v712
    %v714 = vrot.slane %v709, %v713
    %v715 = vlaneseq
    %v716 = vshrl.u32 %v715, 7
    %v717 = vsub.s32 1, %v716
    %v718 = vrot.slane %v709, %v717
    %v719 = vlaneseq
    %v720 = vshrl.u32 %v719, 7
    %v721 = vsub.s32 2, %v720
    %v722 = vrot.slane %v709, %v721
    %v723 = vlaneseq
    %v724 = vshrl.u32 %v723, 7
    %v725 = vsub.s32 3, %v724
    %v726 = vrot.slane %v709, %v725
    %v731 = vmul.f32 %v705, %v714
    %v732 = vmul.f32 %v706, %v718
    %v733 = vmul.f32 %v707, %v722
    %v734 = vmul.f32 %v708, %v726
    %v735 = vld [vmem:[#allocation9] sm:$0xf]
    %v737 = vlaneseq
    %v738 = vshrl.u32 %v737, 7
    %v739 = vsub.s32 0, %v738
    %v740 = vrot.slane %v735, %v739
    %v741 = vlaneseq
    %v742 = vshrl.u32 %v741, 7
    %v743 = vsub.s32 1, %v742
    %v744 = vrot.slane %v735, %v743
    %v745 = vlaneseq
    %v746 = vshrl.u32 %v745, 7
    %v747 = vsub.s32 2, %v746
    %v748 = vrot.slane %v735, %v747
    %v749 = vlaneseq
    %v750 = vshrl.u32 %v749, 7
    %v751 = vsub.s32 3, %v750
    %v752 = vrot.slane %v735, %v751
    %v757 = vadd.f32 %v731, %v740
    %v758 = vadd.f32 %v732, %v744
    %v759 = vadd.f32 %v733, %v748
    %v760 = vadd.f32 %v734, %v752
    %vm761 = vcmp.gt.f32.partialorder %v757, 0.0
    %vm762 = vcmp.gt.f32.partialorder %v758, 0.0
    %vm763 = vcmp.gt.f32.partialorder %v759, 0.0
    %vm764 = vcmp.gt.f32.partialorder %v760, 0.0
    %v765 = vmul.f32 %v757, 0.01
    %v766 = vmul.f32 %v758, 0.01
    %v767 = vmul.f32 %v759, 0.01
    %v768 = vmul.f32 %v760, 0.01
    %v769 = vsel %vm761, %v757, %v765
    %v770 = vsel %vm762, %v758, %v766
    %v771 = vsel %vm763, %v759, %v767
    %v772 = vsel %vm764, %v760, %v768
    %v773 = vlaneseq
    %v774 = vshrl.u32 %v773, 7
    %v775 = vlaneseq
    %v776 = vand.u32 %v775, 127
    %v777 = vadd.s32 %v776, 128
    %v778 = vadd.s32 %v776, 256
    %v779 = vadd.s32 %v776, 384
    %v780 = vmul.u32 %v774, 512
    %v781 = vadd.s32 %v780, %v776
    %v782 = vadd.s32 %v780, %v777
    %v783 = vadd.s32 %v780, %v778
    %v784 = vadd.s32 %v780, %v779
    %v785 = vstv %s473
    %v786 = vxor.u32 %v781, %v785
    %v787 = vxor.u32 %v782, %v785
    %v788 = vxor.u32 %v783, %v785
    %v789 = vxor.u32 %v784, %v785
    %v790 = vshrl.u32 %v786, 16
    %v791 = vshrl.u32 %v787, 16
    %v792 = vshrl.u32 %v788, 16
    %v793 = vshrl.u32 %v789, 16
    %v794 = vxor.u32 %v786, %v790
    %v795 = vxor.u32 %v787, %v791
    %v796 = vxor.u32 %v788, %v792
    %v797 = vxor.u32 %v789, %v793
    %v798 = vmul.u32 %v794, 2146121005
    %v799 = vmul.u32 %v795, 2146121005
    %v800 = vmul.u32 %v796, 2146121005
    %v801 = vmul.u32 %v797, 2146121005
    %v802 = vshrl.u32 %v798, 15
    %v803 = vshrl.u32 %v799, 15
    %v804 = vshrl.u32 %v800, 15
    %v805 = vshrl.u32 %v801, 15
    %v806 = vxor.u32 %v798, %v802
    %v807 = vxor.u32 %v799, %v803
    %v808 = vxor.u32 %v800, %v804
    %v809 = vxor.u32 %v801, %v805
    %v810 = vmul.u32 %v806, 2221713035
    %v811 = vmul.u32 %v807, 2221713035
    %v812 = vmul.u32 %v808, 2221713035
    %v813 = vmul.u32 %v809, 2221713035
    %v814 = vshrl.u32 %v810, 16
    %v815 = vshrl.u32 %v811, 16
    %v816 = vshrl.u32 %v812, 16
    %v817 = vshrl.u32 %v813, 16
    %v818 = vxor.u32 %v810, %v814
    %v819 = vxor.u32 %v811, %v815
    %v820 = vxor.u32 %v812, %v816
    %v821 = vxor.u32 %v813, %v817
    %vm822 = vcmp.ge.u32.totalorder %v818, 1073741824
    %vm823 = vcmp.ge.u32.totalorder %v819, 1073741824
    %vm824 = vcmp.ge.u32.totalorder %v820, 1073741824
    %vm825 = vcmp.ge.u32.totalorder %v821, 1073741824
    %v826 = vmul.f32 %v769, 1.3333334
    %v827 = vmul.f32 %v770, 1.3333334
    %v828 = vmul.f32 %v771, 1.3333334
    %v829 = vmul.f32 %v772, 1.3333334
    %v830 = vsel %vm822, %v826, 0.0
    %v831 = vsel %vm823, %v827, 0.0
    %v832 = vsel %vm824, %v828, 0.0
    %v833 = vsel %vm825, %v829, 0.0
    %v834 = vpack.c.bf16 %v830, %v830
    %v835 = vpack.c.bf16 %v831, %v831
    %v836 = vpack.c.bf16 %v832, %v832
    %v837 = vpack.c.bf16 %v833, %v833
    %v838 = vld [vmem:[#allocation11] sm:$0xff]
    %v839 = vld [vmem:[#allocation11 + $0x8] sm:$0xff]
    %v840 = vld [vmem:[#allocation11 + $0x10] sm:$0xff]
    %v841 = vld [vmem:[#allocation11 + $0x18] sm:$0xff]
    %v842 = vld [vmem:[#allocation11 + $0x20] sm:$0xff]
    %v843 = vld [vmem:[#allocation11 + $0x28] sm:$0xff]
    %v844 = vld [vmem:[#allocation11 + $0x30] sm:$0xff]
    %v845 = vld [vmem:[#allocation11 + $0x38] sm:$0xff]
    %v846 = vld [vmem:[#allocation11 + $0x40] sm:$0xff]
    %v847 = vld [vmem:[#allocation11 + $0x48] sm:$0xff]
    %v848 = vld [vmem:[#allocation11 + $0x50] sm:$0xff]
    %v849 = vld [vmem:[#allocation11 + $0x58] sm:$0xff]
    %v850 = vld [vmem:[#allocation11 + $0x60] sm:$0xff]
    %v851 = vld [vmem:[#allocation11 + $0x68] sm:$0xff]
    %v852 = vld [vmem:[#allocation11 + $0x70] sm:$0xff]
    %v853 = vld [vmem:[#allocation11 + $0x78] sm:$0xff]
    %v854 = vld [vmem:[#allocation11 + $0x80] sm:$0xff]
    %v855 = vld [vmem:[#allocation11 + $0x88] sm:$0xff]
    %v856 = vld [vmem:[#allocation11 + $0x90] sm:$0xff]
    %v857 = vld [vmem:[#allocation11 + $0x98] sm:$0xff]
    %v858 = vld [vmem:[#allocation11 + $0xa0] sm:$0xff]
    %v859 = vld [vmem:[#allocation11 + $0xa8] sm:$0xff]
    %v860 = vld [vmem:[#allocation11 + $0xb0] sm:$0xff]
    %v861 = vld [vmem:[#allocation11 + $0xb8] sm:$0xff]
    %v862 = vld [vmem:[#allocation11 + $0xc0] sm:$0xff]
    %v863 = vld [vmem:[#allocation11 + $0xc8] sm:$0xff]
    %v864 = vld [vmem:[#allocation11 + $0xd0] sm:$0xff]
    %v865 = vld [vmem:[#allocation11 + $0xd8] sm:$0xff]
    %v866 = vld [vmem:[#allocation11 + $0xe0] sm:$0xff]
    %v867 = vld [vmem:[#allocation11 + $0xe8] sm:$0xff]
    %v868 = vld [vmem:[#allocation11 + $0xf0] sm:$0xff]
    %v869 = vld [vmem:[#allocation11 + $0xf8] sm:$0xff]
    %v870 = vld [vmem:[#allocation11 + $0x100] sm:$0xff]
    %v871 = vld [vmem:[#allocation11 + $0x108] sm:$0xff]
    %v872 = vld [vmem:[#allocation11 + $0x110] sm:$0xff]
    %v873 = vld [vmem:[#allocation11 + $0x118] sm:$0xff]
    %v874 = vld [vmem:[#allocation11 + $0x120] sm:$0xff]
    %v875 = vld [vmem:[#allocation11 + $0x128] sm:$0xff]
    %v876 = vld [vmem:[#allocation11 + $0x130] sm:$0xff]
    %v877 = vld [vmem:[#allocation11 + $0x138] sm:$0xff]
    %v878 = vld [vmem:[#allocation11 + $0x140] sm:$0xff]
    %v879 = vld [vmem:[#allocation11 + $0x148] sm:$0xff]
    %v880 = vld [vmem:[#allocation11 + $0x150] sm:$0xff]
    %v881 = vld [vmem:[#allocation11 + $0x158] sm:$0xff]
    %v882 = vld [vmem:[#allocation11 + $0x160] sm:$0xff]
    %v883 = vld [vmem:[#allocation11 + $0x168] sm:$0xff]
    %v884 = vld [vmem:[#allocation11 + $0x170] sm:$0xff]
    %v885 = vld [vmem:[#allocation11 + $0x178] sm:$0xff]
    %v886 = vld [vmem:[#allocation11 + $0x180] sm:$0xff]
    %v887 = vld [vmem:[#allocation11 + $0x188] sm:$0xff]
    %v888 = vld [vmem:[#allocation11 + $0x190] sm:$0xff]
    %v889 = vld [vmem:[#allocation11 + $0x198] sm:$0xff]
    %v890 = vld [vmem:[#allocation11 + $0x1a0] sm:$0xff]
    %v891 = vld [vmem:[#allocation11 + $0x1a8] sm:$0xff]
    %v892 = vld [vmem:[#allocation11 + $0x1b0] sm:$0xff]
    %v893 = vld [vmem:[#allocation11 + $0x1b8] sm:$0xff]
    %v894 = vld [vmem:[#allocation11 + $0x1c0] sm:$0xff]
    %v895 = vld [vmem:[#allocation11 + $0x1c8] sm:$0xff]
    %v896 = vld [vmem:[#allocation11 + $0x1d0] sm:$0xff]
    %v897 = vld [vmem:[#allocation11 + $0x1d8] sm:$0xff]
    %v898 = vld [vmem:[#allocation11 + $0x1e0] sm:$0xff]
    %v899 = vld [vmem:[#allocation11 + $0x1e8] sm:$0xff]
    %v900 = vld [vmem:[#allocation11 + $0x1f0] sm:$0xff]
    %v901 = vld [vmem:[#allocation11 + $0x1f8] sm:$0xff]
    %v902 = vld [vmem:[#allocation11 + $0x200] sm:$0xff]
    %v903 = vld [vmem:[#allocation11 + $0x208] sm:$0xff]
    %v904 = vld [vmem:[#allocation11 + $0x210] sm:$0xff]
    %v905 = vld [vmem:[#allocation11 + $0x218] sm:$0xff]
    %v906 = vld [vmem:[#allocation11 + $0x220] sm:$0xff]
    %v907 = vld [vmem:[#allocation11 + $0x228] sm:$0xff]
    %v908 = vld [vmem:[#allocation11 + $0x230] sm:$0xff]
    %v909 = vld [vmem:[#allocation11 + $0x238] sm:$0xff]
    %v910 = vld [vmem:[#allocation11 + $0x240] sm:$0xff]
    %v911 = vld [vmem:[#allocation11 + $0x248] sm:$0xff]
    %v912 = vld [vmem:[#allocation11 + $0x250] sm:$0xff]
    %v913 = vld [vmem:[#allocation11 + $0x258] sm:$0xff]
    %v914 = vld [vmem:[#allocation11 + $0x260] sm:$0xff]
    %v915 = vld [vmem:[#allocation11 + $0x268] sm:$0xff]
    %v916 = vld [vmem:[#allocation11 + $0x270] sm:$0xff]
    %v917 = vld [vmem:[#allocation11 + $0x278] sm:$0xff]
    %v918 = vld [vmem:[#allocation11 + $0x280] sm:$0xff]
    %v919 = vld [vmem:[#allocation11 + $0x288] sm:$0xff]
    %v920 = vld [vmem:[#allocation11 + $0x290] sm:$0xff]
    %v921 = vld [vmem:[#allocation11 + $0x298] sm:$0xff]
    %v922 = vld [vmem:[#allocation11 + $0x2a0] sm:$0xff]
    %v923 = vld [vmem:[#allocation11 + $0x2a8] sm:$0xff]
    %v924 = vld [vmem:[#allocation11 + $0x2b0] sm:$0xff]
    %v925 = vld [vmem:[#allocation11 + $0x2b8] sm:$0xff]
    %v926 = vld [vmem:[#allocation11 + $0x2c0] sm:$0xff]
    %v927 = vld [vmem:[#allocation11 + $0x2c8] sm:$0xff]
    %v928 = vld [vmem:[#allocation11 + $0x2d0] sm:$0xff]
    %v929 = vld [vmem:[#allocation11 + $0x2d8] sm:$0xff]
    %v930 = vld [vmem:[#allocation11 + $0x2e0] sm:$0xff]
    %v931 = vld [vmem:[#allocation11 + $0x2e8] sm:$0xff]
    %v932 = vld [vmem:[#allocation11 + $0x2f0] sm:$0xff]
    %v933 = vld [vmem:[#allocation11 + $0x2f8] sm:$0xff]
    %v934 = vld [vmem:[#allocation11 + $0x300] sm:$0xff]
    %v935 = vld [vmem:[#allocation11 + $0x308] sm:$0xff]
    %v936 = vld [vmem:[#allocation11 + $0x310] sm:$0xff]
    %v937 = vld [vmem:[#allocation11 + $0x318] sm:$0xff]
    %v938 = vld [vmem:[#allocation11 + $0x320] sm:$0xff]
    %v939 = vld [vmem:[#allocation11 + $0x328] sm:$0xff]
    %v940 = vld [vmem:[#allocation11 + $0x330] sm:$0xff]
    %v941 = vld [vmem:[#allocation11 + $0x338] sm:$0xff]
    %v942 = vld [vmem:[#allocation11 + $0x340] sm:$0xff]
    %v943 = vld [vmem:[#allocation11 + $0x348] sm:$0xff]
    %v944 = vld [vmem:[#allocation11 + $0x350] sm:$0xff]
    %v945 = vld [vmem:[#allocation11 + $0x358] sm:$0xff]
    %v946 = vld [vmem:[#allocation11 + $0x360] sm:$0xff]
    %v947 = vld [vmem:[#allocation11 + $0x368] sm:$0xff]
    %v948 = vld [vmem:[#allocation11 + $0x370] sm:$0xff]
    %v949 = vld [vmem:[#allocation11 + $0x378] sm:$0xff]
    %v950 = vld [vmem:[#allocation11 + $0x380] sm:$0xff]
    %v951 = vld [vmem:[#allocation11 + $0x388] sm:$0xff]
    %v952 = vld [vmem:[#allocation11 + $0x390] sm:$0xff]
    %v953 = vld [vmem:[#allocation11 + $0x398] sm:$0xff]
    %v954 = vld [vmem:[#allocation11 + $0x3a0] sm:$0xff]
    %v955 = vld [vmem:[#allocation11 + $0x3a8] sm:$0xff]
    %v956 = vld [vmem:[#allocation11 + $0x3b0] sm:$0xff]
    %v957 = vld [vmem:[#allocation11 + $0x3b8] sm:$0xff]
    %v958 = vld [vmem:[#allocation11 + $0x3c0] sm:$0xff]
    %v959 = vld [vmem:[#allocation11 + $0x3c8] sm:$0xff]
    %v960 = vld [vmem:[#allocation11 + $0x3d0] sm:$0xff]
    %v961 = vld [vmem:[#allocation11 + $0x3d8] sm:$0xff]
    %v962 = vld [vmem:[#allocation11 + $0x3e0] sm:$0xff]
    %v963 = vld [vmem:[#allocation11 + $0x3e8] sm:$0xff]
    %v964 = vld [vmem:[#allocation11 + $0x3f0] sm:$0xff]
    %v965 = vld [vmem:[#allocation11 + $0x3f8] sm:$0xff]
    %v966 = vld [vmem:[#allocation12] sm:$0xf]
    %v968 = vlaneseq
    %v969 = vshrl.u32 %v968, 7
    %v970 = vsub.s32 0, %v969
    %v971 = vrot.slane %v966, %v970
    %v972 = vlaneseq
    %v973 = vshrl.u32 %v972, 7
    %v974 = vsub.s32 1, %v973
    %v975 = vrot.slane %v966, %v974
    %v976 = vlaneseq
    %v977 = vshrl.u32 %v976, 7
    %v978 = vsub.s32 2, %v977
    %v979 = vrot.slane %v966, %v978
    %v980 = vlaneseq
    %v981 = vshrl.u32 %v980, 7
    %v982 = vsub.s32 3, %v981
    %v983 = vrot.slane %v966, %v982
    %v1116 = vunpack.c.l.b16 %v838
    %v1117 = vunpack.c.h.b16 %v838
    %v1118 = vunpack.c.l.b16 %v839
    %v1119 = vunpack.c.h.b16 %v839
    %v1120 = vunpack.c.l.b16 %v840
    %v1121 = vunpack.c.h.b16 %v840
    %v1122 = vunpack.c.l.b16 %v841
    %v1123 = vunpack.c.h.b16 %v841
    %v1124 = vunpack.c.l.b16 %v842
    %v1125 = vunpack.c.h.b16 %v842
    %v1126 = vunpack.c.l.b16 %v843
    %v1127 = vunpack.c.h.b16 %v843
    %v1128 = vunpack.c.l.b16 %v844
    %v1129 = vunpack.c.h.b16 %v844
    %v1130 = vunpack.c.l.b16 %v845
    %v1131 = vunpack.c.h.b16 %v845
    %v1132 = vunpack.c.l.b16 %v846
    %v1133 = vunpack.c.h.b16 %v846
    %v1134 = vunpack.c.l.b16 %v847
    %v1135 = vunpack.c.h.b16 %v847
    %v1136 = vunpack.c.l.b16 %v848
    %v1137 = vunpack.c.h.b16 %v848
    %v1138 = vunpack.c.l.b16 %v849
    %v1139 = vunpack.c.h.b16 %v849
    %v1140 = vunpack.c.l.b16 %v850
    %v1141 = vunpack.c.h.b16 %v850
    %v1142 = vunpack.c.l.b16 %v851
    %v1143 = vunpack.c.h.b16 %v851
    %v1144 = vunpack.c.l.b16 %v852
    %v1145 = vunpack.c.h.b16 %v852
    %v1146 = vunpack.c.l.b16 %v853
    %v1147 = vunpack.c.h.b16 %v853
    %v1148 = vunpack.c.l.b16 %v854
    %v1149 = vunpack.c.h.b16 %v854
    %v1150 = vunpack.c.l.b16 %v855
    %v1151 = vunpack.c.h.b16 %v855
    %v1152 = vunpack.c.l.b16 %v856
    %v1153 = vunpack.c.h.b16 %v856
    %v1154 = vunpack.c.l.b16 %v857
    %v1155 = vunpack.c.h.b16 %v857
    %v1156 = vunpack.c.l.b16 %v858
    %v1157 = vunpack.c.h.b16 %v858
    %v1158 = vunpack.c.l.b16 %v859
    %v1159 = vunpack.c.h.b16 %v859
    %v1160 = vunpack.c.l.b16 %v860
    %v1161 = vunpack.c.h.b16 %v860
    %v1162 = vunpack.c.l.b16 %v861
    %v1163 = vunpack.c.h.b16 %v861
    %v1164 = vunpack.c.l.b16 %v862
    %v1165 = vunpack.c.h.b16 %v862
    %v1166 = vunpack.c.l.b16 %v863
    %v1167 = vunpack.c.h.b16 %v863
    %v1168 = vunpack.c.l.b16 %v864
    %v1169 = vunpack.c.h.b16 %v864
    %v1170 = vunpack.c.l.b16 %v865
    %v1171 = vunpack.c.h.b16 %v865
    %v1172 = vunpack.c.l.b16 %v866
    %v1173 = vunpack.c.h.b16 %v866
    %v1174 = vunpack.c.l.b16 %v867
    %v1175 = vunpack.c.h.b16 %v867
    %v1176 = vunpack.c.l.b16 %v868
    %v1177 = vunpack.c.h.b16 %v868
    %v1178 = vunpack.c.l.b16 %v869
    %v1179 = vunpack.c.h.b16 %v869
    %v1180 = vunpack.c.l.b16 %v870
    %v1181 = vunpack.c.h.b16 %v870
    %v1182 = vunpack.c.l.b16 %v871
    %v1183 = vunpack.c.h.b16 %v871
    %v1184 = vunpack.c.l.b16 %v872
    %v1185 = vunpack.c.h.b16 %v872
    %v1186 = vunpack.c.l.b16 %v873
    %v1187 = vunpack.c.h.b16 %v873
    %v1188 = vunpack.c.l.b16 %v874
    %v1189 = vunpack.c.h.b16 %v874
    %v1190 = vunpack.c.l.b16 %v875
    %v1191 = vunpack.c.h.b16 %v875
    %v1192 = vunpack.c.l.b16 %v876
    %v1193 = vunpack.c.h.b16 %v876
    %v1194 = vunpack.c.l.b16 %v877
    %v1195 = vunpack.c.h.b16 %v877
    %v1196 = vunpack.c.l.b16 %v878
    %v1197 = vunpack.c.h.b16 %v878
    %v1198 = vunpack.c.l.b16 %v879
    %v1199 = vunpack.c.h.b16 %v879
    %v1200 = vunpack.c.l.b16 %v880
    %v1201 = vunpack.c.h.b16 %v880
    %v1202 = vunpack.c.l.b16 %v881
    %v1203 = vunpack.c.h.b16 %v881
    %v1204 = vunpack.c.l.b16 %v882
    %v1205 = vunpack.c.h.b16 %v882
    %v1206 = vunpack.c.l.b16 %v883
    %v1207 = vunpack.c.h.b16 %v883
    %v1208 = vunpack.c.l.b16 %v884
    %v1209 = vunpack.c.h.b16 %v884
    %v1210 = vunpack.c.l.b16 %v885
    %v1211 = vunpack.c.h.b16 %v885
    %v1212 = vunpack.c.l.b16 %v886
    %v1213 = vunpack.c.h.b16 %v886
    %v1214 = vunpack.c.l.b16 %v887
    %v1215 = vunpack.c.h.b16 %v887
    %v1216 = vunpack.c.l.b16 %v888
    %v1217 = vunpack.c.h.b16 %v888
    %v1218 = vunpack.c.l.b16 %v889
    %v1219 = vunpack.c.h.b16 %v889
    %v1220 = vunpack.c.l.b16 %v890
    %v1221 = vunpack.c.h.b16 %v890
    %v1222 = vunpack.c.l.b16 %v891
    %v1223 = vunpack.c.h.b16 %v891
    %v1224 = vunpack.c.l.b16 %v892
    %v1225 = vunpack.c.h.b16 %v892
    %v1226 = vunpack.c.l.b16 %v893
    %v1227 = vunpack.c.h.b16 %v893
    %v1228 = vunpack.c.l.b16 %v894
    %v1229 = vunpack.c.h.b16 %v894
    %v1230 = vunpack.c.l.b16 %v895
    %v1231 = vunpack.c.h.b16 %v895
    %v1232 = vunpack.c.l.b16 %v896
    %v1233 = vunpack.c.h.b16 %v896
    %v1234 = vunpack.c.l.b16 %v897
    %v1235 = vunpack.c.h.b16 %v897
    %v1236 = vunpack.c.l.b16 %v898
    %v1237 = vunpack.c.h.b16 %v898
    %v1238 = vunpack.c.l.b16 %v899
    %v1239 = vunpack.c.h.b16 %v899
    %v1240 = vunpack.c.l.b16 %v900
    %v1241 = vunpack.c.h.b16 %v900
    %v1242 = vunpack.c.l.b16 %v901
    %v1243 = vunpack.c.h.b16 %v901
    %v1244 = vunpack.c.l.b16 %v902
    %v1245 = vunpack.c.h.b16 %v902
    %v1246 = vunpack.c.l.b16 %v903
    %v1247 = vunpack.c.h.b16 %v903
    %v1248 = vunpack.c.l.b16 %v904
    %v1249 = vunpack.c.h.b16 %v904
    %v1250 = vunpack.c.l.b16 %v905
    %v1251 = vunpack.c.h.b16 %v905
    %v1252 = vunpack.c.l.b16 %v906
    %v1253 = vunpack.c.h.b16 %v906
    %v1254 = vunpack.c.l.b16 %v907
    %v1255 = vunpack.c.h.b16 %v907
    %v1256 = vunpack.c.l.b16 %v908
    %v1257 = vunpack.c.h.b16 %v908
    %v1258 = vunpack.c.l.b16 %v909
    %v1259 = vunpack.c.h.b16 %v909
    %v1260 = vunpack.c.l.b16 %v910
    %v1261 = vunpack.c.h.b16 %v910
    %v1262 = vunpack.c.l.b16 %v911
    %v1263 = vunpack.c.h.b16 %v911
    %v1264 = vunpack.c.l.b16 %v912
    %v1265 = vunpack.c.h.b16 %v912
    %v1266 = vunpack.c.l.b16 %v913
    %v1267 = vunpack.c.h.b16 %v913
    %v1268 = vunpack.c.l.b16 %v914
    %v1269 = vunpack.c.h.b16 %v914
    %v1270 = vunpack.c.l.b16 %v915
    %v1271 = vunpack.c.h.b16 %v915
    %v1272 = vunpack.c.l.b16 %v916
    %v1273 = vunpack.c.h.b16 %v916
    %v1274 = vunpack.c.l.b16 %v917
    %v1275 = vunpack.c.h.b16 %v917
    %v1276 = vunpack.c.l.b16 %v918
    %v1277 = vunpack.c.h.b16 %v918
    %v1278 = vunpack.c.l.b16 %v919
    %v1279 = vunpack.c.h.b16 %v919
    %v1280 = vunpack.c.l.b16 %v920
    %v1281 = vunpack.c.h.b16 %v920
    %v1282 = vunpack.c.l.b16 %v921
    %v1283 = vunpack.c.h.b16 %v921
    %v1284 = vunpack.c.l.b16 %v922
    %v1285 = vunpack.c.h.b16 %v922
    %v1286 = vunpack.c.l.b16 %v923
    %v1287 = vunpack.c.h.b16 %v923
    %v1288 = vunpack.c.l.b16 %v924
    %v1289 = vunpack.c.h.b16 %v924
    %v1290 = vunpack.c.l.b16 %v925
    %v1291 = vunpack.c.h.b16 %v925
    %v1292 = vunpack.c.l.b16 %v926
    %v1293 = vunpack.c.h.b16 %v926
    %v1294 = vunpack.c.l.b16 %v927
    %v1295 = vunpack.c.h.b16 %v927
    %v1296 = vunpack.c.l.b16 %v928
    %v1297 = vunpack.c.h.b16 %v928
    %v1298 = vunpack.c.l.b16 %v929
    %v1299 = vunpack.c.h.b16 %v929
    %v1300 = vunpack.c.l.b16 %v930
    %v1301 = vunpack.c.h.b16 %v930
    %v1302 = vunpack.c.l.b16 %v931
    %v1303 = vunpack.c.h.b16 %v931
    %v1304 = vunpack.c.l.b16 %v932
    %v1305 = vunpack.c.h.b16 %v932
    %v1306 = vunpack.c.l.b16 %v933
    %v1307 = vunpack.c.h.b16 %v933
    %v1308 = vunpack.c.l.b16 %v934
    %v1309 = vunpack.c.h.b16 %v934
    %v1310 = vunpack.c.l.b16 %v935
    %v1311 = vunpack.c.h.b16 %v935
    %v1312 = vunpack.c.l.b16 %v936
    %v1313 = vunpack.c.h.b16 %v936
    %v1314 = vunpack.c.l.b16 %v937
    %v1315 = vunpack.c.h.b16 %v937
    %v1316 = vunpack.c.l.b16 %v938
    %v1317 = vunpack.c.h.b16 %v938
    %v1318 = vunpack.c.l.b16 %v939
    %v1319 = vunpack.c.h.b16 %v939
    %v1320 = vunpack.c.l.b16 %v940
    %v1321 = vunpack.c.h.b16 %v940
    %v1322 = vunpack.c.l.b16 %v941
    %v1323 = vunpack.c.h.b16 %v941
    %v1324 = vunpack.c.l.b16 %v942
    %v1325 = vunpack.c.h.b16 %v942
    %v1326 = vunpack.c.l.b16 %v943
    %v1327 = vunpack.c.h.b16 %v943
    %v1328 = vunpack.c.l.b16 %v944
    %v1329 = vunpack.c.h.b16 %v944
    %v1330 = vunpack.c.l.b16 %v945
    %v1331 = vunpack.c.h.b16 %v945
    %v1332 = vunpack.c.l.b16 %v946
    %v1333 = vunpack.c.h.b16 %v946
    %v1334 = vunpack.c.l.b16 %v947
    %v1335 = vunpack.c.h.b16 %v947
    %v1336 = vunpack.c.l.b16 %v948
    %v1337 = vunpack.c.h.b16 %v948
    %v1338 = vunpack.c.l.b16 %v949
    %v1339 = vunpack.c.h.b16 %v949
    %v1340 = vunpack.c.l.b16 %v950
    %v1341 = vunpack.c.h.b16 %v950
    %v1342 = vunpack.c.l.b16 %v951
    %v1343 = vunpack.c.h.b16 %v951
    %v1344 = vunpack.c.l.b16 %v952
    %v1345 = vunpack.c.h.b16 %v952
    %v1346 = vunpack.c.l.b16 %v953
    %v1347 = vunpack.c.h.b16 %v953
    %v1348 = vunpack.c.l.b16 %v954
    %v1349 = vunpack.c.h.b16 %v954
    %v1350 = vunpack.c.l.b16 %v955
    %v1351 = vunpack.c.h.b16 %v955
    %v1352 = vunpack.c.l.b16 %v956
    %v1353 = vunpack.c.h.b16 %v956
    %v1354 = vunpack.c.l.b16 %v957
    %v1355 = vunpack.c.h.b16 %v957
    %v1356 = vunpack.c.l.b16 %v958
    %v1357 = vunpack.c.h.b16 %v958
    %v1358 = vunpack.c.l.b16 %v959
    %v1359 = vunpack.c.h.b16 %v959
    %v1360 = vunpack.c.l.b16 %v960
    %v1361 = vunpack.c.h.b16 %v960
    %v1362 = vunpack.c.l.b16 %v961
    %v1363 = vunpack.c.h.b16 %v961
    %v1364 = vunpack.c.l.b16 %v962
    %v1365 = vunpack.c.h.b16 %v962
    %v1366 = vunpack.c.l.b16 %v963
    %v1367 = vunpack.c.h.b16 %v963
    %v1368 = vunpack.c.l.b16 %v964
    %v1369 = vunpack.c.h.b16 %v964
    %v1370 = vunpack.c.l.b16 %v965
    %v1371 = vunpack.c.h.b16 %v965
    %v1372 = vpack.c.b16 %v1120, %v1116
    %v1373 = vpack.c.b16 %v1121, %v1117
    %v1374 = vpack.c.b16 %v1122, %v1118
    %v1375 = vpack.c.b16 %v1123, %v1119
    %v1376 = vpack.c.b16 %v1128, %v1124
    %v1377 = vpack.c.b16 %v1129, %v1125
    %v1378 = vpack.c.b16 %v1130, %v1126
    %v1379 = vpack.c.b16 %v1131, %v1127
    %v1380 = vpack.c.b16 %v1136, %v1132
    %v1381 = vpack.c.b16 %v1137, %v1133
    %v1382 = vpack.c.b16 %v1138, %v1134
    %v1383 = vpack.c.b16 %v1139, %v1135
    %v1384 = vpack.c.b16 %v1144, %v1140
    %v1385 = vpack.c.b16 %v1145, %v1141
    %v1386 = vpack.c.b16 %v1146, %v1142
    %v1387 = vpack.c.b16 %v1147, %v1143
    %v1388 = vpack.c.b16 %v1152, %v1148
    %v1389 = vpack.c.b16 %v1153, %v1149
    %v1390 = vpack.c.b16 %v1154, %v1150
    %v1391 = vpack.c.b16 %v1155, %v1151
    %v1392 = vpack.c.b16 %v1160, %v1156
    %v1393 = vpack.c.b16 %v1161, %v1157
    %v1394 = vpack.c.b16 %v1162, %v1158
    %v1395 = vpack.c.b16 %v1163, %v1159
    %v1396 = vpack.c.b16 %v1168, %v1164
    %v1397 = vpack.c.b16 %v1169, %v1165
    %v1398 = vpack.c.b16 %v1170, %v1166
    %v1399 = vpack.c.b16 %v1171, %v1167
    %v1400 = vpack.c.b16 %v1176, %v1172
    %v1401 = vpack.c.b16 %v1177, %v1173
    %v1402 = vpack.c.b16 %v1178, %v1174
    %v1403 = vpack.c.b16 %v1179, %v1175
    %v1404 = vpack.c.b16 %v1184, %v1180
    %v1405 = vpack.c.b16 %v1185, %v1181
    %v1406 = vpack.c.b16 %v1186, %v1182
    %v1407 = vpack.c.b16 %v1187, %v1183
    %v1408 = vpack.c.b16 %v1192, %v1188
    %v1409 = vpack.c.b16 %v1193, %v1189
    %v1410 = vpack.c.b16 %v1194, %v1190
    %v1411 = vpack.c.b16 %v1195, %v1191
    %v1412 = vpack.c.b16 %v1200, %v1196
    %v1413 = vpack.c.b16 %v1201, %v1197
    %v1414 = vpack.c.b16 %v1202, %v1198
    %v1415 = vpack.c.b16 %v1203, %v1199
    %v1416 = vpack.c.b16 %v1208, %v1204
    %v1417 = vpack.c.b16 %v1209, %v1205
    %v1418 = vpack.c.b16 %v1210, %v1206
    %v1419 = vpack.c.b16 %v1211, %v1207
    %v1420 = vpack.c.b16 %v1216, %v1212
    %v1421 = vpack.c.b16 %v1217, %v1213
    %v1422 = vpack.c.b16 %v1218, %v1214
    %v1423 = vpack.c.b16 %v1219, %v1215
    %v1424 = vpack.c.b16 %v1224, %v1220
    %v1425 = vpack.c.b16 %v1225, %v1221
    %v1426 = vpack.c.b16 %v1226, %v1222
    %v1427 = vpack.c.b16 %v1227, %v1223
    %v1428 = vpack.c.b16 %v1232, %v1228
    %v1429 = vpack.c.b16 %v1233, %v1229
    %v1430 = vpack.c.b16 %v1234, %v1230
    %v1431 = vpack.c.b16 %v1235, %v1231
    %v1432 = vpack.c.b16 %v1240, %v1236
    %v1433 = vpack.c.b16 %v1241, %v1237
    %v1434 = vpack.c.b16 %v1242, %v1238
    %v1435 = vpack.c.b16 %v1243, %v1239
    %v1436 = vpack.c.b16 %v1248, %v1244
    %v1437 = vpack.c.b16 %v1249, %v1245
    %v1438 = vpack.c.b16 %v1250, %v1246
    %v1439 = vpack.c.b16 %v1251, %v1247
    %v1440 = vpack.c.b16 %v1256, %v1252
    %v1441 = vpack.c.b16 %v1257, %v1253
    %v1442 = vpack.c.b16 %v1258, %v1254
    %v1443 = vpack.c.b16 %v1259, %v1255
    %v1444 = vpack.c.b16 %v1264, %v1260
    %v1445 = vpack.c.b16 %v1265, %v1261
    %v1446 = vpack.c.b16 %v1266, %v1262
    %v1447 = vpack.c.b16 %v1267, %v1263
    %v1448 = vpack.c.b16 %v1272, %v1268
    %v1449 = vpack.c.b16 %v1273, %v1269
    %v1450 = vpack.c.b16 %v1274, %v1270
    %v1451 = vpack.c.b16 %v1275, %v1271
    %v1452 = vpack.c.b16 %v1280, %v1276
    %v1453 = vpack.c.b16 %v1281, %v1277
    %v1454 = vpack.c.b16 %v1282, %v1278
    %v1455 = vpack.c.b16 %v1283, %v1279
    %v1456 = vpack.c.b16 %v1288, %v1284
    %v1457 = vpack.c.b16 %v1289, %v1285
    %v1458 = vpack.c.b16 %v1290, %v1286
    %v1459 = vpack.c.b16 %v1291, %v1287
    %v1460 = vpack.c.b16 %v1296, %v1292
    %v1461 = vpack.c.b16 %v1297, %v1293
    %v1462 = vpack.c.b16 %v1298, %v1294
    %v1463 = vpack.c.b16 %v1299, %v1295
    %v1464 = vpack.c.b16 %v1304, %v1300
    %v1465 = vpack.c.b16 %v1305, %v1301
    %v1466 = vpack.c.b16 %v1306, %v1302
    %v1467 = vpack.c.b16 %v1307, %v1303
    %v1468 = vpack.c.b16 %v1312, %v1308
    %v1469 = vpack.c.b16 %v1313, %v1309
    %v1470 = vpack.c.b16 %v1314, %v1310
    %v1471 = vpack.c.b16 %v1315, %v1311
    %v1472 = vpack.c.b16 %v1320, %v1316
    %v1473 = vpack.c.b16 %v1321, %v1317
    %v1474 = vpack.c.b16 %v1322, %v1318
    %v1475 = vpack.c.b16 %v1323, %v1319
    %v1476 = vpack.c.b16 %v1328, %v1324
    %v1477 = vpack.c.b16 %v1329, %v1325
    %v1478 = vpack.c.b16 %v1330, %v1326
    %v1479 = vpack.c.b16 %v1331, %v1327
    %v1480 = vpack.c.b16 %v1336, %v1332
    %v1481 = vpack.c.b16 %v1337, %v1333
    %v1482 = vpack.c.b16 %v1338, %v1334
    %v1483 = vpack.c.b16 %v1339, %v1335
    %v1484 = vpack.c.b16 %v1344, %v1340
    %v1485 = vpack.c.b16 %v1345, %v1341
    %v1486 = vpack.c.b16 %v1346, %v1342
    %v1487 = vpack.c.b16 %v1347, %v1343
    %v1488 = vpack.c.b16 %v1352, %v1348
    %v1489 = vpack.c.b16 %v1353, %v1349
    %v1490 = vpack.c.b16 %v1354, %v1350
    %v1491 = vpack.c.b16 %v1355, %v1351
    %v1492 = vpack.c.b16 %v1360, %v1356
    %v1493 = vpack.c.b16 %v1361, %v1357
    %v1494 = vpack.c.b16 %v1362, %v1358
    %v1495 = vpack.c.b16 %v1363, %v1359
    %v1496 = vpack.c.b16 %v1368, %v1364
    %v1497 = vpack.c.b16 %v1369, %v1365
    %v1498 = vpack.c.b16 %v1370, %v1366
    %v1499 = vpack.c.b16 %v1371, %v1367
    %1628 = vmatprep.subr.bf16.mxu0 %v1373
    %1629 = vmatpush1.bf16.msra.mxu0 %v1372
    %1630 = vmatprep.subr.bf16.mxu0 %v1377
    %1631 = vmatpush1.bf16.msra.mxu0 %v1376
    %1632 = vmatprep.subr.bf16.mxu0 %v1381
    %1633 = vmatpush1.bf16.msra.mxu0 %v1380
    %1634 = vmatprep.subr.bf16.mxu0 %v1385
    %1635 = vmatpush1.bf16.msra.mxu0 %v1384
    %1636 = vmatprep.subr.bf16.mxu0 %v1389
    %1637 = vmatpush1.bf16.msra.mxu0 %v1388
    %1638 = vmatprep.subr.bf16.mxu0 %v1393
    %1639 = vmatpush1.bf16.msra.mxu0 %v1392
    %1640 = vmatprep.subr.bf16.mxu0 %v1397
    %1641 = vmatpush1.bf16.msra.mxu0 %v1396
    %1642 = vmatprep.subr.bf16.mxu0 %v1401
    %1643 = vmatpush1.bf16.msra.mxu0 %v1400
    %1644 = vmatprep.subr.bf16.mxu0 %v1405
    %1645 = vmatpush1.bf16.msra.mxu0 %v1404
    %1646 = vmatprep.subr.bf16.mxu0 %v1409
    %1647 = vmatpush1.bf16.msra.mxu0 %v1408
    %1648 = vmatprep.subr.bf16.mxu0 %v1413
    %1649 = vmatpush1.bf16.msra.mxu0 %v1412
    %1650 = vmatprep.subr.bf16.mxu0 %v1417
    %1651 = vmatpush1.bf16.msra.mxu0 %v1416
    %1652 = vmatprep.subr.bf16.mxu0 %v1421
    %1653 = vmatpush1.bf16.msra.mxu0 %v1420
    %1654 = vmatprep.subr.bf16.mxu0 %v1425
    %1655 = vmatpush1.bf16.msra.mxu0 %v1424
    %1656 = vmatprep.subr.bf16.mxu0 %v1429
    %1657 = vmatpush1.bf16.msra.mxu0 %v1428
    %1658 = vmatprep.subr.bf16.mxu0 %v1433
    %1659 = vmatpush1.bf16.msra.mxu0 %v1432
    %1660 = vmatprep.mubr.bf16.mxu0 %v835
    %1661 = vmatmul.mubr.bf16.gmra.mrb[0].mxu0 %v834
    %v1662 = vpop.f32.mrb[0].mxu0
    %v1663 = vadd.f32 %v971, %v1662
    %v1664 = vpop.f32.mrb[0].mxu0
    %v1665 = vadd.f32 %v975, %v1664
    %v1666 = vpop.f32.mrb[0].mxu0
    %v1667 = vpop.f32.mrb[0].mxu0
    %1668 = vdwg.mxu0
    %1669 = vmatprep.subr.bf16.mxu0 %v1437
    %1670 = vmatpush1.bf16.msra.mxu0 %v1436
    %1671 = vmatprep.subr.bf16.mxu0 %v1441
    %1672 = vmatpush1.bf16.msra.mxu0 %v1440
    %1673 = vmatprep.subr.bf16.mxu0 %v1445
    %1674 = vmatpush1.bf16.msra.mxu0 %v1444
    %1675 = vmatprep.subr.bf16.mxu0 %v1449
    %1676 = vmatpush1.bf16.msra.mxu0 %v1448
    %1677 = vmatprep.subr.bf16.mxu0 %v1453
    %1678 = vmatpush1.bf16.msra.mxu0 %v1452
    %1679 = vmatprep.subr.bf16.mxu0 %v1457
    %1680 = vmatpush1.bf16.msra.mxu0 %v1456
    %1681 = vmatprep.subr.bf16.mxu0 %v1461
    %1682 = vmatpush1.bf16.msra.mxu0 %v1460
    %1683 = vmatprep.subr.bf16.mxu0 %v1465
    %1684 = vmatpush1.bf16.msra.mxu0 %v1464
    %1685 = vmatprep.subr.bf16.mxu0 %v1469
    %1686 = vmatpush1.bf16.msra.mxu0 %v1468
    %1687 = vmatprep.subr.bf16.mxu0 %v1473
    %1688 = vmatpush1.bf16.msra.mxu0 %v1472
    %1689 = vmatprep.subr.bf16.mxu0 %v1477
    %1690 = vmatpush1.bf16.msra.mxu0 %v1476
    %1691 = vmatprep.subr.bf16.mxu0 %v1481
    %1692 = vmatpush1.bf16.msra.mxu0 %v1480
    %1693 = vmatprep.subr.bf16.mxu0 %v1485
    %1694 = vmatpush1.bf16.msra.mxu0 %v1484
    %1695 = vmatprep.subr.bf16.mxu0 %v1489
    %1696 = vmatpush1.bf16.msra.mxu0 %v1488
    %1697 = vmatprep.subr.bf16.mxu0 %v1493
    %1698 = vmatpush1.bf16.msra.mxu0 %v1492
    %1699 = vmatprep.subr.bf16.mxu0 %v1497
    %1700 = vmatpush1.bf16.msra.mxu0 %v1496
    %1701 = vmatprep.mubr.bf16.mxu0 %v837
    %1702 = vmatmul.mubr.bf16.gmra.mrb[0].mxu0 %v836
    %v1703 = vpop.f32.mrb[0].mxu0
    %v1704 = vadd.f32 %v1663, %v1703
    %v1705 = vpop.f32.mrb[0].mxu0
    %v1706 = vadd.f32 %v1665, %v1705
    %v1707 = vpop.f32.mrb[0].mxu0
    %v1708 = vpop.f32.mrb[0].mxu0
    %1709 = vdwg.mxu0
    %1710 = vmatprep.subr.bf16.mxu0 %v1375
    %1711 = vmatpush1.bf16.msra.mxu0 %v1374
    %1712 = vmatprep.subr.bf16.mxu0 %v1379
    %1713 = vmatpush1.bf16.msra.mxu0 %v1378
    %1714 = vmatprep.subr.bf16.mxu0 %v1383
    %1715 = vmatpush1.bf16.msra.mxu0 %v1382
    %1716 = vmatprep.subr.bf16.mxu0 %v1387
    %1717 = vmatpush1.bf16.msra.mxu0 %v1386
    %1718 = vmatprep.subr.bf16.mxu0 %v1391
    %1719 = vmatpush1.bf16.msra.mxu0 %v1390
    %1720 = vmatprep.subr.bf16.mxu0 %v1395
    %1721 = vmatpush1.bf16.msra.mxu0 %v1394
    %1722 = vmatprep.subr.bf16.mxu0 %v1399
    %1723 = vmatpush1.bf16.msra.mxu0 %v1398
    %1724 = vmatprep.subr.bf16.mxu0 %v1403
    %1725 = vmatpush1.bf16.msra.mxu0 %v1402
    %1726 = vmatprep.subr.bf16.mxu0 %v1407
    %1727 = vmatpush1.bf16.msra.mxu0 %v1406
    %1728 = vmatprep.subr.bf16.mxu0 %v1411
    %1729 = vmatpush1.bf16.msra.mxu0 %v1410
    %1730 = vmatprep.subr.bf16.mxu0 %v1415
    %1731 = vmatpush1.bf16.msra.mxu0 %v1414
    %1732 = vmatprep.subr.bf16.mxu0 %v1419
    %1733 = vmatpush1.bf16.msra.mxu0 %v1418
    %1734 = vmatprep.subr.bf16.mxu0 %v1423
    %1735 = vmatpush1.bf16.msra.mxu0 %v1422
    %1736 = vmatprep.subr.bf16.mxu0 %v1427
    %1737 = vmatpush1.bf16.msra.mxu0 %v1426
    %1738 = vmatprep.subr.bf16.mxu0 %v1431
    %1739 = vmatpush1.bf16.msra.mxu0 %v1430
    %1740 = vmatprep.subr.bf16.mxu0 %v1435
    %1741 = vmatpush1.bf16.msra.mxu0 %v1434
    %1742 = vmatprep.mubr.bf16.mxu0 %v835
    %1743 = vmatmul.mubr.bf16.gmra.mrb[0].mxu0 %v834
    %v1744 = vpop.f32.mrb[0].mxu0
    %v1745 = vadd.f32 %v979, %v1744
    %v1746 = vpop.f32.mrb[0].mxu0
    %v1747 = vadd.f32 %v983, %v1746
    %v1748 = vpop.f32.mrb[0].mxu0
    %v1749 = vpop.f32.mrb[0].mxu0
    %1750 = vdwg.mxu0
    %1751 = vmatprep.subr.bf16.mxu0 %v1439
    %1752 = vmatpush1.bf16.msra.mxu0 %v1438
    %1753 = vmatprep.subr.bf16.mxu0 %v1443
    %1754 = vmatpush1.bf16.msra.mxu0 %v1442
    %1755 = vmatprep.subr.bf16.mxu0 %v1447
    %1756 = vmatpush1.bf16.msra.mxu0 %v1446
    %1757 = vmatprep.subr.bf16.mxu0 %v1451
    %1758 = vmatpush1.bf16.msra.mxu0 %v1450
    %1759 = vmatprep.subr.bf16.mxu0 %v1455
    %1760 = vmatpush1.bf16.msra.mxu0 %v1454
    %1761 = vmatprep.subr.bf16.mxu0 %v1459
    %1762 = vmatpush1.bf16.msra.mxu0 %v1458
    %1763 = vmatprep.subr.bf16.mxu0 %v1463
    %1764 = vmatpush1.bf16.msra.mxu0 %v1462
    %1765 = vmatprep.subr.bf16.mxu0 %v1467
    %1766 = vmatpush1.bf16.msra.mxu0 %v1466
    %1767 = vmatprep.subr.bf16.mxu0 %v1471
    %1768 = vmatpush1.bf16.msra.mxu0 %v1470
    %1769 = vmatprep.subr.bf16.mxu0 %v1475
    %1770 = vmatpush1.bf16.msra.mxu0 %v1474
    %1771 = vmatprep.subr.bf16.mxu0 %v1479
    %1772 = vmatpush1.bf16.msra.mxu0 %v1478
    %1773 = vmatprep.subr.bf16.mxu0 %v1483
    %1774 = vmatpush1.bf16.msra.mxu0 %v1482
    %1775 = vmatprep.subr.bf16.mxu0 %v1487
    %1776 = vmatpush1.bf16.msra.mxu0 %v1486
    %1777 = vmatprep.subr.bf16.mxu0 %v1491
    %1778 = vmatpush1.bf16.msra.mxu0 %v1490
    %1779 = vmatprep.subr.bf16.mxu0 %v1495
    %1780 = vmatpush1.bf16.msra.mxu0 %v1494
    %1781 = vmatprep.subr.bf16.mxu0 %v1499
    %1782 = vmatpush1.bf16.msra.mxu0 %v1498
    %1783 = vmatprep.mubr.bf16.mxu0 %v837
    %1784 = vmatmul.mubr.bf16.gmra.mrb[0].mxu0 %v836
    %v1785 = vpop.f32.mrb[0].mxu0
    %v1786 = vadd.f32 %v1745, %v1785
    %v1787 = vpop.f32.mrb[0].mxu0
    %v1788 = vadd.f32 %v1747, %v1787
    %v1789 = vpop.f32.mrb[0].mxu0
    %v1790 = vpop.f32.mrb[0].mxu0
    %1791 = vdwg.mxu0
    %v1792 = vrot.slane %v1704, 4
    %v1793 = vadd.f32 %v1704, %v1792
    %v1794 = vrot.slane %v1793, 2
    %v1795 = vadd.f32 %v1793, %v1794
    %v1796 = vrot.slane %v1795, 1
    %v1797 = vadd.f32 %v1795, %v1796
    %v1798 = vrot.slane %v1706, 4
    %v1799 = vadd.f32 %v1706, %v1798
    %v1800 = vrot.slane %v1799, 2
    %v1801 = vadd.f32 %v1799, %v1800
    %v1802 = vrot.slane %v1801, 1
    %v1803 = vadd.f32 %v1801, %v1802
    %v1804 = vrot.slane %v1786, 4
    %v1805 = vadd.f32 %v1786, %v1804
    %v1806 = vrot.slane %v1805, 2
    %v1807 = vadd.f32 %v1805, %v1806
    %v1808 = vrot.slane %v1807, 1
    %v1809 = vadd.f32 %v1807, %v1808
    %v1810 = vrot.slane %v1788, 4
    %v1811 = vadd.f32 %v1788, %v1810
    %v1812 = vrot.slane %v1811, 2
    %v1813 = vadd.f32 %v1811, %v1812
    %v1814 = vrot.slane %v1813, 1
    %v1815 = vadd.f32 %v1813, %v1814
    %v1816 = vmul.f32 %v1797, %v656
    %v1817 = vmul.f32 %v1803, %v656
    %v1818 = vmul.f32 %v1809, %v656
    %v1819 = vmul.f32 %v1815, %v656
    %v1820 = vsub.f32 %v1704, %v1816
    %v1821 = vsub.f32 %v1706, %v1817
    %v1822 = vsub.f32 %v1786, %v1818
    %v1823 = vsub.f32 %v1788, %v1819
    %v1824 = vmul.f32 %v1820, %v1820
    %v1825 = vmul.f32 %v1821, %v1821
    %v1826 = vmul.f32 %v1822, %v1822
    %v1827 = vmul.f32 %v1823, %v1823
    %v1828 = vrot.slane %v1824, 4
    %v1829 = vadd.f32 %v1824, %v1828
    %v1830 = vrot.slane %v1829, 2
    %v1831 = vadd.f32 %v1829, %v1830
    %v1832 = vrot.slane %v1831, 1
    %v1833 = vadd.f32 %v1831, %v1832
    %v1834 = vrot.slane %v1825, 4
    %v1835 = vadd.f32 %v1825, %v1834
    %v1836 = vrot.slane %v1835, 2
    %v1837 = vadd.f32 %v1835, %v1836
    %v1838 = vrot.slane %v1837, 1
    %v1839 = vadd.f32 %v1837, %v1838
    %v1840 = vrot.slane %v1826, 4
    %v1841 = vadd.f32 %v1826, %v1840
    %v1842 = vrot.slane %v1841, 2
    %v1843 = vadd.f32 %v1841, %v1842
    %v1844 = vrot.slane %v1843, 1
    %v1845 = vadd.f32 %v1843, %v1844
    %v1846 = vrot.slane %v1827, 4
    %v1847 = vadd.f32 %v1827, %v1846
    %v1848 = vrot.slane %v1847, 2
    %v1849 = vadd.f32 %v1847, %v1848
    %v1850 = vrot.slane %v1849, 1
    %v1851 = vadd.f32 %v1849, %v1850
    %v1852 = vmul.f32 %v1833, %v656
    %v1853 = vmul.f32 %v1839, %v656
    %v1854 = vmul.f32 %v1845, %v656
    %v1855 = vmul.f32 %v1851, %v656
    %v1856 = vadd.f32 %v1852, 1e-05
    %v1857 = vadd.f32 %v1853, 1e-05
    %v1858 = vadd.f32 %v1854, 1e-05
    %v1859 = vadd.f32 %v1855, 1e-05
    %v1860 = vrsqrt.pop %v1856
    %v1861 = vrsqrt.pop %v1857
    %v1862 = vrsqrt.pop %v1858
    %v1863 = vrsqrt.pop %v1859
    %v1864 = vmul.f32 %v1820, %v1860
    %v1865 = vmul.f32 %v1821, %v1861
    %v1866 = vmul.f32 %v1822, %v1862
    %v1867 = vmul.f32 %v1823, %v1863
    %v1868 = vld [vmem:[#allocation14] sm:$0xf]
    %v1870 = vlaneseq
    %v1871 = vshrl.u32 %v1870, 7
    %v1872 = vsub.s32 0, %v1871
    %v1873 = vrot.slane %v1868, %v1872
    %v1874 = vlaneseq
    %v1875 = vshrl.u32 %v1874, 7
    %v1876 = vsub.s32 1, %v1875
    %v1877 = vrot.slane %v1868, %v1876
    %v1878 = vlaneseq
    %v1879 = vshrl.u32 %v1878, 7
    %v1880 = vsub.s32 2, %v1879
    %v1881 = vrot.slane %v1868, %v1880
    %v1882 = vlaneseq
    %v1883 = vshrl.u32 %v1882, 7
    %v1884 = vsub.s32 3, %v1883
    %v1885 = vrot.slane %v1868, %v1884
    %v1890 = vmul.f32 %v1864, %v1873
    %v1891 = vmul.f32 %v1865, %v1877
    %v1892 = vmul.f32 %v1866, %v1881
    %v1893 = vmul.f32 %v1867, %v1885
    %v1894 = vld [vmem:[#allocation15] sm:$0xf]
    %v1896 = vlaneseq
    %v1897 = vshrl.u32 %v1896, 7
    %v1898 = vsub.s32 0, %v1897
    %v1899 = vrot.slane %v1894, %v1898
    %v1900 = vlaneseq
    %v1901 = vshrl.u32 %v1900, 7
    %v1902 = vsub.s32 1, %v1901
    %v1903 = vrot.slane %v1894, %v1902
    %v1904 = vlaneseq
    %v1905 = vshrl.u32 %v1904, 7
    %v1906 = vsub.s32 2, %v1905
    %v1907 = vrot.slane %v1894, %v1906
    %v1908 = vlaneseq
    %v1909 = vshrl.u32 %v1908, 7
    %v1910 = vsub.s32 3, %v1909
    %v1911 = vrot.slane %v1894, %v1910
    %v1916 = vadd.f32 %v1890, %v1899
    %v1917 = vadd.f32 %v1891, %v1903
    %v1918 = vadd.f32 %v1892, %v1907
    %v1919 = vadd.f32 %v1893, %v1911
    %vm1920 = vcmp.gt.f32.partialorder %v1916, 0.0
    %vm1921 = vcmp.gt.f32.partialorder %v1917, 0.0
    %vm1922 = vcmp.gt.f32.partialorder %v1918, 0.0
    %vm1923 = vcmp.gt.f32.partialorder %v1919, 0.0
    %v1924 = vmul.f32 %v1916, 0.01
    %v1925 = vmul.f32 %v1917, 0.01
    %v1926 = vmul.f32 %v1918, 0.01
    %v1927 = vmul.f32 %v1919, 0.01
    %v1928 = vsel %vm1920, %v1916, %v1924
    %v1929 = vsel %vm1921, %v1917, %v1925
    %v1930 = vsel %vm1922, %v1918, %v1926
    %v1931 = vsel %vm1923, %v1919, %v1927
    %s1932 = sadd.s32 %s473, 2654435769
    %v1933 = vstv %s1932
    %v1934 = vxor.u32 %v781, %v1933
    %v1935 = vxor.u32 %v782, %v1933
    %v1936 = vxor.u32 %v783, %v1933
    %v1937 = vxor.u32 %v784, %v1933
    %v1938 = vshrl.u32 %v1934, 16
    %v1939 = vshrl.u32 %v1935, 16
    %v1940 = vshrl.u32 %v1936, 16
    %v1941 = vshrl.u32 %v1937, 16
    %v1942 = vxor.u32 %v1934, %v1938
    %v1943 = vxor.u32 %v1935, %v1939
    %v1944 = vxor.u32 %v1936, %v1940
    %v1945 = vxor.u32 %v1937, %v1941
    %v1946 = vmul.u32 %v1942, 2146121005
    %v1947 = vmul.u32 %v1943, 2146121005
    %v1948 = vmul.u32 %v1944, 2146121005
    %v1949 = vmul.u32 %v1945, 2146121005
    %v1950 = vshrl.u32 %v1946, 15
    %v1951 = vshrl.u32 %v1947, 15
    %v1952 = vshrl.u32 %v1948, 15
    %v1953 = vshrl.u32 %v1949, 15
    %v1954 = vxor.u32 %v1946, %v1950
    %v1955 = vxor.u32 %v1947, %v1951
    %v1956 = vxor.u32 %v1948, %v1952
    %v1957 = vxor.u32 %v1949, %v1953
    %v1958 = vmul.u32 %v1954, 2221713035
    %v1959 = vmul.u32 %v1955, 2221713035
    %v1960 = vmul.u32 %v1956, 2221713035
    %v1961 = vmul.u32 %v1957, 2221713035
    %v1962 = vshrl.u32 %v1958, 16
    %v1963 = vshrl.u32 %v1959, 16
    %v1964 = vshrl.u32 %v1960, 16
    %v1965 = vshrl.u32 %v1961, 16
    %v1966 = vxor.u32 %v1958, %v1962
    %v1967 = vxor.u32 %v1959, %v1963
    %v1968 = vxor.u32 %v1960, %v1964
    %v1969 = vxor.u32 %v1961, %v1965
    %vm1970 = vcmp.ge.u32.totalorder %v1966, 1073741824
    %vm1971 = vcmp.ge.u32.totalorder %v1967, 1073741824
    %vm1972 = vcmp.ge.u32.totalorder %v1968, 1073741824
    %vm1973 = vcmp.ge.u32.totalorder %v1969, 1073741824
    %v1974 = vmul.f32 %v1928, 1.3333334
    %v1975 = vmul.f32 %v1929, 1.3333334
    %v1976 = vmul.f32 %v1930, 1.3333334
    %v1977 = vmul.f32 %v1931, 1.3333334
    %v1978 = vsel %vm1970, %v1974, 0.0
    %v1979 = vsel %vm1971, %v1975, 0.0
    %v1980 = vsel %vm1972, %v1976, 0.0
    %v1981 = vsel %vm1973, %v1977, 0.0
    %v1982 = vpack.c.bf16 %v1978, %v1978
    %v1983 = vpack.c.bf16 %v1979, %v1979
    %v1984 = vpack.c.bf16 %v1980, %v1980
    %v1985 = vpack.c.bf16 %v1981, %v1981
    %v1986 = vld [vmem:[#allocation17] sm:$0xff]
    %v1987 = vld [vmem:[#allocation17 + $0x8] sm:$0xff]
    %v1988 = vld [vmem:[#allocation17 + $0x10] sm:$0xff]
    %v1989 = vld [vmem:[#allocation17 + $0x18] sm:$0xff]
    %v1990 = vld [vmem:[#allocation17 + $0x20] sm:$0xff]
    %v1991 = vld [vmem:[#allocation17 + $0x28] sm:$0xff]
    %v1992 = vld [vmem:[#allocation17 + $0x30] sm:$0xff]
    %v1993 = vld [vmem:[#allocation17 + $0x38] sm:$0xff]
    %v1994 = vld [vmem:[#allocation17 + $0x40] sm:$0xff]
    %v1995 = vld [vmem:[#allocation17 + $0x48] sm:$0xff]
    %v1996 = vld [vmem:[#allocation17 + $0x50] sm:$0xff]
    %v1997 = vld [vmem:[#allocation17 + $0x58] sm:$0xff]
    %v1998 = vld [vmem:[#allocation17 + $0x60] sm:$0xff]
    %v1999 = vld [vmem:[#allocation17 + $0x68] sm:$0xff]
    %v2000 = vld [vmem:[#allocation17 + $0x70] sm:$0xff]
    %v2001 = vld [vmem:[#allocation17 + $0x78] sm:$0xff]
    %v2002 = vld [vmem:[#allocation17 + $0x80] sm:$0xff]
    %v2003 = vld [vmem:[#allocation17 + $0x88] sm:$0xff]
    %v2004 = vld [vmem:[#allocation17 + $0x90] sm:$0xff]
    %v2005 = vld [vmem:[#allocation17 + $0x98] sm:$0xff]
    %v2006 = vld [vmem:[#allocation17 + $0xa0] sm:$0xff]
    %v2007 = vld [vmem:[#allocation17 + $0xa8] sm:$0xff]
    %v2008 = vld [vmem:[#allocation17 + $0xb0] sm:$0xff]
    %v2009 = vld [vmem:[#allocation17 + $0xb8] sm:$0xff]
    %v2010 = vld [vmem:[#allocation17 + $0xc0] sm:$0xff]
    %v2011 = vld [vmem:[#allocation17 + $0xc8] sm:$0xff]
    %v2012 = vld [vmem:[#allocation17 + $0xd0] sm:$0xff]
    %v2013 = vld [vmem:[#allocation17 + $0xd8] sm:$0xff]
    %v2014 = vld [vmem:[#allocation17 + $0xe0] sm:$0xff]
    %v2015 = vld [vmem:[#allocation17 + $0xe8] sm:$0xff]
    %v2016 = vld [vmem:[#allocation17 + $0xf0] sm:$0xff]
    %v2017 = vld [vmem:[#allocation17 + $0xf8] sm:$0xff]
    %v2018 = vld [vmem:[#allocation17 + $0x100] sm:$0xff]
    %v2019 = vld [vmem:[#allocation17 + $0x108] sm:$0xff]
    %v2020 = vld [vmem:[#allocation17 + $0x110] sm:$0xff]
    %v2021 = vld [vmem:[#allocation17 + $0x118] sm:$0xff]
    %v2022 = vld [vmem:[#allocation17 + $0x120] sm:$0xff]
    %v2023 = vld [vmem:[#allocation17 + $0x128] sm:$0xff]
    %v2024 = vld [vmem:[#allocation17 + $0x130] sm:$0xff]
    %v2025 = vld [vmem:[#allocation17 + $0x138] sm:$0xff]
    %v2026 = vld [vmem:[#allocation17 + $0x140] sm:$0xff]
    %v2027 = vld [vmem:[#allocation17 + $0x148] sm:$0xff]
    %v2028 = vld [vmem:[#allocation17 + $0x150] sm:$0xff]
    %v2029 = vld [vmem:[#allocation17 + $0x158] sm:$0xff]
    %v2030 = vld [vmem:[#allocation17 + $0x160] sm:$0xff]
    %v2031 = vld [vmem:[#allocation17 + $0x168] sm:$0xff]
    %v2032 = vld [vmem:[#allocation17 + $0x170] sm:$0xff]
    %v2033 = vld [vmem:[#allocation17 + $0x178] sm:$0xff]
    %v2034 = vld [vmem:[#allocation17 + $0x180] sm:$0xff]
    %v2035 = vld [vmem:[#allocation17 + $0x188] sm:$0xff]
    %v2036 = vld [vmem:[#allocation17 + $0x190] sm:$0xff]
    %v2037 = vld [vmem:[#allocation17 + $0x198] sm:$0xff]
    %v2038 = vld [vmem:[#allocation17 + $0x1a0] sm:$0xff]
    %v2039 = vld [vmem:[#allocation17 + $0x1a8] sm:$0xff]
    %v2040 = vld [vmem:[#allocation17 + $0x1b0] sm:$0xff]
    %v2041 = vld [vmem:[#allocation17 + $0x1b8] sm:$0xff]
    %v2042 = vld [vmem:[#allocation17 + $0x1c0] sm:$0xff]
    %v2043 = vld [vmem:[#allocation17 + $0x1c8] sm:$0xff]
    %v2044 = vld [vmem:[#allocation17 + $0x1d0] sm:$0xff]
    %v2045 = vld [vmem:[#allocation17 + $0x1d8] sm:$0xff]
    %v2046 = vld [vmem:[#allocation17 + $0x1e0] sm:$0xff]
    %v2047 = vld [vmem:[#allocation17 + $0x1e8] sm:$0xff]
    %v2048 = vld [vmem:[#allocation17 + $0x1f0] sm:$0xff]
    %v2049 = vld [vmem:[#allocation17 + $0x1f8] sm:$0xff]
    %v2050 = vld [vmem:[#allocation18] sm:$0x3]
    %v2052 = vlaneseq
    %v2053 = vshrl.u32 %v2052, 7
    %v2054 = vsub.s32 0, %v2053
    %v2055 = vrot.slane %v2050, %v2054
    %v2056 = vlaneseq
    %v2057 = vshrl.u32 %v2056, 7
    %v2058 = vsub.s32 1, %v2057
    %v2059 = vrot.slane %v2050, %v2058
    %v2126 = vunpack.c.l.b16 %v1986
    %v2127 = vunpack.c.h.b16 %v1986
    %v2128 = vunpack.c.l.b16 %v1987
    %v2129 = vunpack.c.h.b16 %v1987
    %v2130 = vunpack.c.l.b16 %v1988
    %v2131 = vunpack.c.h.b16 %v1988
    %v2132 = vunpack.c.l.b16 %v1989
    %v2133 = vunpack.c.h.b16 %v1989
    %v2134 = vunpack.c.l.b16 %v1990
    %v2135 = vunpack.c.h.b16 %v1990
    %v2136 = vunpack.c.l.b16 %v1991
    %v2137 = vunpack.c.h.b16 %v1991
    %v2138 = vunpack.c.l.b16 %v1992
    %v2139 = vunpack.c.h.b16 %v1992
    %v2140 = vunpack.c.l.b16 %v1993
    %v2141 = vunpack.c.h.b16 %v1993
    %v2142 = vunpack.c.l.b16 %v1994
    %v2143 = vunpack.c.h.b16 %v1994
    %v2144 = vunpack.c.l.b16 %v1995
    %v2145 = vunpack.c.h.b16 %v1995
    %v2146 = vunpack.c.l.b16 %v1996
    %v2147 = vunpack.c.h.b16 %v1996
    %v2148 = vunpack.c.l.b16 %v1997
    %v2149 = vunpack.c.h.b16 %v1997
    %v2150 = vunpack.c.l.b16 %v1998
    %v2151 = vunpack.c.h.b16 %v1998
    %v2152 = vunpack.c.l.b16 %v1999
    %v2153 = vunpack.c.h.b16 %v1999
    %v2154 = vunpack.c.l.b16 %v2000
    %v2155 = vunpack.c.h.b16 %v2000
    %v2156 = vunpack.c.l.b16 %v2001
    %v2157 = vunpack.c.h.b16 %v2001
    %v2158 = vunpack.c.l.b16 %v2002
    %v2159 = vunpack.c.h.b16 %v2002
    %v2160 = vunpack.c.l.b16 %v2003
    %v2161 = vunpack.c.h.b16 %v2003
    %v2162 = vunpack.c.l.b16 %v2004
    %v2163 = vunpack.c.h.b16 %v2004
    %v2164 = vunpack.c.l.b16 %v2005
    %v2165 = vunpack.c.h.b16 %v2005
    %v2166 = vunpack.c.l.b16 %v2006
    %v2167 = vunpack.c.h.b16 %v2006
    %v2168 = vunpack.c.l.b16 %v2007
    %v2169 = vunpack.c.h.b16 %v2007
    %v2170 = vunpack.c.l.b16 %v2008
    %v2171 = vunpack.c.h.b16 %v2008
    %v2172 = vunpack.c.l.b16 %v2009
    %v2173 = vunpack.c.h.b16 %v2009
    %v2174 = vunpack.c.l.b16 %v2010
    %v2175 = vunpack.c.h.b16 %v2010
    %v2176 = vunpack.c.l.b16 %v2011
    %v2177 = vunpack.c.h.b16 %v2011
    %v2178 = vunpack.c.l.b16 %v2012
    %v2179 = vunpack.c.h.b16 %v2012
    %v2180 = vunpack.c.l.b16 %v2013
    %v2181 = vunpack.c.h.b16 %v2013
    %v2182 = vunpack.c.l.b16 %v2014
    %v2183 = vunpack.c.h.b16 %v2014
    %v2184 = vunpack.c.l.b16 %v2015
    %v2185 = vunpack.c.h.b16 %v2015
    %v2186 = vunpack.c.l.b16 %v2016
    %v2187 = vunpack.c.h.b16 %v2016
    %v2188 = vunpack.c.l.b16 %v2017
    %v2189 = vunpack.c.h.b16 %v2017
    %v2190 = vunpack.c.l.b16 %v2018
    %v2191 = vunpack.c.h.b16 %v2018
    %v2192 = vunpack.c.l.b16 %v2019
    %v2193 = vunpack.c.h.b16 %v2019
    %v2194 = vunpack.c.l.b16 %v2020
    %v2195 = vunpack.c.h.b16 %v2020
    %v2196 = vunpack.c.l.b16 %v2021
    %v2197 = vunpack.c.h.b16 %v2021
    %v2198 = vunpack.c.l.b16 %v2022
    %v2199 = vunpack.c.h.b16 %v2022
    %v2200 = vunpack.c.l.b16 %v2023
    %v2201 = vunpack.c.h.b16 %v2023
    %v2202 = vunpack.c.l.b16 %v2024
    %v2203 = vunpack.c.h.b16 %v2024
    %v2204 = vunpack.c.l.b16 %v2025
    %v2205 = vunpack.c.h.b16 %v2025
    %v2206 = vunpack.c.l.b16 %v2026
    %v2207 = vunpack.c.h.b16 %v2026
    %v2208 = vunpack.c.l.b16 %v2027
    %v2209 = vunpack.c.h.b16 %v2027
    %v2210 = vunpack.c.l.b16 %v2028
    %v2211 = vunpack.c.h.b16 %v2028
    %v2212 = vunpack.c.l.b16 %v2029
    %v2213 = vunpack.c.h.b16 %v2029
    %v2214 = vunpack.c.l.b16 %v2030
    %v2215 = vunpack.c.h.b16 %v2030
    %v2216 = vunpack.c.l.b16 %v2031
    %v2217 = vunpack.c.h.b16 %v2031
    %v2218 = vunpack.c.l.b16 %v2032
    %v2219 = vunpack.c.h.b16 %v2032
    %v2220 = vunpack.c.l.b16 %v2033
    %v2221 = vunpack.c.h.b16 %v2033
    %v2222 = vunpack.c.l.b16 %v2034
    %v2223 = vunpack.c.h.b16 %v2034
    %v2224 = vunpack.c.l.b16 %v2035
    %v2225 = vunpack.c.h.b16 %v2035
    %v2226 = vunpack.c.l.b16 %v2036
    %v2227 = vunpack.c.h.b16 %v2036
    %v2228 = vunpack.c.l.b16 %v2037
    %v2229 = vunpack.c.h.b16 %v2037
    %v2230 = vunpack.c.l.b16 %v2038
    %v2231 = vunpack.c.h.b16 %v2038
    %v2232 = vunpack.c.l.b16 %v2039
    %v2233 = vunpack.c.h.b16 %v2039
    %v2234 = vunpack.c.l.b16 %v2040
    %v2235 = vunpack.c.h.b16 %v2040
    %v2236 = vunpack.c.l.b16 %v2041
    %v2237 = vunpack.c.h.b16 %v2041
    %v2238 = vunpack.c.l.b16 %v2042
    %v2239 = vunpack.c.h.b16 %v2042
    %v2240 = vunpack.c.l.b16 %v2043
    %v2241 = vunpack.c.h.b16 %v2043
    %v2242 = vunpack.c.l.b16 %v2044
    %v2243 = vunpack.c.h.b16 %v2044
    %v2244 = vunpack.c.l.b16 %v2045
    %v2245 = vunpack.c.h.b16 %v2045
    %v2246 = vunpack.c.l.b16 %v2046
    %v2247 = vunpack.c.h.b16 %v2046
    %v2248 = vunpack.c.l.b16 %v2047
    %v2249 = vunpack.c.h.b16 %v2047
    %v2250 = vunpack.c.l.b16 %v2048
    %v2251 = vunpack.c.h.b16 %v2048
    %v2252 = vunpack.c.l.b16 %v2049
    %v2253 = vunpack.c.h.b16 %v2049
    %v2254 = vpack.c.b16 %v2128, %v2126
    %v2255 = vpack.c.b16 %v2129, %v2127
    %v2256 = vpack.c.b16 %v2132, %v2130
    %v2257 = vpack.c.b16 %v2133, %v2131
    %v2258 = vpack.c.b16 %v2136, %v2134
    %v2259 = vpack.c.b16 %v2137, %v2135
    %v2260 = vpack.c.b16 %v2140, %v2138
    %v2261 = vpack.c.b16 %v2141, %v2139
    %v2262 = vpack.c.b16 %v2144, %v2142
    %v2263 = vpack.c.b16 %v2145, %v2143
    %v2264 = vpack.c.b16 %v2148, %v2146
    %v2265 = vpack.c.b16 %v2149, %v2147
    %v2266 = vpack.c.b16 %v2152, %v2150
    %v2267 = vpack.c.b16 %v2153, %v2151
    %v2268 = vpack.c.b16 %v2156, %v2154
    %v2269 = vpack.c.b16 %v2157, %v2155
    %v2270 = vpack.c.b16 %v2160, %v2158
    %v2271 = vpack.c.b16 %v2161, %v2159
    %v2272 = vpack.c.b16 %v2164, %v2162
    %v2273 = vpack.c.b16 %v2165, %v2163
    %v2274 = vpack.c.b16 %v2168, %v2166
    %v2275 = vpack.c.b16 %v2169, %v2167
    %v2276 = vpack.c.b16 %v2172, %v2170
    %v2277 = vpack.c.b16 %v2173, %v2171
    %v2278 = vpack.c.b16 %v2176, %v2174
    %v2279 = vpack.c.b16 %v2177, %v2175
    %v2280 = vpack.c.b16 %v2180, %v2178
    %v2281 = vpack.c.b16 %v2181, %v2179
    %v2282 = vpack.c.b16 %v2184, %v2182
    %v2283 = vpack.c.b16 %v2185, %v2183
    %v2284 = vpack.c.b16 %v2188, %v2186
    %v2285 = vpack.c.b16 %v2189, %v2187
    %v2286 = vpack.c.b16 %v2192, %v2190
    %v2287 = vpack.c.b16 %v2193, %v2191
    %v2288 = vpack.c.b16 %v2196, %v2194
    %v2289 = vpack.c.b16 %v2197, %v2195
    %v2290 = vpack.c.b16 %v2200, %v2198
    %v2291 = vpack.c.b16 %v2201, %v2199
    %v2292 = vpack.c.b16 %v2204, %v2202
    %v2293 = vpack.c.b16 %v2205, %v2203
    %v2294 = vpack.c.b16 %v2208, %v2206
    %v2295 = vpack.c.b16 %v2209, %v2207
    %v2296 = vpack.c.b16 %v2212, %v2210
    %v2297 = vpack.c.b16 %v2213, %v2211
    %v2298 = vpack.c.b16 %v2216, %v2214
    %v2299 = vpack.c.b16 %v2217, %v2215
    %v2300 = vpack.c.b16 %v2220, %v2218
    %v2301 = vpack.c.b16 %v2221, %v2219
    %v2302 = vpack.c.b16 %v2224, %v2222
    %v2303 = vpack.c.b16 %v2225, %v2223
    %v2304 = vpack.c.b16 %v2228, %v2226
    %v2305 = vpack.c.b16 %v2229, %v2227
    %v2306 = vpack.c.b16 %v2232, %v2230
    %v2307 = vpack.c.b16 %v2233, %v2231
    %v2308 = vpack.c.b16 %v2236, %v2234
    %v2309 = vpack.c.b16 %v2237, %v2235
    %v2310 = vpack.c.b16 %v2240, %v2238
    %v2311 = vpack.c.b16 %v2241, %v2239
    %v2312 = vpack.c.b16 %v2244, %v2242
    %v2313 = vpack.c.b16 %v2245, %v2243
    %v2314 = vpack.c.b16 %v2248, %v2246
    %v2315 = vpack.c.b16 %v2249, %v2247
    %v2316 = vpack.c.b16 %v2252, %v2250
    %v2317 = vpack.c.b16 %v2253, %v2251
    %2382 = vmatprep.subr.bf16.mxu0 %v2255
    %2383 = vmatpush1.bf16.msra.mxu0 %v2254
    %2384 = vmatprep.subr.bf16.mxu0 %v2257
    %2385 = vmatpush1.bf16.msra.mxu0 %v2256
    %2386 = vmatprep.subr.bf16.mxu0 %v2259
    %2387 = vmatpush1.bf16.msra.mxu0 %v2258
    %2388 = vmatprep.subr.bf16.mxu0 %v2261
    %2389 = vmatpush1.bf16.msra.mxu0 %v2260
    %2390 = vmatprep.subr.bf16.mxu0 %v2263
    %2391 = vmatpush1.bf16.msra.mxu0 %v2262
    %2392 = vmatprep.subr.bf16.mxu0 %v2265
    %2393 = vmatpush1.bf16.msra.mxu0 %v2264
    %2394 = vmatprep.subr.bf16.mxu0 %v2267
    %2395 = vmatpush1.bf16.msra.mxu0 %v2266
    %2396 = vmatprep.subr.bf16.mxu0 %v2269
    %2397 = vmatpush1.bf16.msra.mxu0 %v2268
    %2398 = vmatprep.subr.bf16.mxu0 %v2271
    %2399 = vmatpush1.bf16.msra.mxu0 %v2270
    %2400 = vmatprep.subr.bf16.mxu0 %v2273
    %2401 = vmatpush1.bf16.msra.mxu0 %v2272
    %2402 = vmatprep.subr.bf16.mxu0 %v2275
    %2403 = vmatpush1.bf16.msra.mxu0 %v2274
    %2404 = vmatprep.subr.bf16.mxu0 %v2277
    %2405 = vmatpush1.bf16.msra.mxu0 %v2276
    %2406 = vmatprep.subr.bf16.mxu0 %v2279
    %2407 = vmatpush1.bf16.msra.mxu0 %v2278
    %2408 = vmatprep.subr.bf16.mxu0 %v2281
    %2409 = vmatpush1.bf16.msra.mxu0 %v2280
    %2410 = vmatprep.subr.bf16.mxu0 %v2283
    %2411 = vmatpush1.bf16.msra.mxu0 %v2282
    %2412 = vmatprep.subr.bf16.mxu0 %v2285
    %2413 = vmatpush1.bf16.msra.mxu0 %v2284
    %2414 = vmatprep.mubr.bf16.mxu0 %v1983
    %2415 = vmatmul.mubr.bf16.gmra.mrb[0].mxu0 %v1982
    %v2416 = vpop.f32.mrb[0].mxu0
    %v2417 = vadd.f32 %v2055, %v2416
    %v2418 = vpop.f32.mrb[0].mxu0
    %v2419 = vadd.f32 %v2059, %v2418
    %v2420 = vpop.f32.mrb[0].mxu0
    %v2421 = vpop.f32.mrb[0].mxu0
    %2422 = vdwg.mxu0
    %2423 = vmatprep.subr.bf16.mxu0 %v2287
    %2424 = vmatpush1.bf16.msra.mxu0 %v2286
    %2425 = vmatprep.subr.bf16.mxu0 %v2289
    %2426 = vmatpush1.bf16.msra.mxu0 %v2288
    %2427 = vmatprep.subr.bf16.mxu0 %v2291
    %2428 = vmatpush1.bf16.msra.mxu0 %v2290
    %2429 = vmatprep.subr.bf16.mxu0 %v2293
    %2430 = vmatpush1.bf16.msra.mxu0 %v2292
    %2431 = vmatprep.subr.bf16.mxu0 %v2295
    %2432 = vmatpush1.bf16.msra.mxu0 %v2294
    %2433 = vmatprep.subr.bf16.mxu0 %v2297
    %2434 = vmatpush1.bf16.msra.mxu0 %v2296
    %2435 = vmatprep.subr.bf16.mxu0 %v2299
    %2436 = vmatpush1.bf16.msra.mxu0 %v2298
    %2437 = vmatprep.subr.bf16.mxu0 %v2301
    %2438 = vmatpush1.bf16.msra.mxu0 %v2300
    %2439 = vmatprep.subr.bf16.mxu0 %v2303
    %2440 = vmatpush1.bf16.msra.mxu0 %v2302
    %2441 = vmatprep.subr.bf16.mxu0 %v2305
    %2442 = vmatpush1.bf16.msra.mxu0 %v2304
    %2443 = vmatprep.subr.bf16.mxu0 %v2307
    %2444 = vmatpush1.bf16.msra.mxu0 %v2306
    %2445 = vmatprep.subr.bf16.mxu0 %v2309
    %2446 = vmatpush1.bf16.msra.mxu0 %v2308
    %2447 = vmatprep.subr.bf16.mxu0 %v2311
    %2448 = vmatpush1.bf16.msra.mxu0 %v2310
    %2449 = vmatprep.subr.bf16.mxu0 %v2313
    %2450 = vmatpush1.bf16.msra.mxu0 %v2312
    %2451 = vmatprep.subr.bf16.mxu0 %v2315
    %2452 = vmatpush1.bf16.msra.mxu0 %v2314
    %2453 = vmatprep.subr.bf16.mxu0 %v2317
    %2454 = vmatpush1.bf16.msra.mxu0 %v2316
    %2455 = vmatprep.mubr.bf16.mxu0 %v1985
    %2456 = vmatmul.mubr.bf16.gmra.mrb[0].mxu0 %v1984
    %v2457 = vpop.f32.mrb[0].mxu0
    %v2458 = vadd.f32 %v2417, %v2457
    %v2459 = vpop.f32.mrb[0].mxu0
    %v2460 = vadd.f32 %v2419, %v2459
    %v2461 = vpop.f32.mrb[0].mxu0
    %v2462 = vpop.f32.mrb[0].mxu0
    %2463 = vdwg.mxu0
    %v2464 = vrot.slane %v2458, 4
    %v2465 = vadd.f32 %v2458, %v2464
    %v2466 = vrot.slane %v2465, 2
    %v2467 = vadd.f32 %v2465, %v2466
    %v2468 = vrot.slane %v2467, 1
    %v2469 = vadd.f32 %v2467, %v2468
    %v2470 = vrot.slane %v2460, 4
    %v2471 = vadd.f32 %v2460, %v2470
    %v2472 = vrot.slane %v2471, 2
    %v2473 = vadd.f32 %v2471, %v2472
    %v2474 = vrot.slane %v2473, 1
    %v2475 = vadd.f32 %v2473, %v2474
    %v2476 = vmul.f32 %v2469, %v656
    %v2477 = vmul.f32 %v2475, %v656
    %v2478 = vsub.f32 %v2458, %v2476
    %v2479 = vsub.f32 %v2460, %v2477
    %v2480 = vmul.f32 %v2478, %v2478
    %v2481 = vmul.f32 %v2479, %v2479
    %v2482 = vrot.slane %v2480, 4
    %v2483 = vadd.f32 %v2480, %v2482
    %v2484 = vrot.slane %v2483, 2
    %v2485 = vadd.f32 %v2483, %v2484
    %v2486 = vrot.slane %v2485, 1
    %v2487 = vadd.f32 %v2485, %v2486
    %v2488 = vrot.slane %v2481, 4
    %v2489 = vadd.f32 %v2481, %v2488
    %v2490 = vrot.slane %v2489, 2
    %v2491 = vadd.f32 %v2489, %v2490
    %v2492 = vrot.slane %v2491, 1
    %v2493 = vadd.f32 %v2491, %v2492
    %v2494 = vmul.f32 %v2487, %v656
    %v2495 = vmul.f32 %v2493, %v656
    %v2496 = vadd.f32 %v2494, 1e-05
    %v2497 = vadd.f32 %v2495, 1e-05
    %v2498 = vrsqrt.pop %v2496
    %v2499 = vrsqrt.pop %v2497
    %v2500 = vmul.f32 %v2478, %v2498
    %v2501 = vmul.f32 %v2479, %v2499
    %v2502 = vld [vmem:[#allocation20] sm:$0x3]
    %v2504 = vlaneseq
    %v2505 = vshrl.u32 %v2504, 7
    %v2506 = vsub.s32 0, %v2505
    %v2507 = vrot.slane %v2502, %v2506
    %v2508 = vlaneseq
    %v2509 = vshrl.u32 %v2508, 7
    %v2510 = vsub.s32 1, %v2509
    %v2511 = vrot.slane %v2502, %v2510
    %v2514 = vmul.f32 %v2500, %v2507
    %v2515 = vmul.f32 %v2501, %v2511
    %v2516 = vld [vmem:[#allocation21] sm:$0x3]
    %v2518 = vlaneseq
    %v2519 = vshrl.u32 %v2518, 7
    %v2520 = vsub.s32 0, %v2519
    %v2521 = vrot.slane %v2516, %v2520
    %v2522 = vlaneseq
    %v2523 = vshrl.u32 %v2522, 7
    %v2524 = vsub.s32 1, %v2523
    %v2525 = vrot.slane %v2516, %v2524
    %v2528 = vadd.f32 %v2514, %v2521
    %v2529 = vadd.f32 %v2515, %v2525
    %vm2530 = vcmp.gt.f32.partialorder %v2528, 0.0
    %vm2531 = vcmp.gt.f32.partialorder %v2529, 0.0
    %v2532 = vmul.f32 %v2528, 0.01
    %v2533 = vmul.f32 %v2529, 0.01
    %v2534 = vsel %vm2530, %v2528, %v2532
    %v2535 = vsel %vm2531, %v2529, %v2533
    %v2536 = vmul.u32 %v774, 256
    %v2537 = vadd.s32 %v2536, %v776
    %v2538 = vadd.s32 %v2536, %v777
    %s2539 = sadd.s32 %s473, 1013904242
    %v2540 = vstv %s2539
    %v2541 = vxor.u32 %v2537, %v2540
    %v2542 = vxor.u32 %v2538, %v2540
    %v2543 = vshrl.u32 %v2541, 16
    %v2544 = vshrl.u32 %v2542, 16
    %v2545 = vxor.u32 %v2541, %v2543
    %v2546 = vxor.u32 %v2542, %v2544
    %v2547 = vmul.u32 %v2545, 2146121005
    %v2548 = vmul.u32 %v2546, 2146121005
    %v2549 = vshrl.u32 %v2547, 15
    %v2550 = vshrl.u32 %v2548, 15
    %v2551 = vxor.u32 %v2547, %v2549
    %v2552 = vxor.u32 %v2548, %v2550
    %v2553 = vmul.u32 %v2551, 2221713035
    %v2554 = vmul.u32 %v2552, 2221713035
    %v2555 = vshrl.u32 %v2553, 16
    %v2556 = vshrl.u32 %v2554, 16
    %v2557 = vxor.u32 %v2553, %v2555
    %v2558 = vxor.u32 %v2554, %v2556
    %vm2559 = vcmp.ge.u32.totalorder %v2557, 1073741824
    %vm2560 = vcmp.ge.u32.totalorder %v2558, 1073741824
    %v2561 = vmul.f32 %v2534, 1.3333334
    %v2562 = vmul.f32 %v2535, 1.3333334
    %v2563 = vsel %vm2559, %v2561, 0.0
    %v2564 = vsel %vm2560, %v2562, 0.0
    %v2565 = vpack.c.bf16 %v2563, %v2563
    %v2566 = vpack.c.bf16 %v2564, %v2564
    %v2567 = vld [vmem:[#allocation23] sm:$0xff]
    %v2568 = vld [vmem:[#allocation23 + $0x8] sm:$0xff]
    %v2569 = vld [vmem:[#allocation23 + $0x10] sm:$0xff]
    %v2570 = vld [vmem:[#allocation23 + $0x18] sm:$0xff]
    %v2571 = vld [vmem:[#allocation23 + $0x20] sm:$0xff]
    %v2572 = vld [vmem:[#allocation23 + $0x28] sm:$0xff]
    %v2573 = vld [vmem:[#allocation23 + $0x30] sm:$0xff]
    %v2574 = vld [vmem:[#allocation23 + $0x38] sm:$0xff]
    %v2575 = vld [vmem:[#allocation23 + $0x40] sm:$0xff]
    %v2576 = vld [vmem:[#allocation23 + $0x48] sm:$0xff]
    %v2577 = vld [vmem:[#allocation23 + $0x50] sm:$0xff]
    %v2578 = vld [vmem:[#allocation23 + $0x58] sm:$0xff]
    %v2579 = vld [vmem:[#allocation23 + $0x60] sm:$0xff]
    %v2580 = vld [vmem:[#allocation23 + $0x68] sm:$0xff]
    %v2581 = vld [vmem:[#allocation23 + $0x70] sm:$0xff]
    %v2582 = vld [vmem:[#allocation23 + $0x78] sm:$0xff]
    %v2583 = vld [vmem:[#allocation23 + $0x80] sm:$0xff]
    %v2584 = vld [vmem:[#allocation23 + $0x88] sm:$0xff]
    %v2585 = vld [vmem:[#allocation23 + $0x90] sm:$0xff]
    %v2586 = vld [vmem:[#allocation23 + $0x98] sm:$0xff]
    %v2587 = vld [vmem:[#allocation23 + $0xa0] sm:$0xff]
    %v2588 = vld [vmem:[#allocation23 + $0xa8] sm:$0xff]
    %v2589 = vld [vmem:[#allocation23 + $0xb0] sm:$0xff]
    %v2590 = vld [vmem:[#allocation23 + $0xb8] sm:$0xff]
    %v2591 = vld [vmem:[#allocation23 + $0xc0] sm:$0xff]
    %v2592 = vld [vmem:[#allocation23 + $0xc8] sm:$0xff]
    %v2593 = vld [vmem:[#allocation23 + $0xd0] sm:$0xff]
    %v2594 = vld [vmem:[#allocation23 + $0xd8] sm:$0xff]
    %v2595 = vld [vmem:[#allocation23 + $0xe0] sm:$0xff]
    %v2596 = vld [vmem:[#allocation23 + $0xe8] sm:$0xff]
    %v2597 = vld [vmem:[#allocation23 + $0xf0] sm:$0xff]
    %v2598 = vld [vmem:[#allocation23 + $0xf8] sm:$0xff]
    %v2599 = vld [vmem:[#allocation24] sm:$0x3]
    %v2601 = vlaneseq
    %v2602 = vshrl.u32 %v2601, 7
    %v2603 = vsub.s32 0, %v2602
    %v2604 = vrot.slane %v2599, %v2603
    %v2605 = vlaneseq
    %v2606 = vshrl.u32 %v2605, 7
    %v2607 = vsub.s32 1, %v2606
    %v2608 = vrot.slane %v2599, %v2607
    %v2643 = vunpack.c.l.b16 %v2567
    %v2644 = vunpack.c.h.b16 %v2567
    %v2645 = vunpack.c.l.b16 %v2568
    %v2646 = vunpack.c.h.b16 %v2568
    %v2647 = vunpack.c.l.b16 %v2569
    %v2648 = vunpack.c.h.b16 %v2569
    %v2649 = vunpack.c.l.b16 %v2570
    %v2650 = vunpack.c.h.b16 %v2570
    %v2651 = vunpack.c.l.b16 %v2571
    %v2652 = vunpack.c.h.b16 %v2571
    %v2653 = vunpack.c.l.b16 %v2572
    %v2654 = vunpack.c.h.b16 %v2572
    %v2655 = vunpack.c.l.b16 %v2573
    %v2656 = vunpack.c.h.b16 %v2573
    %v2657 = vunpack.c.l.b16 %v2574
    %v2658 = vunpack.c.h.b16 %v2574
    %v2659 = vunpack.c.l.b16 %v2575
    %v2660 = vunpack.c.h.b16 %v2575
    %v2661 = vunpack.c.l.b16 %v2576
    %v2662 = vunpack.c.h.b16 %v2576
    %v2663 = vunpack.c.l.b16 %v2577
    %v2664 = vunpack.c.h.b16 %v2577
    %v2665 = vunpack.c.l.b16 %v2578
    %v2666 = vunpack.c.h.b16 %v2578
    %v2667 = vunpack.c.l.b16 %v2579
    %v2668 = vunpack.c.h.b16 %v2579
    %v2669 = vunpack.c.l.b16 %v2580
    %v2670 = vunpack.c.h.b16 %v2580
    %v2671 = vunpack.c.l.b16 %v2581
    %v2672 = vunpack.c.h.b16 %v2581
    %v2673 = vunpack.c.l.b16 %v2582
    %v2674 = vunpack.c.h.b16 %v2582
    %v2675 = vunpack.c.l.b16 %v2583
    %v2676 = vunpack.c.h.b16 %v2583
    %v2677 = vunpack.c.l.b16 %v2584
    %v2678 = vunpack.c.h.b16 %v2584
    %v2679 = vunpack.c.l.b16 %v2585
    %v2680 = vunpack.c.h.b16 %v2585
    %v2681 = vunpack.c.l.b16 %v2586
    %v2682 = vunpack.c.h.b16 %v2586
    %v2683 = vunpack.c.l.b16 %v2587
    %v2684 = vunpack.c.h.b16 %v2587
    %v2685 = vunpack.c.l.b16 %v2588
    %v2686 = vunpack.c.h.b16 %v2588
    %v2687 = vunpack.c.l.b16 %v2589
    %v2688 = vunpack.c.h.b16 %v2589
    %v2689 = vunpack.c.l.b16 %v2590
    %v2690 = vunpack.c.h.b16 %v2590
    %v2691 = vunpack.c.l.b16 %v2591
    %v2692 = vunpack.c.h.b16 %v2591
    %v2693 = vunpack.c.l.b16 %v2592
    %v2694 = vunpack.c.h.b16 %v2592
    %v2695 = vunpack.c.l.b16 %v2593
    %v2696 = vunpack.c.h.b16 %v2593
    %v2697 = vunpack.c.l.b16 %v2594
    %v2698 = vunpack.c.h.b16 %v2594
    %v2699 = vunpack.c.l.b16 %v2595
    %v2700 = vunpack.c.h.b16 %v2595
    %v2701 = vunpack.c.l.b16 %v2596
    %v2702 = vunpack.c.h.b16 %v2596
    %v2703 = vunpack.c.l.b16 %v2597
    %v2704 = vunpack.c.h.b16 %v2597
    %v2705 = vunpack.c.l.b16 %v2598
    %v2706 = vunpack.c.h.b16 %v2598
    %v2707 = vpack.c.b16 %v2645, %v2643
    %v2708 = vpack.c.b16 %v2646, %v2644
    %v2709 = vpack.c.b16 %v2649, %v2647
    %v2710 = vpack.c.b16 %v2650, %v2648
    %v2711 = vpack.c.b16 %v2653, %v2651
    %v2712 = vpack.c.b16 %v2654, %v2652
    %v2713 = vpack.c.b16 %v2657, %v2655
    %v2714 = vpack.c.b16 %v2658, %v2656
    %v2715 = vpack.c.b16 %v2661, %v2659
    %v2716 = vpack.c.b16 %v2662, %v2660
    %v2717 = vpack.c.b16 %v2665, %v2663
    %v2718 = vpack.c.b16 %v2666, %v2664
    %v2719 = vpack.c.b16 %v2669, %v2667
    %v2720 = vpack.c.b16 %v2670, %v2668
    %v2721 = vpack.c.b16 %v2673, %v2671
    %v2722 = vpack.c.b16 %v2674, %v2672
    %v2723 = vpack.c.b16 %v2677, %v2675
    %v2724 = vpack.c.b16 %v2678, %v2676
    %v2725 = vpack.c.b16 %v2681, %v2679
    %v2726 = vpack.c.b16 %v2682, %v2680
    %v2727 = vpack.c.b16 %v2685, %v2683
    %v2728 = vpack.c.b16 %v2686, %v2684
    %v2729 = vpack.c.b16 %v2689, %v2687
    %v2730 = vpack.c.b16 %v2690, %v2688
    %v2731 = vpack.c.b16 %v2693, %v2691
    %v2732 = vpack.c.b16 %v2694, %v2692
    %v2733 = vpack.c.b16 %v2697, %v2695
    %v2734 = vpack.c.b16 %v2698, %v2696
    %v2735 = vpack.c.b16 %v2701, %v2699
    %v2736 = vpack.c.b16 %v2702, %v2700
    %v2737 = vpack.c.b16 %v2705, %v2703
    %v2738 = vpack.c.b16 %v2706, %v2704
    %2771 = vmatprep.subr.bf16.mxu0 %v2708
    %2772 = vmatpush1.bf16.msra.mxu0 %v2707
    %2773 = vmatprep.subr.bf16.mxu0 %v2710
    %2774 = vmatpush1.bf16.msra.mxu0 %v2709
    %2775 = vmatprep.subr.bf16.mxu0 %v2712
    %2776 = vmatpush1.bf16.msra.mxu0 %v2711
    %2777 = vmatprep.subr.bf16.mxu0 %v2714
    %2778 = vmatpush1.bf16.msra.mxu0 %v2713
    %2779 = vmatprep.subr.bf16.mxu0 %v2716
    %2780 = vmatpush1.bf16.msra.mxu0 %v2715
    %2781 = vmatprep.subr.bf16.mxu0 %v2718
    %2782 = vmatpush1.bf16.msra.mxu0 %v2717
    %2783 = vmatprep.subr.bf16.mxu0 %v2720
    %2784 = vmatpush1.bf16.msra.mxu0 %v2719
    %2785 = vmatprep.subr.bf16.mxu0 %v2722
    %2786 = vmatpush1.bf16.msra.mxu0 %v2721
    %2787 = vmatprep.subr.bf16.mxu0 %v2724
    %2788 = vmatpush1.bf16.msra.mxu0 %v2723
    %2789 = vmatprep.subr.bf16.mxu0 %v2726
    %2790 = vmatpush1.bf16.msra.mxu0 %v2725
    %2791 = vmatprep.subr.bf16.mxu0 %v2728
    %2792 = vmatpush1.bf16.msra.mxu0 %v2727
    %2793 = vmatprep.subr.bf16.mxu0 %v2730
    %2794 = vmatpush1.bf16.msra.mxu0 %v2729
    %2795 = vmatprep.subr.bf16.mxu0 %v2732
    %2796 = vmatpush1.bf16.msra.mxu0 %v2731
    %2797 = vmatprep.subr.bf16.mxu0 %v2734
    %2798 = vmatpush1.bf16.msra.mxu0 %v2733
    %2799 = vmatprep.subr.bf16.mxu0 %v2736
    %2800 = vmatpush1.bf16.msra.mxu0 %v2735
    %2801 = vmatprep.subr.bf16.mxu0 %v2738
    %2802 = vmatpush1.bf16.msra.mxu0 %v2737
    %2803 = vmatprep.mubr.bf16.mxu0 %v2566
    %2804 = vmatmul.mubr.bf16.gmra.mrb[0].mxu0 %v2565
    %v2805 = vpop.f32.mrb[0].mxu0
    %v2806 = vadd.f32 %v2604, %v2805
    %v2807 = vpop.f32.mrb[0].mxu0
    %v2808 = vadd.f32 %v2608, %v2807
    %v2809 = vpop.f32.mrb[0].mxu0
    %v2810 = vpop.f32.mrb[0].mxu0
    %2811 = vdwg.mxu0
    %v2812 = vrot.slane %v2806, 4
    %v2813 = vadd.f32 %v2806, %v2812
    %v2814 = vrot.slane %v2813, 2
    %v2815 = vadd.f32 %v2813, %v2814
    %v2816 = vrot.slane %v2815, 1
    %v2817 = vadd.f32 %v2815, %v2816
    %v2818 = vrot.slane %v2808, 4
    %v2819 = vadd.f32 %v2808, %v2818
    %v2820 = vrot.slane %v2819, 2
    %v2821 = vadd.f32 %v2819, %v2820
    %v2822 = vrot.slane %v2821, 1
    %v2823 = vadd.f32 %v2821, %v2822
    %v2824 = vmul.f32 %v2817, %v656
    %v2825 = vmul.f32 %v2823, %v656
    %v2826 = vsub.f32 %v2806, %v2824
    %v2827 = vsub.f32 %v2808, %v2825
    %v2828 = vmul.f32 %v2826, %v2826
    %v2829 = vmul.f32 %v2827, %v2827
    %v2830 = vrot.slane %v2828, 4
    %v2831 = vadd.f32 %v2828, %v2830
    %v2832 = vrot.slane %v2831, 2
    %v2833 = vadd.f32 %v2831, %v2832
    %v2834 = vrot.slane %v2833, 1
    %v2835 = vadd.f32 %v2833, %v2834
    %v2836 = vrot.slane %v2829, 4
    %v2837 = vadd.f32 %v2829, %v2836
    %v2838 = vrot.slane %v2837, 2
    %v2839 = vadd.f32 %v2837, %v2838
    %v2840 = vrot.slane %v2839, 1
    %v2841 = vadd.f32 %v2839, %v2840
    %v2842 = vmul.f32 %v2835, %v656
    %v2843 = vmul.f32 %v2841, %v656
    %v2844 = vadd.f32 %v2842, 1e-05
    %v2845 = vadd.f32 %v2843, 1e-05
    %v2846 = vrsqrt.pop %v2844
    %v2847 = vrsqrt.pop %v2845
    %v2848 = vmul.f32 %v2826, %v2846
    %v2849 = vmul.f32 %v2827, %v2847
    %v2850 = vld [vmem:[#allocation26] sm:$0x3]
    %v2852 = vlaneseq
    %v2853 = vshrl.u32 %v2852, 7
    %v2854 = vsub.s32 0, %v2853
    %v2855 = vrot.slane %v2850, %v2854
    %v2856 = vlaneseq
    %v2857 = vshrl.u32 %v2856, 7
    %v2858 = vsub.s32 1, %v2857
    %v2859 = vrot.slane %v2850, %v2858
    %v2862 = vmul.f32 %v2848, %v2855
    %v2863 = vmul.f32 %v2849, %v2859
    %v2864 = vld [vmem:[#allocation27] sm:$0x3]
    %v2866 = vlaneseq
    %v2867 = vshrl.u32 %v2866, 7
    %v2868 = vsub.s32 0, %v2867
    %v2869 = vrot.slane %v2864, %v2868
    %v2870 = vlaneseq
    %v2871 = vshrl.u32 %v2870, 7
    %v2872 = vsub.s32 1, %v2871
    %v2873 = vrot.slane %v2864, %v2872
    %v2876 = vadd.f32 %v2862, %v2869
    %v2877 = vadd.f32 %v2863, %v2873
    %vm2878 = vcmp.gt.f32.partialorder %v2876, 0.0
    %vm2879 = vcmp.gt.f32.partialorder %v2877, 0.0
    %v2880 = vmul.f32 %v2876, 0.01
    %v2881 = vmul.f32 %v2877, 0.01
    %v2882 = vsel %vm2878, %v2876, %v2880
    %v2883 = vsel %vm2879, %v2877, %v2881
    %s2884 = sadd.s32 %s473, 3668340011
    %v2885 = vstv %s2884
    %v2886 = vxor.u32 %v2537, %v2885
    %v2887 = vxor.u32 %v2538, %v2885
    %v2888 = vshrl.u32 %v2886, 16
    %v2889 = vshrl.u32 %v2887, 16
    %v2890 = vxor.u32 %v2886, %v2888
    %v2891 = vxor.u32 %v2887, %v2889
    %v2892 = vmul.u32 %v2890, 2146121005
    %v2893 = vmul.u32 %v2891, 2146121005
    %v2894 = vshrl.u32 %v2892, 15
    %v2895 = vshrl.u32 %v2893, 15
    %v2896 = vxor.u32 %v2892, %v2894
    %v2897 = vxor.u32 %v2893, %v2895
    %v2898 = vmul.u32 %v2896, 2221713035
    %v2899 = vmul.u32 %v2897, 2221713035
    %v2900 = vshrl.u32 %v2898, 16
    %v2901 = vshrl.u32 %v2899, 16
    %v2902 = vxor.u32 %v2898, %v2900
    %v2903 = vxor.u32 %v2899, %v2901
    %vm2904 = vcmp.ge.u32.totalorder %v2902, 1073741824
    %vm2905 = vcmp.ge.u32.totalorder %v2903, 1073741824
    %v2906 = vmul.f32 %v2882, 1.3333334
    %v2907 = vmul.f32 %v2883, 1.3333334
    %v2908 = vsel %vm2904, %v2906, 0.0
    %v2909 = vsel %vm2905, %v2907, 0.0
    %v2910 = vpack.c.bf16 %v2908, %v2908
    %v2911 = vpack.c.bf16 %v2909, %v2909
    %v2912 = vld [vmem:[%s37] sm:$0xf]
    %v2913 = vld [vmem:[%s37 + $0x4] sm:$0xf]
    %v2914 = vld [vmem:[%s37 + $0x8] sm:$0xf]
    %v2915 = vld [vmem:[%s37 + $0xc] sm:$0xf]
    %v2916 = vld [vmem:[%s37 + $0x10] sm:$0xf]
    %v2917 = vld [vmem:[%s37 + $0x14] sm:$0xf]
    %v2918 = vld [vmem:[%s37 + $0x18] sm:$0xf]
    %v2919 = vld [vmem:[%s37 + $0x1c] sm:$0xf]
    %v2920 = vld [vmem:[%s37 + $0x20] sm:$0xf]
    %v2921 = vld [vmem:[%s37 + $0x24] sm:$0xf]
    %v2922 = vld [vmem:[%s37 + $0x28] sm:$0xf]
    %v2923 = vld [vmem:[%s37 + $0x2c] sm:$0xf]
    %v2924 = vld [vmem:[%s37 + $0x30] sm:$0xf]
    %v2925 = vld [vmem:[%s37 + $0x34] sm:$0xf]
    %v2926 = vld [vmem:[%s37 + $0x38] sm:$0xf]
    %v2927 = vld [vmem:[%s37 + $0x3c] sm:$0xf]
    %v2928 = vld [vmem:[%s37 + $0x40] sm:$0xf]
    %v2929 = vld [vmem:[%s37 + $0x44] sm:$0xf]
    %v2930 = vld [vmem:[%s37 + $0x48] sm:$0xf]
    %v2931 = vld [vmem:[%s37 + $0x4c] sm:$0xf]
    %v2932 = vld [vmem:[%s37 + $0x50] sm:$0xf]
    %v2933 = vld [vmem:[%s37 + $0x54] sm:$0xf]
    %v2934 = vld [vmem:[%s37 + $0x58] sm:$0xf]
    %v2935 = vld [vmem:[%s37 + $0x5c] sm:$0xf]
    %v2936 = vld [vmem:[%s37 + $0x60] sm:$0xf]
    %v2937 = vld [vmem:[%s37 + $0x64] sm:$0xf]
    %v2938 = vld [vmem:[%s37 + $0x68] sm:$0xf]
    %v2939 = vld [vmem:[%s37 + $0x6c] sm:$0xf]
    %v2940 = vld [vmem:[%s37 + $0x70] sm:$0xf]
    %v2941 = vld [vmem:[%s37 + $0x74] sm:$0xf]
    %v2942 = vld [vmem:[%s37 + $0x78] sm:$0xf]
    %v2943 = vld [vmem:[%s37 + $0x7c] sm:$0xf]
    %v2944 = vld [vmem:[%s39] sm:$0x1]
    %v2946 = vlaneseq
    %v2947 = vshrl.u32 %v2946, 7
    %v2948 = vsub.s32 0, %v2947
    %v2949 = vrot.slane %v2944, %v2948
    %v2983 = vunpack.c.l.b16 %v2912
    %v2984 = vunpack.c.l.b16 %v2913
    %v2985 = vunpack.c.l.b16 %v2914
    %v2986 = vunpack.c.l.b16 %v2915
    %v2987 = vunpack.c.l.b16 %v2916
    %v2988 = vunpack.c.l.b16 %v2917
    %v2989 = vunpack.c.l.b16 %v2918
    %v2990 = vunpack.c.l.b16 %v2919
    %v2991 = vunpack.c.l.b16 %v2920
    %v2992 = vunpack.c.l.b16 %v2921
    %v2993 = vunpack.c.l.b16 %v2922
    %v2994 = vunpack.c.l.b16 %v2923
    %v2995 = vunpack.c.l.b16 %v2924
    %v2996 = vunpack.c.l.b16 %v2925
    %v2997 = vunpack.c.l.b16 %v2926
    %v2998 = vunpack.c.l.b16 %v2927
    %v2999 = vunpack.c.l.b16 %v2928
    %v3000 = vunpack.c.l.b16 %v2929
    %v3001 = vunpack.c.l.b16 %v2930
    %v3002 = vunpack.c.l.b16 %v2931
    %v3003 = vunpack.c.l.b16 %v2932
    %v3004 = vunpack.c.l.b16 %v2933
    %v3005 = vunpack.c.l.b16 %v2934
    %v3006 = vunpack.c.l.b16 %v2935
    %v3007 = vunpack.c.l.b16 %v2936
    %v3008 = vunpack.c.l.b16 %v2937
    %v3009 = vunpack.c.l.b16 %v2938
    %v3010 = vunpack.c.l.b16 %v2939
    %v3011 = vunpack.c.l.b16 %v2940
    %v3012 = vunpack.c.l.b16 %v2941
    %v3013 = vunpack.c.l.b16 %v2942
    %v3014 = vunpack.c.l.b16 %v2943
    %v3015 = vpack.c.b16 %v2984, %v2983
    %v3016 = vpack.c.b16 %v2986, %v2985
    %v3017 = vpack.c.b16 %v2988, %v2987
    %v3018 = vpack.c.b16 %v2990, %v2989
    %v3019 = vpack.c.b16 %v2992, %v2991
    %v3020 = vpack.c.b16 %v2994, %v2993
    %v3021 = vpack.c.b16 %v2996, %v2995
    %v3022 = vpack.c.b16 %v2998, %v2997
    %v3023 = vpack.c.b16 %v3000, %v2999
    %v3024 = vpack.c.b16 %v3002, %v3001
    %v3025 = vpack.c.b16 %v3004, %v3003
    %v3026 = vpack.c.b16 %v3006, %v3005
    %v3027 = vpack.c.b16 %v3008, %v3007
    %v3028 = vpack.c.b16 %v3010, %v3009
    %v3029 = vpack.c.b16 %v3012, %v3011
    %v3030 = vpack.c.b16 %v3014, %v3013
    %3047 = vmatprep.subr.bf16.mxu0 0
    %3048 = vmatpush1.bf16.msra.mxu0 %v3015
    %3049 = vmatprep.subr.bf16.mxu0 0
    %3050 = vmatpush1.bf16.msra.mxu0 %v3016
    %3051 = vmatprep.subr.bf16.mxu0 0
    %3052 = vmatpush1.bf16.msra.mxu0 %v3017
    %3053 = vmatprep.subr.bf16.mxu0 0
    %3054 = vmatpush1.bf16.msra.mxu0 %v3018
    %3055 = vmatprep.subr.bf16.mxu0 0
    %3056 = vmatpush1.bf16.msra.mxu0 %v3019
    %3057 = vmatprep.subr.bf16.mxu0 0
    %3058 = vmatpush1.bf16.msra.mxu0 %v3020
    %3059 = vmatprep.subr.bf16.mxu0 0
    %3060 = vmatpush1.bf16.msra.mxu0 %v3021
    %3061 = vmatprep.subr.bf16.mxu0 0
    %3062 = vmatpush1.bf16.msra.mxu0 %v3022
    %3063 = vmatprep.subr.bf16.mxu0 0
    %3064 = vmatpush1.bf16.msra.mxu0 %v3023
    %3065 = vmatprep.subr.bf16.mxu0 0
    %3066 = vmatpush1.bf16.msra.mxu0 %v3024
    %3067 = vmatprep.subr.bf16.mxu0 0
    %3068 = vmatpush1.bf16.msra.mxu0 %v3025
    %3069 = vmatprep.subr.bf16.mxu0 0
    %3070 = vmatpush1.bf16.msra.mxu0 %v3026
    %3071 = vmatprep.subr.bf16.mxu0 0
    %3072 = vmatpush1.bf16.msra.mxu0 %v3027
    %3073 = vmatprep.subr.bf16.mxu0 0
    %3074 = vmatpush1.bf16.msra.mxu0 %v3028
    %3075 = vmatprep.subr.bf16.mxu0 0
    %3076 = vmatpush1.bf16.msra.mxu0 %v3029
    %3077 = vmatprep.subr.bf16.mxu0 0
    %3078 = vmatpush1.bf16.msra.mxu0 %v3030
    %3079 = vmatprep.mubr.bf16.mxu0 %v2911
    %3080 = vmatmul.mubr.bf16.gmra.mrb[0].mxu0 %v2910
    %v3081 = vpop.f32.mrb[0].mxu0
    %v3082 = vadd.f32 %v2949, %v3081
    %v3083 = vpop.f32.mrb[0].mxu0
    %v3084 = vpop.f32.mrb[0].mxu0
    %v3085 = vpop.f32.mrb[0].mxu0
    %3086 = vdwg.mxu0
    %v3087 = vrot.slane %v3082, 4
    %v3088 = vadd.f32 %v3082, %v3087
    %v3089 = vrot.slane %v3088, 2
    %v3090 = vadd.f32 %v3088, %v3089
    %v3091 = vrot.slane %v3090, 1
    %v3092 = vadd.f32 %v3090, %v3091
    %v3093 = vmul.f32 %v3092, %v656
    %v3094 = vsub.f32 %v3082, %v3093
    %v3095 = vmul.f32 %v3094, %v3094
    %v3096 = vrot.slane %v3095, 4
    %v3097 = vadd.f32 %v3095, %v3096
    %v3098 = vrot.slane %v3097, 2
    %v3099 = vadd.f32 %v3097, %v3098
    %v3100 = vrot.slane %v3099, 1
    %v3101 = vadd.f32 %v3099, %v3100
    %v3102 = vmul.f32 %v3101, %v656
    %v3103 = vadd.f32 %v3102, 1e-05
    %v3104 = vrsqrt.pop %v3103
    %v3105 = vmul.f32 %v3094, %v3104
    %v3106 = vld [vmem:[#allocation29] sm:$0x1]
    %v3108 = vlaneseq
    %v3109 = vshrl.u32 %v3108, 7
    %v3110 = vsub.s32 0, %v3109
    %v3111 = vrot.slane %v3106, %v3110
    %v3113 = vmul.f32 %v3105, %v3111
    %v3114 = vld [vmem:[#allocation30] sm:$0x1]
    %v3116 = vlaneseq
    %v3117 = vshrl.u32 %v3116, 7
    %v3118 = vsub.s32 0, %v3117
    %v3119 = vrot.slane %v3114, %v3118
    %v3121 = vadd.f32 %v3113, %v3119
    %vm3122 = vcmp.gt.f32.partialorder %v3121, 0.0
    %v3123 = vmul.f32 %v3121, 0.01
    %v3124 = vsel %vm3122, %v3121, %v3123
    %v3125 = vmul.u32 %v774, 128
    %v3126 = vadd.s32 %v3125, %v776
    %s3127 = sadd.s32 %s473, 2027808484
    %v3128 = vstv %s3127
    %v3129 = vxor.u32 %v3126, %v3128
    %v3130 = vshrl.u32 %v3129, 16
    %v3131 = vxor.u32 %v3129, %v3130
    %v3132 = vmul.u32 %v3131, 2146121005
    %v3133 = vshrl.u32 %v3132, 15
    %v3134 = vxor.u32 %v3132, %v3133
    %v3135 = vmul.u32 %v3134, 2221713035
    %v3136 = vshrl.u32 %v3135, 16
    %v3137 = vxor.u32 %v3135, %v3136
    %vm3138 = vcmp.ge.u32.totalorder %v3137, 1073741824
    %v3139 = vmul.f32 %v3124, 1.3333334
    %v3140 = vsel %vm3138, %v3139, 0.0
    %v3141 = vpack.c.bf16 %v3140, %v3140
    %v3142 = vld [vmem:[#allocation32] sm:$0xf]
    %v3143 = vld [vmem:[#allocation32 + $0x4] sm:$0xf]
    %v3144 = vld [vmem:[#allocation32 + $0x8] sm:$0xf]
    %v3145 = vld [vmem:[#allocation32 + $0xc] sm:$0xf]
    %v3146 = vld [vmem:[#allocation32 + $0x10] sm:$0xf]
    %v3147 = vld [vmem:[#allocation32 + $0x14] sm:$0xf]
    %v3148 = vld [vmem:[#allocation32 + $0x18] sm:$0xf]
    %v3149 = vld [vmem:[#allocation32 + $0x1c] sm:$0xf]
    %v3150 = vld [vmem:[#allocation32 + $0x20] sm:$0xf]
    %v3151 = vld [vmem:[#allocation32 + $0x24] sm:$0xf]
    %v3152 = vld [vmem:[#allocation32 + $0x28] sm:$0xf]
    %v3153 = vld [vmem:[#allocation32 + $0x2c] sm:$0xf]
    %v3154 = vld [vmem:[#allocation32 + $0x30] sm:$0xf]
    %v3155 = vld [vmem:[#allocation32 + $0x34] sm:$0xf]
    %v3156 = vld [vmem:[#allocation32 + $0x38] sm:$0xf]
    %v3157 = vld [vmem:[#allocation32 + $0x3c] sm:$0xf]
    %v3158 = vld [vmem:[#allocation33] sm:$0x1]
    %v3160 = vlaneseq
    %v3161 = vshrl.u32 %v3160, 7
    %v3162 = vsub.s32 0, %v3161
    %v3163 = vrot.slane %v3158, %v3162
    %v3181 = vunpack.c.l.b16 %v3142
    %v3182 = vunpack.c.l.b16 %v3143
    %v3183 = vunpack.c.l.b16 %v3144
    %v3184 = vunpack.c.l.b16 %v3145
    %v3185 = vunpack.c.l.b16 %v3146
    %v3186 = vunpack.c.l.b16 %v3147
    %v3187 = vunpack.c.l.b16 %v3148
    %v3188 = vunpack.c.l.b16 %v3149
    %v3189 = vunpack.c.l.b16 %v3150
    %v3190 = vunpack.c.l.b16 %v3151
    %v3191 = vunpack.c.l.b16 %v3152
    %v3192 = vunpack.c.l.b16 %v3153
    %v3193 = vunpack.c.l.b16 %v3154
    %v3194 = vunpack.c.l.b16 %v3155
    %v3195 = vunpack.c.l.b16 %v3156
    %v3196 = vunpack.c.l.b16 %v3157
    %v3197 = vpack.c.b16 %v3182, %v3181
    %v3198 = vpack.c.b16 %v3184, %v3183
    %v3199 = vpack.c.b16 %v3186, %v3185
    %v3200 = vpack.c.b16 %v3188, %v3187
    %v3201 = vpack.c.b16 %v3190, %v3189
    %v3202 = vpack.c.b16 %v3192, %v3191
    %v3203 = vpack.c.b16 %v3194, %v3193
    %v3204 = vpack.c.b16 %v3196, %v3195
    %3213 = vmatprep.subr.bf16.mxu0 0
    %3214 = vmatpush1.bf16.msra.mxu0 %v3197
    %3215 = vmatprep.subr.bf16.mxu0 0
    %3216 = vmatpush1.bf16.msra.mxu0 %v3198
    %3217 = vmatprep.subr.bf16.mxu0 0
    %3218 = vmatpush1.bf16.msra.mxu0 %v3199
    %3219 = vmatprep.subr.bf16.mxu0 0
    %3220 = vmatpush1.bf16.msra.mxu0 %v3200
    %3221 = vmatprep.subr.bf16.mxu0 0
    %3222 = vmatpush1.bf16.msra.mxu0 %v3201
    %3223 = vmatprep.subr.bf16.mxu0 0
    %3224 = vmatpush1.bf16.msra.mxu0 %v3202
    %3225 = vmatprep.subr.bf16.mxu0 0
    %3226 = vmatpush1.bf16.msra.mxu0 %v3203
    %3227 = vmatprep.subr.bf16.mxu0 0
    %3228 = vmatpush1.bf16.msra.mxu0 %v3204
    %3229 = vmatprep.subr.bf16.mxu0 0
    %3230 = vmatpush1.bf16.msra.mxu0 0
    %3231 = vmatprep.subr.bf16.mxu0 0
    %3232 = vmatpush1.bf16.msra.mxu0 0
    %3233 = vmatprep.subr.bf16.mxu0 0
    %3234 = vmatpush1.bf16.msra.mxu0 0
    %3235 = vmatprep.subr.bf16.mxu0 0
    %3236 = vmatpush1.bf16.msra.mxu0 0
    %3237 = vmatprep.subr.bf16.mxu0 0
    %3238 = vmatpush1.bf16.msra.mxu0 0
    %3239 = vmatprep.subr.bf16.mxu0 0
    %3240 = vmatpush1.bf16.msra.mxu0 0
    %3241 = vmatprep.subr.bf16.mxu0 0
    %3242 = vmatpush1.bf16.msra.mxu0 0
    %3243 = vmatprep.subr.bf16.mxu0 0
    %3244 = vmatpush1.bf16.msra.mxu0 0
    %3245 = vmatprep.mubr.bf16.mxu0 0
    %3246 = vmatmul.mubr.bf16.gmra.mrb[0].mxu0 %v3141
    %v3247 = vpop.f32.mrb[0].mxu0
    %v3248 = vadd.f32 %v3163, %v3247
    %v3249 = vpop.f32.mrb[0].mxu0
    %v3250 = vpop.f32.mrb[0].mxu0
    %v3251 = vpop.f32.mrb[0].mxu0
    %3252 = vdwg.mxu0
    %v3253 = vrot.slane %v3248, 4
    %v3254 = vadd.f32 %v3248, %v3253
    %v3255 = vrot.slane %v3254, 2
    %v3256 = vadd.f32 %v3254, %v3255
    %v3257 = vrot.slane %v3256, 1
    %v3258 = vadd.f32 %v3256, %v3257
    %v3259 = vmul.f32 %v3258, %v656
    %v3260 = vsub.f32 %v3248, %v3259
    %v3261 = vmul.f32 %v3260, %v3260
    %v3262 = vrot.slane %v3261, 4
    %v3263 = vadd.f32 %v3261, %v3262
    %v3264 = vrot.slane %v3263, 2
    %v3265 = vadd.f32 %v3263, %v3264
    %v3266 = vrot.slane %v3265, 1
    %v3267 = vadd.f32 %v3265, %v3266
    %v3268 = vmul.f32 %v3267, %v656
    %v3269 = vadd.f32 %v3268, 1e-05
    %v3270 = vrsqrt.pop %v3269
    %v3271 = vmul.f32 %v3260, %v3270
    %v3272 = vld [vmem:[#allocation35] sm:$0x1]
    %v3274 = vlaneseq
    %v3275 = vshrl.u32 %v3274, 7
    %v3276 = vsub.s32 0, %v3275
    %v3277 = vrot.slane %v3272, %v3276
    %v3279 = vmul.f32 %v3271, %v3277
    %v3280 = vld [vmem:[#allocation36] sm:$0x1]
    %v3282 = vlaneseq
    %v3283 = vshrl.u32 %v3282, 7
    %v3284 = vsub.s32 0, %v3283
    %v3285 = vrot.slane %v3280, %v3284
    %v3287 = vadd.f32 %v3279, %v3285
    %vm3288 = vcmp.gt.f32.partialorder %v3287, 0.0
    %v3289 = vmul.f32 %v3287, 0.01
    %v3290 = vsel %vm3288, %v3287, %v3289
    %s3291 = sadd.s32 %s473, 387276957
    %v3292 = vstv %s3291
    %v3293 = vxor.u32 %v3126, %v3292
    %v3294 = vshrl.u32 %v3293, 16
    %v3295 = vxor.u32 %v3293, %v3294
    %v3296 = vmul.u32 %v3295, 2146121005
    %v3297 = vshrl.u32 %v3296, 15
    %v3298 = vxor.u32 %v3296, %v3297
    %v3299 = vmul.u32 %v3298, 2221713035
    %v3300 = vshrl.u32 %v3299, 16
    %v3301 = vxor.u32 %v3299, %v3300
    %vm3302 = vcmp.ge.u32.totalorder %v3301, 1073741824
    %v3303 = vmul.f32 %v3290, 1.3333334
    %v3304 = vsel %vm3302, %v3303, 0.0
    %v3305 = vpack.c.bf16 %v3304, %v3304
    %v3306 = vld [vmem:[%s53] sm:$0xf]
    %v3307 = vld [vmem:[%s53 + $0x4] sm:$0xf]
    %v3308 = vld [vmem:[%s53 + $0x8] sm:$0xf]
    %v3309 = vld [vmem:[%s53 + $0xc] sm:$0xf]
    %v3310 = vld [vmem:[%s53 + $0x10] sm:$0xf]
    %v3311 = vld [vmem:[%s53 + $0x14] sm:$0xf]
    %v3312 = vld [vmem:[%s53 + $0x18] sm:$0xf]
    %v3313 = vld [vmem:[%s53 + $0x1c] sm:$0xf]
    %v3314 = vld [vmem:[%s53 + $0x20] sm:$0xf]
    %v3315 = vld [vmem:[%s53 + $0x24] sm:$0xf]
    %v3316 = vld [vmem:[%s53 + $0x28] sm:$0xf]
    %v3317 = vld [vmem:[%s53 + $0x2c] sm:$0xf]
    %v3318 = vld [vmem:[%s53 + $0x30] sm:$0xf]
    %v3319 = vld [vmem:[%s53 + $0x34] sm:$0xf]
    %v3320 = vld [vmem:[%s53 + $0x38] sm:$0xf]
    %v3321 = vld [vmem:[%s53 + $0x3c] sm:$0xf]
    %v3322 = vld [vmem:[#allocation38] sm:$0x1]
    %v3324 = vlaneseq
    %v3325 = vshrl.u32 %v3324, 7
    %v3326 = vsub.s32 0, %v3325
    %v3327 = vrot.slane %v3322, %v3326
    %v3345 = vunpack.c.l.b16 %v3306
    %v3346 = vunpack.c.l.b16 %v3307
    %v3347 = vunpack.c.l.b16 %v3308
    %v3348 = vunpack.c.l.b16 %v3309
    %v3349 = vunpack.c.l.b16 %v3310
    %v3350 = vunpack.c.l.b16 %v3311
    %v3351 = vunpack.c.l.b16 %v3312
    %v3352 = vunpack.c.l.b16 %v3313
    %v3353 = vunpack.c.l.b16 %v3314
    %v3354 = vunpack.c.l.b16 %v3315
    %v3355 = vunpack.c.l.b16 %v3316
    %v3356 = vunpack.c.l.b16 %v3317
    %v3357 = vunpack.c.l.b16 %v3318
    %v3358 = vunpack.c.l.b16 %v3319
    %v3359 = vunpack.c.l.b16 %v3320
    %v3360 = vunpack.c.l.b16 %v3321
    %v3361 = vpack.c.b16 %v3346, %v3345
    %v3362 = vpack.c.b16 %v3348, %v3347
    %v3363 = vpack.c.b16 %v3350, %v3349
    %v3364 = vpack.c.b16 %v3352, %v3351
    %v3365 = vpack.c.b16 %v3354, %v3353
    %v3366 = vpack.c.b16 %v3356, %v3355
    %v3367 = vpack.c.b16 %v3358, %v3357
    %v3368 = vpack.c.b16 %v3360, %v3359
    %3377 = vmatprep.subr.bf16.mxu0 0
    %3378 = vmatpush1.bf16.msra.mxu0 %v3361
    %3379 = vmatprep.subr.bf16.mxu0 0
    %3380 = vmatpush1.bf16.msra.mxu0 %v3362
    %3381 = vmatprep.subr.bf16.mxu0 0
    %3382 = vmatpush1.bf16.msra.mxu0 %v3363
    %3383 = vmatprep.subr.bf16.mxu0 0
    %3384 = vmatpush1.bf16.msra.mxu0 %v3364
    %3385 = vmatprep.subr.bf16.mxu0 0
    %3386 = vmatpush1.bf16.msra.mxu0 %v3365
    %3387 = vmatprep.subr.bf16.mxu0 0
    %3388 = vmatpush1.bf16.msra.mxu0 %v3366
    %3389 = vmatprep.subr.bf16.mxu0 0
    %3390 = vmatpush1.bf16.msra.mxu0 %v3367
    %3391 = vmatprep.subr.bf16.mxu0 0
    %3392 = vmatpush1.bf16.msra.mxu0 %v3368
    %3393 = vmatprep.subr.bf16.mxu0 0
    %3394 = vmatpush1.bf16.msra.mxu0 0
    %3395 = vmatprep.subr.bf16.mxu0 0
    %3396 = vmatpush1.bf16.msra.mxu0 0
    %3397 = vmatprep.subr.bf16.mxu0 0
    %3398 = vmatpush1.bf16.msra.mxu0 0
    %3399 = vmatprep.subr.bf16.mxu0 0
    %3400 = vmatpush1.bf16.msra.mxu0 0
    %3401 = vmatprep.subr.bf16.mxu0 0
    %3402 = vmatpush1.bf16.msra.mxu0 0
    %3403 = vmatprep.subr.bf16.mxu0 0
    %3404 = vmatpush1.bf16.msra.mxu0 0
    %3405 = vmatprep.subr.bf16.mxu0 0
    %3406 = vmatpush1.bf16.msra.mxu0 0
    %3407 = vmatprep.subr.bf16.mxu0 0
    %3408 = vmatpush1.bf16.msra.mxu0 0
    %3409 = vmatprep.mubr.bf16.mxu0 0
    %3410 = vmatmul.mubr.bf16.gmra.mrb[0].mxu0 %v3305
    %v3411 = vpop.f32.mrb[0].mxu0
    %v3412 = vadd.f32 %v3327, %v3411
    %v3413 = vpop.f32.mrb[0].mxu0
    %v3414 = vpop.f32.mrb[0].mxu0
    %v3415 = vpop.f32.mrb[0].mxu0
    %3416 = vdwg.mxu0
    %vm3417 = vcmask 523264
    %v3418 = vsel %vm3417, %v3412, 0.0
    %v3419 = vrot.slane %v3418, 4
    %v3420 = vadd.f32 %v3418, %v3419
    %v3421 = vrot.slane %v3420, 2
    %v3422 = vadd.f32 %v3420, %v3421
    %v3423 = vrot.slane %v3422, 1
    %v3424 = vadd.f32 %v3422, %v3423
    %v3425 = vmul.f32 %v3424, %v656
    %v3426 = vsub.f32 %v3412, %v3425
    %v3427 = vmul.f32 %v3426, %v3426
    %v3428 = vsel %vm3417, %v3427, 0.0
    %v3429 = vrot.slane %v3428, 4
    %v3430 = vadd.f32 %v3428, %v3429
    %v3431 = vrot.slane %v3430, 2
    %v3432 = vadd.f32 %v3430, %v3431
    %v3433 = vrot.slane %v3432, 1
    %v3434 = vadd.f32 %v3432, %v3433
    %v3435 = vmul.f32 %v3434, %v656
    %v3436 = vadd.f32 %v3435, 1e-05
    %v3437 = vrsqrt.pop %v3436
    %v3438 = vmul.f32 %v3426, %v3437
    %v3439 = vld [vmem:[#allocation39] sm:$0x1]
    %v3441 = vlaneseq
    %v3442 = vshrl.u32 %v3441, 7
    %v3443 = vsub.s32 0, %v3442
    %v3444 = vrot.slane %v3439, %v3443
    %v3446 = vmul.f32 %v3438, %v3444
    %v3447 = vld [vmem:[#allocation41] sm:$0x1]
    %v3449 = vlaneseq
    %v3450 = vshrl.u32 %v3449, 7
    %v3451 = vsub.s32 0, %v3450
    %v3452 = vrot.slane %v3447, %v3451
    %v3454 = vadd.f32 %v3446, %v3452
    %vm3455 = vcmp.gt.f32.partialorder %v3454, 0.0
    %v3456 = vmul.f32 %v3454, 0.01
    %v3457 = vsel %vm3455, %v3454, %v3456
    %v3458 = vmul.u32 %v774, 64
    %v3459 = vadd.s32 %v3458, %v776
    %s3460 = sadd.s32 %s473, 3041712726
    %v3461 = vstv %s3460
    %v3462 = vxor.u32 %v3459, %v3461
    %v3463 = vshrl.u32 %v3462, 16
    %v3464 = vxor.u32 %v3462, %v3463
    %v3465 = vmul.u32 %v3464, 2146121005
    %v3466 = vshrl.u32 %v3465, 15
    %v3467 = vxor.u32 %v3465, %v3466
    %v3468 = vmul.u32 %v3467, 2221713035
    %v3469 = vshrl.u32 %v3468, 16
    %v3470 = vxor.u32 %v3468, %v3469
    %vm3471 = vcmp.ge.u32.totalorder %v3470, 1073741824
    %v3472 = vmul.f32 %v3457, 1.3333334
    %v3473 = vsel %vm3471, %v3472, 0.0
    %v3474 = vpack.c.bf16 %v3473, %v3473
    %v3475 = vld [vmem:[%s61] sm:$0xf]
    %v3476 = vld [vmem:[%s61 + $0x4] sm:$0xf]
    %v3477 = vld [vmem:[%s61 + $0x8] sm:$0xf]
    %v3478 = vld [vmem:[%s61 + $0xc] sm:$0xf]
    %v3479 = vld [vmem:[%s61 + $0x10] sm:$0xf]
    %v3480 = vld [vmem:[%s61 + $0x14] sm:$0xf]
    %v3481 = vld [vmem:[%s61 + $0x18] sm:$0xf]
    %v3482 = vld [vmem:[%s61 + $0x1c] sm:$0xf]
    %v3483 = vld [vmem:[%s63] sm:$0x1]
    %v3485 = vlaneseq
    %v3486 = vshrl.u32 %v3485, 7
    %v3487 = vsub.s32 0, %v3486
    %v3488 = vrot.slane %v3483, %v3487
    %v3498 = vunpack.c.l.b16 %v3475
    %v3499 = vunpack.c.l.b16 %v3476
    %v3500 = vunpack.c.l.b16 %v3477
    %v3501 = vunpack.c.l.b16 %v3478
    %v3502 = vunpack.c.l.b16 %v3479
    %v3503 = vunpack.c.l.b16 %v3480
    %v3504 = vunpack.c.l.b16 %v3481
    %v3505 = vunpack.c.l.b16 %v3482
    %v3506 = vpack.c.b16 %v3499, %v3498
    %v3507 = vpack.c.b16 %v3501, %v3500
    %v3508 = vpack.c.b16 %v3503, %v3502
    %v3509 = vpack.c.b16 %v3505, %v3504
    %v3515 = vsel %vm3417, %v3474, 0
    %3517 = vmatprep.subr.bf16.mxu0 0
    %3518 = vmatpush1.bf16.msra.mxu0 %v3506
    %3519 = vmatprep.subr.bf16.mxu0 0
    %3520 = vmatpush1.bf16.msra.mxu0 %v3507
    %3521 = vmatprep.subr.bf16.mxu0 0
    %3522 = vmatpush1.bf16.msra.mxu0 %v3508
    %3523 = vmatprep.subr.bf16.mxu0 0
    %3524 = vmatpush1.bf16.msra.mxu0 %v3509
    %3525 = vmatprep.subr.bf16.mxu0 0
    %3526 = vmatpush1.bf16.msra.mxu0 0
    %3527 = vmatprep.subr.bf16.mxu0 0
    %3528 = vmatpush1.bf16.msra.mxu0 0
    %3529 = vmatprep.subr.bf16.mxu0 0
    %3530 = vmatpush1.bf16.msra.mxu0 0
    %3531 = vmatprep.subr.bf16.mxu0 0
    %3532 = vmatpush1.bf16.msra.mxu0 0
    %3533 = vmatprep.subr.bf16.mxu0 0
    %3534 = vmatpush1.bf16.msra.mxu0 0
    %3535 = vmatprep.subr.bf16.mxu0 0
    %3536 = vmatpush1.bf16.msra.mxu0 0
    %3537 = vmatprep.subr.bf16.mxu0 0
    %3538 = vmatpush1.bf16.msra.mxu0 0
    %3539 = vmatprep.subr.bf16.mxu0 0
    %3540 = vmatpush1.bf16.msra.mxu0 0
    %3541 = vmatprep.subr.bf16.mxu0 0
    %3542 = vmatpush1.bf16.msra.mxu0 0
    %3543 = vmatprep.subr.bf16.mxu0 0
    %3544 = vmatpush1.bf16.msra.mxu0 0
    %3545 = vmatprep.subr.bf16.mxu0 0
    %3546 = vmatpush1.bf16.msra.mxu0 0
    %3547 = vmatprep.subr.bf16.mxu0 0
    %3548 = vmatpush1.bf16.msra.mxu0 0
    %3549 = vmatprep.mubr.bf16.mxu0 0
    %3550 = vmatmul.mubr.bf16.gmra.mrb[0].mxu0 %v3515
    %v3551 = vpop.f32.mrb[0].mxu0
    %v3552 = vadd.f32 %v3488, %v3551
    %v3553 = vpop.f32.mrb[0].mxu0
    %v3554 = vpop.f32.mrb[0].mxu0
    %v3555 = vpop.f32.mrb[0].mxu0
    %3556 = vdwg.mxu0
    %v3557 = vsel %vm3417, %v3552, 0.0
    %v3558 = vrot.slane %v3557, 4
    %v3559 = vadd.f32 %v3557, %v3558
    %v3560 = vrot.slane %v3559, 2
    %v3561 = vadd.f32 %v3559, %v3560
    %v3562 = vrot.slane %v3561, 1
    %v3563 = vadd.f32 %v3561, %v3562
    %v3564 = vmul.f32 %v3563, %v656
    %v3565 = vsub.f32 %v3552, %v3564
    %v3566 = vmul.f32 %v3565, %v3565
    %v3567 = vsel %vm3417, %v3566, 0.0
    %v3568 = vrot.slane %v3567, 4
    %v3569 = vadd.f32 %v3567, %v3568
    %v3570 = vrot.slane %v3569, 2
    %v3571 = vadd.f32 %v3569, %v3570
    %v3572 = vrot.slane %v3571, 1
    %v3573 = vadd.f32 %v3571, %v3572
    %v3574 = vmul.f32 %v3573, %v656
    %v3575 = vadd.f32 %v3574, 1e-05
    %v3576 = vrsqrt.pop %v3575
    %v3577 = vmul.f32 %v3565, %v3576
    %v3578 = vld [vmem:[%s65] sm:$0x1]
    %v3580 = vlaneseq
    %v3581 = vshrl.u32 %v3580, 7
    %v3582 = vsub.s32 0, %v3581
    %v3583 = vrot.slane %v3578, %v3582
    %v3585 = vmul.f32 %v3577, %v3583
    %v3586 = vld [vmem:[%s67] sm:$0x1]
    %v3588 = vlaneseq
    %v3589 = vshrl.u32 %v3588, 7
    %v3590 = vsub.s32 0, %v3589
    %v3591 = vrot.slane %v3586, %v3590
    %v3593 = vadd.f32 %v3585, %v3591
    %vm3594 = vcmp.gt.f32.partialorder %v3593, 0.0
    %v3595 = vmul.f32 %v3593, 0.01
    %v3596 = vsel %vm3594, %v3593, %v3595
    %s3597 = sadd.s32 %s473, 1401181199
    %v3598 = vstv %s3597
    %v3599 = vxor.u32 %v3459, %v3598
    %v3600 = vshrl.u32 %v3599, 16
    %v3601 = vxor.u32 %v3599, %v3600
    %v3602 = vmul.u32 %v3601, 2146121005
    %v3603 = vshrl.u32 %v3602, 15
    %v3604 = vxor.u32 %v3602, %v3603
    %v3605 = vmul.u32 %v3604, 2221713035
    %v3606 = vshrl.u32 %v3605, 16
    %v3607 = vxor.u32 %v3605, %v3606
    %vm3608 = vcmp.ge.u32.totalorder %v3607, 1073741824
    %v3609 = vmul.f32 %v3596, 1.3333334
    %v3610 = vsel %vm3608, %v3609, 0.0
    %v3611 = vpack.c.bf16 %v3610, %v3610
    %v3612 = vld [vmem:[%s69] sm:$0xf]
    %v3613 = vld [vmem:[%s69 + $0x4] sm:$0xf]
    %v3614 = vld [vmem:[%s69 + $0x8] sm:$0xf]
    %v3615 = vld [vmem:[%s69 + $0xc] sm:$0xf]
    %v3616 = vld [vmem:[%s69 + $0x10] sm:$0xf]
    %v3617 = vld [vmem:[%s69 + $0x14] sm:$0xf]
    %v3618 = vld [vmem:[%s69 + $0x18] sm:$0xf]
    %v3619 = vld [vmem:[%s69 + $0x1c] sm:$0xf]
    %v3620 = vld [vmem:[%s71] sm:$0x1]
    %v3622 = vlaneseq
    %v3623 = vshrl.u32 %v3622, 7
    %v3624 = vsub.s32 0, %v3623
    %v3625 = vrot.slane %v3620, %v3624
    %v3635 = vunpack.c.l.b16 %v3612
    %v3636 = vunpack.c.l.b16 %v3613
    %v3637 = vunpack.c.l.b16 %v3614
    %v3638 = vunpack.c.l.b16 %v3615
    %v3639 = vunpack.c.l.b16 %v3616
    %v3640 = vunpack.c.l.b16 %v3617
    %v3641 = vunpack.c.l.b16 %v3618
    %v3642 = vunpack.c.l.b16 %v3619
    %v3643 = vpack.c.b16 %v3636, %v3635
    %v3644 = vpack.c.b16 %v3638, %v3637
    %v3645 = vpack.c.b16 %v3640, %v3639
    %v3646 = vpack.c.b16 %v3642, %v3641
    %v3652 = vsel %vm3417, %v3611, 0
    %3654 = vmatprep.subr.bf16.mxu0 0
    %3655 = vmatpush1.bf16.msra.mxu0 %v3643
    %3656 = vmatprep.subr.bf16.mxu0 0
    %3657 = vmatpush1.bf16.msra.mxu0 %v3644
    %3658 = vmatprep.subr.bf16.mxu0 0
    %3659 = vmatpush1.bf16.msra.mxu0 %v3645
    %3660 = vmatprep.subr.bf16.mxu0 0
    %3661 = vmatpush1.bf16.msra.mxu0 %v3646
    %3662 = vmatprep.subr.bf16.mxu0 0
    %3663 = vmatpush1.bf16.msra.mxu0 0
    %3664 = vmatprep.subr.bf16.mxu0 0
    %3665 = vmatpush1.bf16.msra.mxu0 0
    %3666 = vmatprep.subr.bf16.mxu0 0
    %3667 = vmatpush1.bf16.msra.mxu0 0
    %3668 = vmatprep.subr.bf16.mxu0 0
    %3669 = vmatpush1.bf16.msra.mxu0 0
    %3670 = vmatprep.subr.bf16.mxu0 0
    %3671 = vmatpush1.bf16.msra.mxu0 0
    %3672 = vmatprep.subr.bf16.mxu0 0
    %3673 = vmatpush1.bf16.msra.mxu0 0
    %3674 = vmatprep.subr.bf16.mxu0 0
    %3675 = vmatpush1.bf16.msra.mxu0 0
    %3676 = vmatprep.subr.bf16.mxu0 0
    %3677 = vmatpush1.bf16.msra.mxu0 0
    %3678 = vmatprep.subr.bf16.mxu0 0
    %3679 = vmatpush1.bf16.msra.mxu0 0
    %3680 = vmatprep.subr.bf16.mxu0 0
    %3681 = vmatpush1.bf16.msra.mxu0 0
    %3682 = vmatprep.subr.bf16.mxu0 0
    %3683 = vmatpush1.bf16.msra.mxu0 0
    %3684 = vmatprep.subr.bf16.mxu0 0
    %3685 = vmatpush1.bf16.msra.mxu0 0
    %3686 = vmatprep.mubr.bf16.mxu0 0
    %3687 = vmatmul.mubr.bf16.gmra.mrb[0].mxu0 %v3652
    %v3688 = vpop.f32.mrb[0].mxu0
    %v3689 = vadd.f32 %v3625, %v3688
    %v3690 = vpop.f32.mrb[0].mxu0
    %v3691 = vpop.f32.mrb[0].mxu0
    %v3692 = vpop.f32.mrb[0].mxu0
    %3693 = vdwg.mxu0
    %v3694 = vsel %vm546, %v3689, 0.0
    %v3695 = vrot.slane %v3694, 4
    %v3696 = vadd.f32 %v3694, %v3695
    %v3697 = vrot.slane %v3696, 2
    %v3698 = vadd.f32 %v3696, %v3697
    %v3699 = vrot.slane %v3698, 1
    %v3700 = vadd.f32 %v3698, %v3699
    %v3701 = vmul.f32 %v3700, %v656
    %v3702 = vsub.f32 %v3689, %v3701
    %v3703 = vmul.f32 %v3702, %v3702
    %v3704 = vsel %vm546, %v3703, 0.0
    %v3705 = vrot.slane %v3704, 4
    %v3706 = vadd.f32 %v3704, %v3705
    %v3707 = vrot.slane %v3706, 2
    %v3708 = vadd.f32 %v3706, %v3707
    %v3709 = vrot.slane %v3708, 1
    %v3710 = vadd.f32 %v3708, %v3709
    %v3711 = vmul.f32 %v3710, %v656
    %v3712 = vadd.f32 %v3711, 1e-05
    %v3713 = vrsqrt.pop %v3712
    %v3714 = vmul.f32 %v3702, %v3713
    %v3715 = vld [vmem:[%s73] sm:$0x1]
    %v3717 = vlaneseq
    %v3718 = vshrl.u32 %v3717, 7
    %v3719 = vsub.s32 0, %v3718
    %v3720 = vrot.slane %v3715, %v3719
    %v3722 = vmul.f32 %v3714, %v3720
    %v3723 = vld [vmem:[%s75] sm:$0x1]
    %v3725 = vlaneseq
    %v3726 = vshrl.u32 %v3725, 7
    %v3727 = vsub.s32 0, %v3726
    %v3728 = vrot.slane %v3723, %v3727
    %v3730 = vadd.f32 %v3722, %v3728
    %vm3731 = vcmp.gt.f32.partialorder %v3730, 0.0
    %v3732 = vmul.f32 %v3730, 0.01
    %v3733 = vsel %vm3731, %v3730, %v3732
    %v3734 = vmul.u32 %v774, 32
    %v3735 = vadd.s32 %v3734, %v776
    %s3736 = sadd.s32 %s473, 4055616968
    %v3737 = vstv %s3736
    %v3738 = vxor.u32 %v3735, %v3737
    %v3739 = vshrl.u32 %v3738, 16
    %v3740 = vxor.u32 %v3738, %v3739
    %v3741 = vmul.u32 %v3740, 2146121005
    %v3742 = vshrl.u32 %v3741, 15
    %v3743 = vxor.u32 %v3741, %v3742
    %v3744 = vmul.u32 %v3743, 2221713035
    %v3745 = vshrl.u32 %v3744, 16
    %v3746 = vxor.u32 %v3744, %v3745
    %vm3747 = vcmp.ge.u32.totalorder %v3746, 1073741824
    %v3748 = vmul.f32 %v3733, 1.3333334
    %v3749 = vsel %vm3747, %v3748, 0.0
    %v3750 = vpack.c.bf16 %v3749, %v3749
    %v3751 = vld [vmem:[%s77] sm:$0xf]
    %v3752 = vld [vmem:[%s77 + $0x4] sm:$0xf]
    %v3753 = vld [vmem:[%s77 + $0x8] sm:$0xf]
    %v3754 = vld [vmem:[%s77 + $0xc] sm:$0xf]
    %v3755 = vld [vmem:[%s79] sm:$0x1]
    %v3757 = vlaneseq
    %v3758 = vshrl.u32 %v3757, 7
    %v3759 = vsub.s32 0, %v3758
    %v3760 = vrot.slane %v3755, %v3759
    %v3766 = vunpack.c.l.b16 %v3751
    %v3767 = vunpack.c.l.b16 %v3752
    %v3768 = vunpack.c.l.b16 %v3753
    %v3769 = vunpack.c.l.b16 %v3754
    %v3770 = vpack.c.b16 %v3767, %v3766
    %v3771 = vpack.c.b16 %v3769, %v3768
    %v3775 = vsel %vm546, %v3750, 0
    %3777 = vmatprep.subr.bf16.mxu0 0
    %3778 = vmatpush1.bf16.msra.mxu0 %v3770
    %3779 = vmatprep.subr.bf16.mxu0 0
    %3780 = vmatpush1.bf16.msra.mxu0 %v3771
    %3781 = vmatprep.subr.bf16.mxu0 0
    %3782 = vmatpush1.bf16.msra.mxu0 0
    %3783 = vmatprep.subr.bf16.mxu0 0
    %3784 = vmatpush1.bf16.msra.mxu0 0
    %3785 = vmatprep.subr.bf16.mxu0 0
    %3786 = vmatpush1.bf16.msra.mxu0 0
    %3787 = vmatprep.subr.bf16.mxu0 0
    %3788 = vmatpush1.bf16.msra.mxu0 0
    %3789 = vmatprep.subr.bf16.mxu0 0
    %3790 = vmatpush1.bf16.msra.mxu0 0
    %3791 = vmatprep.subr.bf16.mxu0 0
    %3792 = vmatpush1.bf16.msra.mxu0 0
    %3793 = vmatprep.subr.bf16.mxu0 0
    %3794 = vmatpush1.bf16.msra.mxu0 0
    %3795 = vmatprep.subr.bf16.mxu0 0
    %3796 = vmatpush1.bf16.msra.mxu0 0
    %3797 = vmatprep.subr.bf16.mxu0 0
    %3798 = vmatpush1.bf16.msra.mxu0 0
    %3799 = vmatprep.subr.bf16.mxu0 0
    %3800 = vmatpush1.bf16.msra.mxu0 0
    %3801 = vmatprep.subr.bf16.mxu0 0
    %3802 = vmatpush1.bf16.msra.mxu0 0
    %3803 = vmatprep.subr.bf16.mxu0 0
    %3804 = vmatpush1.bf16.msra.mxu0 0
    %3805 = vmatprep.subr.bf16.mxu0 0
    %3806 = vmatpush1.bf16.msra.mxu0 0
    %3807 = vmatprep.subr.bf16.mxu0 0
    %3808 = vmatpush1.bf16.msra.mxu0 0
    %3809 = vmatprep.mubr.bf16.mxu0 0
    %3810 = vmatmul.mubr.bf16.gmra.mrb[0].mxu0 %v3775
    %v3811 = vpop.f32.mrb[0].mxu0
    %v3812 = vadd.f32 %v3760, %v3811
    %v3813 = vpop.f32.mrb[0].mxu0
    %v3814 = vpop.f32.mrb[0].mxu0
    %v3815 = vpop.f32.mrb[0].mxu0
    %3816 = vdwg.mxu0
    %vm3817 = vcmask 80896
    %3818 = vst.msk [vmem:[#allocation42] sm:$0xff] %vm3817, %v3812
    // Predicated region
    $region270: #{tpu_custom_call.1} parent=1 // pred_check
      _
    $region271: #{tpu_custom_call.1} parent=1 // pred_check_branch
      %3820 = sbr.rel (0) target = $region273
    $region272: #{tpu_custom_call.1} parent=1 // pred_region
      %s3822 = ssub.s32 128, 128
      %3823 = vsyncadd [#allocation5], %s3822
      %s3825 = sshll.u32 [#allocation42], 4
      %s3826 = int_to_ptr.vmem [resolvable:$true] %s3825
      %3828 = dma.vmem_to_hbm [thread:$0]  %s3826, 128, %s85, [#allocation5]
    $region273: #{tpu_custom_call.1} parent=1 // pred_fallthru
      _
    // Predicated region
    $region274: #{tpu_custom_call.1} parent=1 // pred_check
      _
    $region275: #{tpu_custom_call.1} parent=1 // pred_check_branch
      %3830 = sbr.rel (0) target = $region277
    $region276: #{tpu_custom_call.1} parent=1 // pred_region
      %3831 = dma.done [#allocation5], 128
    $region277: #{tpu_custom_call.1} parent=1 // pred_fallthru
      _
    %3832 = vsyncpa [#allocation4], 1
    %3833 = vsyncpa [#allocation7], 1
    %3834 = vsyncpa [#allocation10], 1
    %3835 = vsyncpa [#allocation13], 1
    %3836 = vsyncpa [#allocation16], 1
    %3837 = vsyncpa [#allocation19], 1
    %3838 = vsyncpa [#allocation22], 1
    %3839 = vsyncpa [#allocation25], 1
    %3840 = vsyncpa [#allocation28], 1
    %3841 = vsyncpa [#allocation31], 1
    %3842 = vsyncpa [#allocation34], 1
    %3843 = vsyncpa [#allocation37], 1
    %3844 = vsyncpa [#allocation40], 1
    %3845 = vsyncpa [#allocation5], 1

</llo_original>
